<compile_context>
chip_gen: v7x
topology: tpu7x:2x2x1
jax: 0.10.0
libtpu: 0.0.40
codegen_flags: <defaults>
</compile_context>

<pallas_src>
import jax
import jax.numpy as jnp
from jax import lax
from jax.experimental import pallas as pl
from jax.experimental.pallas import tpu as pltpu


# ---------------------------------------------------------------------------
# Fused kernel: conv -> pool -> relu -> fc1 -> fc2 for one batch tile.
# ---------------------------------------------------------------------------
def _fused_cnn_kernel(xe_ref, xo_ref, wband_ref, bc_ref, w1p_ref, b1_ref,
                      w2p_ref, b2p_ref, o_ref):
    TB = xe_ref.shape[1]          # batch tile size (static)
    M = 12 * TB                   # rows = ph*TB + b (ph = pooled row index)

    ue = xe_ref[...]              # (14, TB, 28)  x[b, 2p, :]
    uo = xo_ref[...]              # (14, TB, 28)  x[b, 2p+1, :]

    def band_dot(src, m, widx):
        # contiguous leading-dim slice + free reshape -> (12*TB, 28) matmul
        lhs = src[m:m + 12].reshape(M, 28)
        return jnp.dot(lhs, wband_ref[widx], preferred_element_type=jnp.float32)

    # conv output rows at even oh (= 2*ph)
    y_e = (band_dot(ue, 0, 0) + band_dot(uo, 0, 1) + band_dot(ue, 1, 2)
           + band_dot(uo, 1, 3) + band_dot(ue, 2, 4))
    # conv output rows at odd oh (= 2*ph + 1)
    y_o = (band_dot(uo, 0, 0) + band_dot(ue, 1, 1) + band_dot(uo, 1, 2)
           + band_dot(ue, 2, 3) + band_dot(uo, 2, 4))

    # 2x2 max-pool + conv bias + relu, all elementwise on lane-dense slabs.
    m1 = jnp.maximum(y_e, y_o) + bc_ref[...]          # (12*TB, 384) pool over rows
    m2 = jnp.maximum(m1[:, 0:368], m1[:, 16:384])     # (12*TB, 368) pool over cols
    h = jnp.maximum(m2, 0.0)                          # relu (valid at even ow lanes)

    # fc1: one matmul per pooled row ph; W1p is zero at odd-ow lanes, so the
    # unused pool positions contribute nothing.
    acc = jnp.dot(h[0:TB, :], w1p_ref[0], preferred_element_type=jnp.float32)
    for ph in range(1, 12):
        acc = acc + jnp.dot(h[ph * TB:(ph + 1) * TB, :], w1p_ref[ph],
                            preferred_element_type=jnp.float32)
    h1 = acc + b1_ref[...]                            # (TB, 128)

    # fc2 (no activation between fc1 and fc2, matching the PyTorch module).
    # w2p / b2p are zero-padded to 128 output lanes -> lane-dense output store.
    o_ref[...] = jnp.dot(h1, w2p_ref[...],
                         preferred_element_type=jnp.float32) + b2p_ref[...]


# ---------------------------------------------------------------------------
# One-time weight preparation (PyTorch layout -> kernel layout).  Call once.
# ---------------------------------------------------------------------------
def prepare_params(params):
    w_conv, b_conv, w1, b1, w2, b2 = params

    # Banded conv matrices: wband[kh, iw, ow*16 + c] = w_conv[c,0,kh,iw-ow]
    wc = w_conv[:, 0, :, :]                             # (16, 5, 5)
    ow = jnp.arange(24)
    iw = jnp.arange(28)
    diff = iw[:, None] - ow[None, :]                    # (28, 24)
    valid = (diff >= 0) & (diff <= 4)
    kwi = jnp.clip(diff, 0, 4)
    vals = wc[:, :, kwi]                                # (16, 5, 28, 24)
    vals = jnp.where(valid[None, None, :, :], vals, 0.0)
    wband = jnp.transpose(vals, (1, 2, 3, 0)).reshape(5, 28, 384)

    # Conv bias broadcast over output columns: bc[0, ow*16 + c] = b_conv[c]
    bc_row = jnp.tile(b_conv, 24).reshape(1, 384)

    # fc1 weight with flatten permutation + even-column selection folded in:
    # w1p[ph, ow*16 + c, j] = w1[j, c*144 + ph*12 + ow//2] if ow even else 0
    w1r = w1.reshape(128, 16, 12, 12)                   # [j, c, ph, pw]
    t = jnp.transpose(w1r, (2, 3, 1, 0))                # [ph, pw, c, j]
    w1p = jnp.zeros((12, 23, 16, 128), jnp.float32).at[:, 0::2, :, :].set(t)
    w1p = w1p.reshape(12, 368, 128)

    b1_row = b1.reshape(1, 128)

    # fc2 zero-padded to 128 output lanes (10 real logits + 118 zeros) so the
    # kernel's output store is a full-width unmasked vst.
    w2p = jnp.zeros((128, 128), jnp.float32).at[:, :10].set(jnp.transpose(w2))
    b2p = jnp.zeros((1, 128), jnp.float32).at[:, :10].set(b2.reshape(1, 10))

    return (wband, bc_row, w1p, b1_row, w2p, b2p)


# ---------------------------------------------------------------------------
# Forward pass: tiny input glue in the wrapper, everything else in the kernel.
# ---------------------------------------------------------------------------
def cnn_small_forward(x, prepared):
    """x: (B, 1, 28, 28) float32 NCHW.  prepared = prepare_params(params)."""
    wband, bc_row, w1p, b1_row, w2p, b2p = prepared
    B = x.shape[0]

    # De-interleave even/odd image rows and put batch in the sublane dim.
    xi = x[:, 0, :, :]                                  # (B, 28, 28)
    xe = jnp.transpose(xi[:, 0::2, :], (1, 0, 2))       # (14, B, 28)
    xo = jnp.transpose(xi[:, 1::2, :], (1, 0, 2))       # (14, B, 28)

    # Batch tiling: single tile for small B, 128-image tiles otherwise.
    TB = B if B <= 128 else 128
    Bp = ((B + TB - 1) // TB) * TB
    if Bp != B:
        pad = Bp - B
        xe = jnp.pad(xe, ((0, 0), (0, pad), (0, 0)))
        xo = jnp.pad(xo, ((0, 0), (0, pad), (0, 0)))

    out = pl.pallas_call(
        _fused_cnn_kernel,
        out_shape=jax.ShapeDtypeStruct((Bp, 128), jnp.float32),
        grid_spec=pltpu.PrefetchScalarGridSpec(
            num_scalar_prefetch=0,
            grid=(Bp // TB,),
            in_specs=[
                pl.BlockSpec((14, TB, 28), lambda i: (0, i, 0)),      # xe
                pl.BlockSpec((14, TB, 28), lambda i: (0, i, 0)),      # xo
                pl.BlockSpec((5, 28, 384), lambda i: (0, 0, 0)),      # wband (resident)
                pl.BlockSpec((1, 384), lambda i: (0, 0)),             # conv bias
                pl.BlockSpec((12, 368, 128), lambda i: (0, 0, 0)),    # fc1 weight (resident)
                pl.BlockSpec((1, 128), lambda i: (0, 0)),             # fc1 bias
                pl.BlockSpec((128, 128), lambda i: (0, 0)),           # fc2 weight (padded)
                pl.BlockSpec((1, 128), lambda i: (0, 0)),             # fc2 bias (padded)
            ],
            out_specs=pl.BlockSpec((TB, 128), lambda i: (i, 0)),
        ),
        compiler_params=pltpu.CompilerParams(
            dimension_semantics=("parallel",),
            vmem_limit_bytes=32 * 1024 * 1024,
        ),
    )(xe, xo, wband, bc_row, w1p, b1_row, w2p, b2p)

    return out[:B, :10]


# ---------------------------------------------------------------------------
# Deterministic parameter init (PyTorch-style uniform bounds)
# ---------------------------------------------------------------------------
def init_params(key):
    ks = jax.random.split(key, 6)

    def u(k, shape, fan_in):
        bound = 1.0 / jnp.sqrt(fan_in)
        return jax.random.uniform(k, shape, jnp.float32, -bound, bound)

    w_conv = u(ks[0], (16, 1, 5, 5), 25)
    b_conv = u(ks[1], (16,), 25)
    w1 = u(ks[2], (128, 16 * 12 * 12), 16 * 12 * 12)
    b1 = u(ks[3], (128,), 16 * 12 * 12)
    w2 = u(ks[4], (10, 128), 128)
    b2 = u(ks[5], (10,), 128)
    return (w_conv, b_conv, w1, b1, w2, b2)


# ---------------------------------------------------------------------------
# Pure-JAX reference (correctness check)
# ---------------------------------------------------------------------------
def reference_forward(x, params):
    w_conv, b_conv, w1, b1, w2, b2 = params
    y = lax.conv_general_dilated(
        x, w_conv, window_strides=(1, 1), padding="VALID",
        dimension_numbers=("NCHW", "OIHW", "NCHW"),
    ) + b_conv.reshape(1, 16, 1, 1)
    y = lax.reduce_window(
        y, -jnp.inf, lax.max, (1, 1, 2, 2), (1, 1, 2, 2), "VALID"
    )
    y = jnp.maximum(y, 0.0)
    h = y.reshape(y.shape[0], -1)
    h = h @ w1.T + b1
    return h @ w2.T + b2


if __name__ == "__main__":
    key = jax.random.PRNGKey(0)
    k_x, k_p = jax.random.split(key)

    B = 2
    # fc1 expects 16*12*12 features => input spatial must be 28x28 (MNIST-like)
    x = jax.random.normal(k_x, (B, 1, 28, 28), dtype=jnp.float32)
    params = init_params(k_p)

    prepared = prepare_params(params)          # one-time weight preparation
    fwd = jax.jit(cnn_small_forward)

    out = fwd(x, prepared)
    out = jax.block_until_ready(out)

    ref = reference_forward(x, params)
    assert out.shape == (B, 10)
    assert jnp.allclose(out, ref, atol=1e-3, rtol=1e-3), "mismatch vs reference"

    print("KERNEL_OK")
</pallas_src>

<mosaic_0001>
module attributes {stable_mosaic.version = 11 : i64} {
  func.func @_fused_cnn_kernel(%arg0: i32, %arg1: memref<14x2x28xf32, #tpu.memory_space<vmem>>, %arg2: memref<14x2x28xf32, #tpu.memory_space<vmem>>, %arg3: memref<5x28x384xf32, #tpu.memory_space<vmem>>, %arg4: memref<1x384xf32, #tpu.memory_space<vmem>>, %arg5: memref<12x368x128xf32, #tpu.memory_space<vmem>>, %arg6: memref<1x128xf32, #tpu.memory_space<vmem>>, %arg7: memref<128x128xf32, #tpu.memory_space<vmem>>, %arg8: memref<1x128xf32, #tpu.memory_space<vmem>>, %arg9: memref<2x128xf32, #tpu.memory_space<vmem>>) attributes {dimension_semantics = [#tpu.dimension_semantics<parallel>], iteration_bounds = array<i64: 1>, scalar_prefetch = 0 : i64, scratch_operands = 0 : i64, tpu.core_type = #tpu.core_type<tc>, window_params = [{transform_indices = @transform_0, window_bounds = array<i64: 14, 2, 28>}, {transform_indices = @transform_1, window_bounds = array<i64: 14, 2, 28>}, {pipeline_mode = #tpu.pipeline_mode<synchronous>, transform_indices = @transform_2, window_bounds = array<i64: 5, 28, 384>}, {pipeline_mode = #tpu.pipeline_mode<synchronous>, transform_indices = @transform_3, window_bounds = array<i64: 1, 384>}, {pipeline_mode = #tpu.pipeline_mode<synchronous>, transform_indices = @transform_4, window_bounds = array<i64: 12, 368, 128>}, {pipeline_mode = #tpu.pipeline_mode<synchronous>, transform_indices = @transform_5, window_bounds = array<i64: 1, 128>}, {pipeline_mode = #tpu.pipeline_mode<synchronous>, transform_indices = @transform_6, window_bounds = array<i64: 128, 128>}, {pipeline_mode = #tpu.pipeline_mode<synchronous>, transform_indices = @transform_7, window_bounds = array<i64: 1, 128>}, {transform_indices = @transform_8, window_bounds = array<i64: 2, 128>}]} {
    %c0 = arith.constant 0 : index
    %c0_0 = arith.constant 0 : index
    %c0_1 = arith.constant 0 : index
    %0 = vector.load %arg1[%c0, %c0_0, %c0_1] : memref<14x2x28xf32, #tpu.memory_space<vmem>>, vector<14x2x28xf32>
    %c0_2 = arith.constant 0 : index
    %c0_3 = arith.constant 0 : index
    %c0_4 = arith.constant 0 : index
    %1 = vector.load %arg2[%c0_2, %c0_3, %c0_4] : memref<14x2x28xf32, #tpu.memory_space<vmem>>, vector<14x2x28xf32>
    %2 = vector.extract_strided_slice %0 {offsets = [0, 0, 0], sizes = [12, 2, 28], strides = [1, 1, 1]} : vector<14x2x28xf32> to vector<12x2x28xf32>
    %3 = vector.shape_cast %2 : vector<12x2x28xf32> to vector<24x28xf32>
    %c0_5 = arith.constant 0 : index
    %c0_6 = arith.constant 0 : index
    %c0_7 = arith.constant 0 : index
    %4 = vector.load %arg3[%c0_5, %c0_6, %c0_7] : memref<5x28x384xf32, #tpu.memory_space<vmem>>, vector<1x28x384xf32>
    %5 = vector.shape_cast %4 : vector<1x28x384xf32> to vector<28x384xf32>
    %cst = arith.constant dense<0.000000e+00> : vector<24x384xf32>
    %6 = tpu.matmul %3, %5, %cst {dimension_numbers = #tpu.dot_dimension_numbers<[1], [0], [0], [1], [0, 0, 1, 1], [], []>} : vector<24x28xf32>, vector<28x384xf32>, vector<24x384xf32> -> vector<24x384xf32>
    %7 = vector.extract_strided_slice %1 {offsets = [0, 0, 0], sizes = [12, 2, 28], strides = [1, 1, 1]} : vector<14x2x28xf32> to vector<12x2x28xf32>
    %8 = vector.shape_cast %7 : vector<12x2x28xf32> to vector<24x28xf32>
    %c1 = arith.constant 1 : index
    %c0_8 = arith.constant 0 : index
    %c0_9 = arith.constant 0 : index
    %9 = vector.load %arg3[%c1, %c0_8, %c0_9] : memref<5x28x384xf32, #tpu.memory_space<vmem>>, vector<1x28x384xf32>
    %10 = vector.shape_cast %9 : vector<1x28x384xf32> to vector<28x384xf32>
    %cst_10 = arith.constant dense<0.000000e+00> : vector<24x384xf32>
    %11 = tpu.matmul %8, %10, %cst_10 {dimension_numbers = #tpu.dot_dimension_numbers<[1], [0], [0], [1], [0, 0, 1, 1], [], []>} : vector<24x28xf32>, vector<28x384xf32>, vector<24x384xf32> -> vector<24x384xf32>
    %12 = arith.addf %6, %11 : vector<24x384xf32>
    %13 = vector.extract_strided_slice %0 {offsets = [1, 0, 0], sizes = [12, 2, 28], strides = [1, 1, 1]} : vector<14x2x28xf32> to vector<12x2x28xf32>
    %14 = vector.shape_cast %13 : vector<12x2x28xf32> to vector<24x28xf32>
    %c2 = arith.constant 2 : index
    %c0_11 = arith.constant 0 : index
    %c0_12 = arith.constant 0 : index
    %15 = vector.load %arg3[%c2, %c0_11, %c0_12] : memref<5x28x384xf32, #tpu.memory_space<vmem>>, vector<1x28x384xf32>
    %16 = vector.shape_cast %15 : vector<1x28x384xf32> to vector<28x384xf32>
    %cst_13 = arith.constant dense<0.000000e+00> : vector<24x384xf32>
    %17 = tpu.matmul %14, %16, %cst_13 {dimension_numbers = #tpu.dot_dimension_numbers<[1], [0], [0], [1], [0, 0, 1, 1], [], []>} : vector<24x28xf32>, vector<28x384xf32>, vector<24x384xf32> -> vector<24x384xf32>
    %18 = arith.addf %12, %17 : vector<24x384xf32>
    %19 = vector.extract_strided_slice %1 {offsets = [1, 0, 0], sizes = [12, 2, 28], strides = [1, 1, 1]} : vector<14x2x28xf32> to vector<12x2x28xf32>
    %20 = vector.shape_cast %19 : vector<12x2x28xf32> to vector<24x28xf32>
    %c3 = arith.constant 3 : index
    %c0_14 = arith.constant 0 : index
    %c0_15 = arith.constant 0 : index
    %21 = vector.load %arg3[%c3, %c0_14, %c0_15] : memref<5x28x384xf32, #tpu.memory_space<vmem>>, vector<1x28x384xf32>
    %22 = vector.shape_cast %21 : vector<1x28x384xf32> to vector<28x384xf32>
    %cst_16 = arith.constant dense<0.000000e+00> : vector<24x384xf32>
    %23 = tpu.matmul %20, %22, %cst_16 {dimension_numbers = #tpu.dot_dimension_numbers<[1], [0], [0], [1], [0, 0, 1, 1], [], []>} : vector<24x28xf32>, vector<28x384xf32>, vector<24x384xf32> -> vector<24x384xf32>
    %24 = arith.addf %18, %23 : vector<24x384xf32>
    %25 = vector.extract_strided_slice %0 {offsets = [2, 0, 0], sizes = [12, 2, 28], strides = [1, 1, 1]} : vector<14x2x28xf32> to vector<12x2x28xf32>
    %26 = vector.shape_cast %25 : vector<12x2x28xf32> to vector<24x28xf32>
    %c4 = arith.constant 4 : index
    %c0_17 = arith.constant 0 : index
    %c0_18 = arith.constant 0 : index
    %27 = vector.load %arg3[%c4, %c0_17, %c0_18] : memref<5x28x384xf32, #tpu.memory_space<vmem>>, vector<1x28x384xf32>
    %28 = vector.shape_cast %27 : vector<1x28x384xf32> to vector<28x384xf32>
    %cst_19 = arith.constant dense<0.000000e+00> : vector<24x384xf32>
    %29 = tpu.matmul %26, %28, %cst_19 {dimension_numbers = #tpu.dot_dimension_numbers<[1], [0], [0], [1], [0, 0, 1, 1], [], []>} : vector<24x28xf32>, vector<28x384xf32>, vector<24x384xf32> -> vector<24x384xf32>
    %30 = arith.addf %24, %29 : vector<24x384xf32>
    %31 = vector.extract_strided_slice %1 {offsets = [0, 0, 0], sizes = [12, 2, 28], strides = [1, 1, 1]} : vector<14x2x28xf32> to vector<12x2x28xf32>
    %32 = vector.shape_cast %31 : vector<12x2x28xf32> to vector<24x28xf32>
    %c0_20 = arith.constant 0 : index
    %c0_21 = arith.constant 0 : index
    %c0_22 = arith.constant 0 : index
    %33 = vector.load %arg3[%c0_20, %c0_21, %c0_22] : memref<5x28x384xf32, #tpu.memory_space<vmem>>, vector<1x28x384xf32>
    %34 = vector.shape_cast %33 : vector<1x28x384xf32> to vector<28x384xf32>
    %cst_23 = arith.constant dense<0.000000e+00> : vector<24x384xf32>
    %35 = tpu.matmul %32, %34, %cst_23 {dimension_numbers = #tpu.dot_dimension_numbers<[1], [0], [0], [1], [0, 0, 1, 1], [], []>} : vector<24x28xf32>, vector<28x384xf32>, vector<24x384xf32> -> vector<24x384xf32>
    %36 = vector.extract_strided_slice %0 {offsets = [1, 0, 0], sizes = [12, 2, 28], strides = [1, 1, 1]} : vector<14x2x28xf32> to vector<12x2x28xf32>
    %37 = vector.shape_cast %36 : vector<12x2x28xf32> to vector<24x28xf32>
    %c1_24 = arith.constant 1 : index
    %c0_25 = arith.constant 0 : index
    %c0_26 = arith.constant 0 : index
    %38 = vector.load %arg3[%c1_24, %c0_25, %c0_26] : memref<5x28x384xf32, #tpu.memory_space<vmem>>, vector<1x28x384xf32>
    %39 = vector.shape_cast %38 : vector<1x28x384xf32> to vector<28x384xf32>
    %cst_27 = arith.constant dense<0.000000e+00> : vector<24x384xf32>
    %40 = tpu.matmul %37, %39, %cst_27 {dimension_numbers = #tpu.dot_dimension_numbers<[1], [0], [0], [1], [0, 0, 1, 1], [], []>} : vector<24x28xf32>, vector<28x384xf32>, vector<24x384xf32> -> vector<24x384xf32>
    %41 = arith.addf %35, %40 : vector<24x384xf32>
    %42 = vector.extract_strided_slice %1 {offsets = [1, 0, 0], sizes = [12, 2, 28], strides = [1, 1, 1]} : vector<14x2x28xf32> to vector<12x2x28xf32>
    %43 = vector.shape_cast %42 : vector<12x2x28xf32> to vector<24x28xf32>
    %c2_28 = arith.constant 2 : index
    %c0_29 = arith.constant 0 : index
    %c0_30 = arith.constant 0 : index
    %44 = vector.load %arg3[%c2_28, %c0_29, %c0_30] : memref<5x28x384xf32, #tpu.memory_space<vmem>>, vector<1x28x384xf32>
    %45 = vector.shape_cast %44 : vector<1x28x384xf32> to vector<28x384xf32>
    %cst_31 = arith.constant dense<0.000000e+00> : vector<24x384xf32>
    %46 = tpu.matmul %43, %45, %cst_31 {dimension_numbers = #tpu.dot_dimension_numbers<[1], [0], [0], [1], [0, 0, 1, 1], [], []>} : vector<24x28xf32>, vector<28x384xf32>, vector<24x384xf32> -> vector<24x384xf32>
    %47 = arith.addf %41, %46 : vector<24x384xf32>
    %48 = vector.extract_strided_slice %0 {offsets = [2, 0, 0], sizes = [12, 2, 28], strides = [1, 1, 1]} : vector<14x2x28xf32> to vector<12x2x28xf32>
    %49 = vector.shape_cast %48 : vector<12x2x28xf32> to vector<24x28xf32>
    %c3_32 = arith.constant 3 : index
    %c0_33 = arith.constant 0 : index
    %c0_34 = arith.constant 0 : index
    %50 = vector.load %arg3[%c3_32, %c0_33, %c0_34] : memref<5x28x384xf32, #tpu.memory_space<vmem>>, vector<1x28x384xf32>
    %51 = vector.shape_cast %50 : vector<1x28x384xf32> to vector<28x384xf32>
    %cst_35 = arith.constant dense<0.000000e+00> : vector<24x384xf32>
    %52 = tpu.matmul %49, %51, %cst_35 {dimension_numbers = #tpu.dot_dimension_numbers<[1], [0], [0], [1], [0, 0, 1, 1], [], []>} : vector<24x28xf32>, vector<28x384xf32>, vector<24x384xf32> -> vector<24x384xf32>
    %53 = arith.addf %47, %52 : vector<24x384xf32>
    %54 = vector.extract_strided_slice %1 {offsets = [2, 0, 0], sizes = [12, 2, 28], strides = [1, 1, 1]} : vector<14x2x28xf32> to vector<12x2x28xf32>
    %55 = vector.shape_cast %54 : vector<12x2x28xf32> to vector<24x28xf32>
    %c4_36 = arith.constant 4 : index
    %c0_37 = arith.constant 0 : index
    %c0_38 = arith.constant 0 : index
    %56 = vector.load %arg3[%c4_36, %c0_37, %c0_38] : memref<5x28x384xf32, #tpu.memory_space<vmem>>, vector<1x28x384xf32>
    %57 = vector.shape_cast %56 : vector<1x28x384xf32> to vector<28x384xf32>
    %cst_39 = arith.constant dense<0.000000e+00> : vector<24x384xf32>
    %58 = tpu.matmul %55, %57, %cst_39 {dimension_numbers = #tpu.dot_dimension_numbers<[1], [0], [0], [1], [0, 0, 1, 1], [], []>} : vector<24x28xf32>, vector<28x384xf32>, vector<24x384xf32> -> vector<24x384xf32>
    %59 = arith.addf %53, %58 : vector<24x384xf32>
    %60 = arith.maximumf %30, %59 : vector<24x384xf32>
    %c0_40 = arith.constant 0 : index
    %c0_41 = arith.constant 0 : index
    %61 = vector.load %arg4[%c0_40, %c0_41] : memref<1x384xf32, #tpu.memory_space<vmem>>, vector<1x384xf32>
    %62 = vector.broadcast %61 : vector<1x384xf32> to vector<24x384xf32>
    %63 = arith.addf %60, %62 : vector<24x384xf32>
    %64 = vector.extract_strided_slice %63 {offsets = [0, 0], sizes = [24, 368], strides = [1, 1]} : vector<24x384xf32> to vector<24x368xf32>
    %65 = vector.extract_strided_slice %63 {offsets = [0, 16], sizes = [24, 368], strides = [1, 1]} : vector<24x384xf32> to vector<24x368xf32>
    %66 = arith.maximumf %64, %65 : vector<24x368xf32>
    %cst_42 = arith.constant 0.000000e+00 : f32
    %67 = vector.broadcast %cst_42 : f32 to vector<24x368xf32>
    %68 = arith.maximumf %66, %67 : vector<24x368xf32>
    %69 = vector.extract_strided_slice %68 {offsets = [0, 0], sizes = [2, 368], strides = [1, 1]} : vector<24x368xf32> to vector<2x368xf32>
    %c0_43 = arith.constant 0 : index
    %c0_44 = arith.constant 0 : index
    %c0_45 = arith.constant 0 : index
    %70 = vector.load %arg5[%c0_43, %c0_44, %c0_45] : memref<12x368x128xf32, #tpu.memory_space<vmem>>, vector<1x368x128xf32>
    %71 = vector.shape_cast %70 : vector<1x368x128xf32> to vector<368x128xf32>
    %cst_46 = arith.constant dense<0.000000e+00> : vector<2x128xf32>
    %72 = tpu.matmul %69, %71, %cst_46 {dimension_numbers = #tpu.dot_dimension_numbers<[1], [0], [0], [1], [0, 0, 1, 1], [], []>} : vector<2x368xf32>, vector<368x128xf32>, vector<2x128xf32> -> vector<2x128xf32>
    %73 = vector.extract_strided_slice %68 {offsets = [2, 0], sizes = [2, 368], strides = [1, 1]} : vector<24x368xf32> to vector<2x368xf32>
    %c1_47 = arith.constant 1 : index
    %c0_48 = arith.constant 0 : index
    %c0_49 = arith.constant 0 : index
    %74 = vector.load %arg5[%c1_47, %c0_48, %c0_49] : memref<12x368x128xf32, #tpu.memory_space<vmem>>, vector<1x368x128xf32>
    %75 = vector.shape_cast %74 : vector<1x368x128xf32> to vector<368x128xf32>
    %cst_50 = arith.constant dense<0.000000e+00> : vector<2x128xf32>
    %76 = tpu.matmul %73, %75, %cst_50 {dimension_numbers = #tpu.dot_dimension_numbers<[1], [0], [0], [1], [0, 0, 1, 1], [], []>} : vector<2x368xf32>, vector<368x128xf32>, vector<2x128xf32> -> vector<2x128xf32>
    %77 = arith.addf %72, %76 : vector<2x128xf32>
    %78 = vector.extract_strided_slice %68 {offsets = [4, 0], sizes = [2, 368], strides = [1, 1]} : vector<24x368xf32> to vector<2x368xf32>
    %c2_51 = arith.constant 2 : index
    %c0_52 = arith.constant 0 : index
    %c0_53 = arith.constant 0 : index
    %79 = vector.load %arg5[%c2_51, %c0_52, %c0_53] : memref<12x368x128xf32, #tpu.memory_space<vmem>>, vector<1x368x128xf32>
    %80 = vector.shape_cast %79 : vector<1x368x128xf32> to vector<368x128xf32>
    %cst_54 = arith.constant dense<0.000000e+00> : vector<2x128xf32>
    %81 = tpu.matmul %78, %80, %cst_54 {dimension_numbers = #tpu.dot_dimension_numbers<[1], [0], [0], [1], [0, 0, 1, 1], [], []>} : vector<2x368xf32>, vector<368x128xf32>, vector<2x128xf32> -> vector<2x128xf32>
    %82 = arith.addf %77, %81 : vector<2x128xf32>
    %83 = vector.extract_strided_slice %68 {offsets = [6, 0], sizes = [2, 368], strides = [1, 1]} : vector<24x368xf32> to vector<2x368xf32>
    %c3_55 = arith.constant 3 : index
    %c0_56 = arith.constant 0 : index
    %c0_57 = arith.constant 0 : index
    %84 = vector.load %arg5[%c3_55, %c0_56, %c0_57] : memref<12x368x128xf32, #tpu.memory_space<vmem>>, vector<1x368x128xf32>
    %85 = vector.shape_cast %84 : vector<1x368x128xf32> to vector<368x128xf32>
    %cst_58 = arith.constant dense<0.000000e+00> : vector<2x128xf32>
    %86 = tpu.matmul %83, %85, %cst_58 {dimension_numbers = #tpu.dot_dimension_numbers<[1], [0], [0], [1], [0, 0, 1, 1], [], []>} : vector<2x368xf32>, vector<368x128xf32>, vector<2x128xf32> -> vector<2x128xf32>
    %87 = arith.addf %82, %86 : vector<2x128xf32>
    %88 = vector.extract_strided_slice %68 {offsets = [8, 0], sizes = [2, 368], strides = [1, 1]} : vector<24x368xf32> to vector<2x368xf32>
    %c4_59 = arith.constant 4 : index
    %c0_60 = arith.constant 0 : index
    %c0_61 = arith.constant 0 : index
    %89 = vector.load %arg5[%c4_59, %c0_60, %c0_61] : memref<12x368x128xf32, #tpu.memory_space<vmem>>, vector<1x368x128xf32>
    %90 = vector.shape_cast %89 : vector<1x368x128xf32> to vector<368x128xf32>
    %cst_62 = arith.constant dense<0.000000e+00> : vector<2x128xf32>
    %91 = tpu.matmul %88, %90, %cst_62 {dimension_numbers = #tpu.dot_dimension_numbers<[1], [0], [0], [1], [0, 0, 1, 1], [], []>} : vector<2x368xf32>, vector<368x128xf32>, vector<2x128xf32> -> vector<2x128xf32>
    %92 = arith.addf %87, %91 : vector<2x128xf32>
    %93 = vector.extract_strided_slice %68 {offsets = [10, 0], sizes = [2, 368], strides = [1, 1]} : vector<24x368xf32> to vector<2x368xf32>
    %c5 = arith.constant 5 : index
    %c0_63 = arith.constant 0 : index
    %c0_64 = arith.constant 0 : index
    %94 = vector.load %arg5[%c5, %c0_63, %c0_64] : memref<12x368x128xf32, #tpu.memory_space<vmem>>, vector<1x368x128xf32>
    %95 = vector.shape_cast %94 : vector<1x368x128xf32> to vector<368x128xf32>
    %cst_65 = arith.constant dense<0.000000e+00> : vector<2x128xf32>
    %96 = tpu.matmul %93, %95, %cst_65 {dimension_numbers = #tpu.dot_dimension_numbers<[1], [0], [0], [1], [0, 0, 1, 1], [], []>} : vector<2x368xf32>, vector<368x128xf32>, vector<2x128xf32> -> vector<2x128xf32>
    %97 = arith.addf %92, %96 : vector<2x128xf32>
    %98 = vector.extract_strided_slice %68 {offsets = [12, 0], sizes = [2, 368], strides = [1, 1]} : vector<24x368xf32> to vector<2x368xf32>
    %c6 = arith.constant 6 : index
    %c0_66 = arith.constant 0 : index
    %c0_67 = arith.constant 0 : index
    %99 = vector.load %arg5[%c6, %c0_66, %c0_67] : memref<12x368x128xf32, #tpu.memory_space<vmem>>, vector<1x368x128xf32>
    %100 = vector.shape_cast %99 : vector<1x368x128xf32> to vector<368x128xf32>
    %cst_68 = arith.constant dense<0.000000e+00> : vector<2x128xf32>
    %101 = tpu.matmul %98, %100, %cst_68 {dimension_numbers = #tpu.dot_dimension_numbers<[1], [0], [0], [1], [0, 0, 1, 1], [], []>} : vector<2x368xf32>, vector<368x128xf32>, vector<2x128xf32> -> vector<2x128xf32>
    %102 = arith.addf %97, %101 : vector<2x128xf32>
    %103 = vector.extract_strided_slice %68 {offsets = [14, 0], sizes = [2, 368], strides = [1, 1]} : vector<24x368xf32> to vector<2x368xf32>
    %c7 = arith.constant 7 : index
    %c0_69 = arith.constant 0 : index
    %c0_70 = arith.constant 0 : index
    %104 = vector.load %arg5[%c7, %c0_69, %c0_70] : memref<12x368x128xf32, #tpu.memory_space<vmem>>, vector<1x368x128xf32>
    %105 = vector.shape_cast %104 : vector<1x368x128xf32> to vector<368x128xf32>
    %cst_71 = arith.constant dense<0.000000e+00> : vector<2x128xf32>
    %106 = tpu.matmul %103, %105, %cst_71 {dimension_numbers = #tpu.dot_dimension_numbers<[1], [0], [0], [1], [0, 0, 1, 1], [], []>} : vector<2x368xf32>, vector<368x128xf32>, vector<2x128xf32> -> vector<2x128xf32>
    %107 = arith.addf %102, %106 : vector<2x128xf32>
    %108 = vector.extract_strided_slice %68 {offsets = [16, 0], sizes = [2, 368], strides = [1, 1]} : vector<24x368xf32> to vector<2x368xf32>
    %c8 = arith.constant 8 : index
    %c0_72 = arith.constant 0 : index
    %c0_73 = arith.constant 0 : index
    %109 = vector.load %arg5[%c8, %c0_72, %c0_73] : memref<12x368x128xf32, #tpu.memory_space<vmem>>, vector<1x368x128xf32>
    %110 = vector.shape_cast %109 : vector<1x368x128xf32> to vector<368x128xf32>
    %cst_74 = arith.constant dense<0.000000e+00> : vector<2x128xf32>
    %111 = tpu.matmul %108, %110, %cst_74 {dimension_numbers = #tpu.dot_dimension_numbers<[1], [0], [0], [1], [0, 0, 1, 1], [], []>} : vector<2x368xf32>, vector<368x128xf32>, vector<2x128xf32> -> vector<2x128xf32>
    %112 = arith.addf %107, %111 : vector<2x128xf32>
    %113 = vector.extract_strided_slice %68 {offsets = [18, 0], sizes = [2, 368], strides = [1, 1]} : vector<24x368xf32> to vector<2x368xf32>
    %c9 = arith.constant 9 : index
    %c0_75 = arith.constant 0 : index
    %c0_76 = arith.constant 0 : index
    %114 = vector.load %arg5[%c9, %c0_75, %c0_76] : memref<12x368x128xf32, #tpu.memory_space<vmem>>, vector<1x368x128xf32>
    %115 = vector.shape_cast %114 : vector<1x368x128xf32> to vector<368x128xf32>
    %cst_77 = arith.constant dense<0.000000e+00> : vector<2x128xf32>
    %116 = tpu.matmul %113, %115, %cst_77 {dimension_numbers = #tpu.dot_dimension_numbers<[1], [0], [0], [1], [0, 0, 1, 1], [], []>} : vector<2x368xf32>, vector<368x128xf32>, vector<2x128xf32> -> vector<2x128xf32>
    %117 = arith.addf %112, %116 : vector<2x128xf32>
    %118 = vector.extract_strided_slice %68 {offsets = [20, 0], sizes = [2, 368], strides = [1, 1]} : vector<24x368xf32> to vector<2x368xf32>
    %c10 = arith.constant 10 : index
    %c0_78 = arith.constant 0 : index
    %c0_79 = arith.constant 0 : index
    %119 = vector.load %arg5[%c10, %c0_78, %c0_79] : memref<12x368x128xf32, #tpu.memory_space<vmem>>, vector<1x368x128xf32>
    %120 = vector.shape_cast %119 : vector<1x368x128xf32> to vector<368x128xf32>
    %cst_80 = arith.constant dense<0.000000e+00> : vector<2x128xf32>
    %121 = tpu.matmul %118, %120, %cst_80 {dimension_numbers = #tpu.dot_dimension_numbers<[1], [0], [0], [1], [0, 0, 1, 1], [], []>} : vector<2x368xf32>, vector<368x128xf32>, vector<2x128xf32> -> vector<2x128xf32>
    %122 = arith.addf %117, %121 : vector<2x128xf32>
    %123 = vector.extract_strided_slice %68 {offsets = [22, 0], sizes = [2, 368], strides = [1, 1]} : vector<24x368xf32> to vector<2x368xf32>
    %c11 = arith.constant 11 : index
    %c0_81 = arith.constant 0 : index
    %c0_82 = arith.constant 0 : index
    %124 = vector.load %arg5[%c11, %c0_81, %c0_82] : memref<12x368x128xf32, #tpu.memory_space<vmem>>, vector<1x368x128xf32>
    %125 = vector.shape_cast %124 : vector<1x368x128xf32> to vector<368x128xf32>
    %cst_83 = arith.constant dense<0.000000e+00> : vector<2x128xf32>
    %126 = tpu.matmul %123, %125, %cst_83 {dimension_numbers = #tpu.dot_dimension_numbers<[1], [0], [0], [1], [0, 0, 1, 1], [], []>} : vector<2x368xf32>, vector<368x128xf32>, vector<2x128xf32> -> vector<2x128xf32>
    %127 = arith.addf %122, %126 : vector<2x128xf32>
    %c0_84 = arith.constant 0 : index
    %c0_85 = arith.constant 0 : index
    %128 = vector.load %arg6[%c0_84, %c0_85] : memref<1x128xf32, #tpu.memory_space<vmem>>, vector<1x128xf32>
    %129 = vector.broadcast %128 : vector<1x128xf32> to vector<2x128xf32>
    %130 = arith.addf %127, %129 : vector<2x128xf32>
    %c0_86 = arith.constant 0 : index
    %c0_87 = arith.constant 0 : index
    %131 = vector.load %arg7[%c0_86, %c0_87] : memref<128x128xf32, #tpu.memory_space<vmem>>, vector<128x128xf32>
    %cst_88 = arith.constant dense<0.000000e+00> : vector<2x128xf32>
    %132 = tpu.matmul %130, %131, %cst_88 {dimension_numbers = #tpu.dot_dimension_numbers<[1], [0], [0], [1], [0, 0, 1, 1], [], []>} : vector<2x128xf32>, vector<128x128xf32>, vector<2x128xf32> -> vector<2x128xf32>
    %c0_89 = arith.constant 0 : index
    %c0_90 = arith.constant 0 : index
    %133 = vector.load %arg8[%c0_89, %c0_90] : memref<1x128xf32, #tpu.memory_space<vmem>>, vector<1x128xf32>
    %134 = vector.broadcast %133 : vector<1x128xf32> to vector<2x128xf32>
    %135 = arith.addf %132, %134 : vector<2x128xf32>
    %c0_91 = arith.constant 0 : index
    %c0_92 = arith.constant 0 : index
    %136 = vector.load %arg9[%c0_91, %c0_92] : memref<2x128xf32, #tpu.memory_space<vmem>>, vector<2x128xf32>
    tpu.vector_store %arg9[%c0_91, %c0_92], %135 {strides = array<i32>} : memref<2x128xf32, #tpu.memory_space<vmem>>, vector<2x128xf32>,
    return
  }
  func.func @transform_0(%arg0: i32) -> (i32, i32, i32) {
    %c0_i32 = arith.constant 0 : i32
    %c0_i32_0 = arith.constant 0 : i32
    %c0_i32_1 = arith.constant 0 : i32
    return %c0_i32, %arg0, %c0_i32_0 : i32, i32, i32
  }
  func.func @transform_1(%arg0: i32) -> (i32, i32, i32) {
    %c0_i32 = arith.constant 0 : i32
    %c0_i32_0 = arith.constant 0 : i32
    %c0_i32_1 = arith.constant 0 : i32
    return %c0_i32, %arg0, %c0_i32_0 : i32, i32, i32
  }
  func.func @transform_2(%arg0: i32) -> (i32, i32, i32) {
    %c0_i32 = arith.constant 0 : i32
    %c0_i32_0 = arith.constant 0 : i32
    %c0_i32_1 = arith.constant 0 : i32
    %c0_i32_2 = arith.constant 0 : i32
    return %c0_i32, %c0_i32_0, %c0_i32_1 : i32, i32, i32
  }
  func.func @transform_3(%arg0: i32) -> (i32, i32) {
    %c0_i32 = arith.constant 0 : i32
    %c0_i32_0 = arith.constant 0 : i32
    %c0_i32_1 = arith.constant 0 : i32
    return %c0_i32, %c0_i32_0 : i32, i32
  }
  func.func @transform_4(%arg0: i32) -> (i32, i32, i32) {
    %c0_i32 = arith.constant 0 : i32
    %c0_i32_0 = arith.constant 0 : i32
    %c0_i32_1 = arith.constant 0 : i32
    %c0_i32_2 = arith.constant 0 : i32
    return %c0_i32, %c0_i32_0, %c0_i32_1 : i32, i32, i32
  }
  func.func @transform_5(%arg0: i32) -> (i32, i32) {
    %c0_i32 = arith.constant 0 : i32
    %c0_i32_0 = arith.constant 0 : i32
    %c0_i32_1 = arith.constant 0 : i32
    return %c0_i32, %c0_i32_0 : i32, i32
  }
  func.func @transform_6(%arg0: i32) -> (i32, i32) {
    %c0_i32 = arith.constant 0 : i32
    %c0_i32_0 = arith.constant 0 : i32
    %c0_i32_1 = arith.constant 0 : i32
    return %c0_i32, %c0_i32_0 : i32, i32
  }
  func.func @transform_7(%arg0: i32) -> (i32, i32) {
    %c0_i32 = arith.constant 0 : i32
    %c0_i32_0 = arith.constant 0 : i32
    %c0_i32_1 = arith.constant 0 : i32
    return %c0_i32, %c0_i32_0 : i32, i32
  }
  func.func @transform_8(%arg0: i32) -> (i32, i32) {
    %c0_i32 = arith.constant 0 : i32
    %c0_i32_0 = arith.constant 0 : i32
    return %arg0, %c0_i32 : i32, i32
  }
}

</mosaic_0001>

<llo_original>
// kernel: cnn_small_forward.1
$region0: #{cnn_small_forward.1}
  #allocation0 [shape = 'u32[]', space=smem, size = 0x4, offset = 0x4, fixed_abs, tag = 'smem constant byte address 0x4 - core index']
  #allocation1 [shape = 'u32[144,128]{1,0:T(1,128)}', space=vmem, size = 0x12000, scoped, tag = 'internal scratch']
  %s0 = inlined_call_operand.vmem [shape: f32[14,2,28], index: 0, kind: input, shape index: {}]
  %s1 = inlined_call_operand.vmem [shape: f32[14,2,28], index: 1, kind: input, shape index: {}]
  %s2 = inlined_call_operand.hbm [shape: f32[5,28,384], index: 2, kind: input, shape index: {}]
  %s3 = inlined_call_operand.hbm [shape: f32[1,384], index: 3, kind: input, shape index: {}]
  %s4 = inlined_call_operand.hbm [shape: f32[12,368,128], index: 4, kind: input, shape index: {}]
  %s5 = inlined_call_operand.hbm [shape: f32[1,128], index: 5, kind: input, shape index: {}]
  %s6 = inlined_call_operand.hbm [shape: f32[128,128], index: 6, kind: input, shape index: {}]
  %s7 = inlined_call_operand.hbm [shape: f32[1,128], index: 7, kind: input, shape index: {}]
  %s8 = inlined_call_operand.hbm [shape: f32[2,128], index: 8, kind: output, shape index: {}]
  %s9 = sld [smem:[#allocation0]]
  $region66: #{cnn_small_forward.1} parent=0
    _
  %s11 = ssub.s32 1, %s9
  %s12 = scalar_select 0, %s11, %s9
  $region1: #{cnn_small_forward.1} parent=0
    #allocation2 [shape = 'u8[245760]{0}', space=vmem, size = 0x3c000, scoped, tag = 'input window, operand 2, single buffered']
    #allocation3 [shape = 's32[1]{0}', space=sflag, size = 0x4, scoped, tag = 'scoped memory for cnn_small_forward.1']
    #allocation4 [shape = 's32[1]{0}', space=sflag, size = 0x4, scoped, tag = 'scoped memory for cnn_small_forward.1']
    #allocation5 [shape = 'u8[1536]{0}', space=vmem, size = 0x800, scoped, tag = 'input window, operand 3, single buffered']
    #allocation6 [shape = 's32[1]{0}', space=sflag, size = 0x4, scoped, tag = 'scoped memory for cnn_small_forward.1']
    #allocation7 [shape = 'u8[2260992]{0}', space=vmem, size = 0x228000, scoped, tag = 'input window, operand 4, single buffered']
    #allocation8 [shape = 'u8[512]{0}', space=vmem, size = 0x400, scoped, tag = 'input window, operand 5, single buffered']
    #allocation9 [shape = 's32[1]{0}', space=sflag, size = 0x4, scoped, tag = 'scoped memory for cnn_small_forward.1']
    #allocation10 [shape = 'u8[65536]{0}', space=vmem, size = 0x10000, scoped, tag = 'input window, operand 6, single buffered']
    #allocation11 [shape = 'u8[512]{0}', space=vmem, size = 0x400, scoped, tag = 'input window, operand 7, single buffered']
    #allocation12 [shape = 's32[1]{0}', space=sflag, size = 0x4, scoped, tag = 'scoped memory for cnn_small_forward.1']
    #allocation13 [shape = 'u8[1024]{0}', space=vmem, size = 0x400, scoped, tag = 'output window, operand 0, single buffered']
    %13 = vsyncpa [#allocation3], 0
    %14 = vsyncpa [#allocation6], 0
    %15 = vsyncpa [#allocation9], 0
    %16 = vsyncpa [#allocation12], 0
    %17 = vsyncpa [#allocation4], 0
    // Predicated region
    $region2: #{cnn_small_forward.1} parent=1 // pred_check
      _
    $region3: #{cnn_small_forward.1} parent=1 // pred_check_branch
      %19 = sbr.rel (0) target = $region5
    $region4: #{cnn_small_forward.1} parent=1 // pred_region
      _
    $region5: #{cnn_small_forward.1} parent=1 // pred_fallthru
      _
    // Predicated region
    $region6: #{cnn_small_forward.1} parent=1 // pred_check
      _
    $region7: #{cnn_small_forward.1} parent=1 // pred_check_branch
      %21 = sbr.rel (0) target = $region9
    $region8: #{cnn_small_forward.1} parent=1 // pred_region
      _
    $region9: #{cnn_small_forward.1} parent=1 // pred_fallthru
      _
    // Predicated region
    $region10: #{cnn_small_forward.1} parent=1 // pred_check
      _
    $region11: #{cnn_small_forward.1} parent=1 // pred_check_branch
      %23 = sbr.rel (0) target = $region13
    $region12: #{cnn_small_forward.1} parent=1 // pred_region
      %s25 = ssub.s32 7680, 7680
      %26 = vsyncadd [#allocation3], %s25
      %s27 = sshll.u32 [#allocation2], 4
      %s28 = int_to_ptr.vmem [resolvable:$true] %s27
      %33 = dma.hbm_to_vmem [thread:$0]  %s2, 7680, %s28, [#allocation3], 384, 384, 24
    $region13: #{cnn_small_forward.1} parent=1 // pred_fallthru
      _
    // Predicated region
    $region14: #{cnn_small_forward.1} parent=1 // pred_check
      _
    $region15: #{cnn_small_forward.1} parent=1 // pred_check_branch
      %35 = sbr.rel (0) target = $region17
    $region16: #{cnn_small_forward.1} parent=1 // pred_region
      %s37 = ssub.s32 48, 48
      %38 = vsyncadd [#allocation6], %s37
      %s40 = sshll.u32 [#allocation5], 4
      %s41 = int_to_ptr.vmem [resolvable:$true] %s40
      %43 = dma.hbm_to_vmem [thread:$0]  %s3, 48, %s41, [#allocation6]
    $region17: #{cnn_small_forward.1} parent=1 // pred_fallthru
      _
    // Predicated region
    $region18: #{cnn_small_forward.1} parent=1 // pred_check
      _
    $region19: #{cnn_small_forward.1} parent=1 // pred_check_branch
      %45 = sbr.rel (0) target = $region21
    $region20: #{cnn_small_forward.1} parent=1 // pred_region
      %s47 = ssub.s32 70656, 70656
      %48 = vsyncadd [#allocation6], %s47
      %s49 = sshll.u32 [#allocation7], 4
      %s50 = int_to_ptr.vmem [resolvable:$true] %s49
      %55 = dma.hbm_to_vmem [thread:$0]  %s4, 70656, %s50, [#allocation6], 128, 128, 8
    $region21: #{cnn_small_forward.1} parent=1 // pred_fallthru
      _
    // Predicated region
    $region22: #{cnn_small_forward.1} parent=1 // pred_check
      _
    $region23: #{cnn_small_forward.1} parent=1 // pred_check_branch
      %57 = sbr.rel (0) target = $region25
    $region24: #{cnn_small_forward.1} parent=1 // pred_region
      %s59 = ssub.s32 16, 16
      %60 = vsyncadd [#allocation9], %s59
      %s62 = sshll.u32 [#allocation8], 4
      %s63 = int_to_ptr.vmem [resolvable:$true] %s62
      %65 = dma.hbm_to_vmem [thread:$0]  %s5, 16, %s63, [#allocation9]
    $region25: #{cnn_small_forward.1} parent=1 // pred_fallthru
      _
    // Predicated region
    $region26: #{cnn_small_forward.1} parent=1 // pred_check
      _
    $region27: #{cnn_small_forward.1} parent=1 // pred_check_branch
      %67 = sbr.rel (0) target = $region29
    $region28: #{cnn_small_forward.1} parent=1 // pred_region
      %s69 = ssub.s32 2048, 2048
      %70 = vsyncadd [#allocation9], %s69
      %s71 = sshll.u32 [#allocation10], 4
      %s72 = int_to_ptr.vmem [resolvable:$true] %s71
      %77 = dma.hbm_to_vmem [thread:$0]  %s6, 2048, %s72, [#allocation9], 128, 128, 8
    $region29: #{cnn_small_forward.1} parent=1 // pred_fallthru
      _
    // Predicated region
    $region30: #{cnn_small_forward.1} parent=1 // pred_check
      _
    $region31: #{cnn_small_forward.1} parent=1 // pred_check_branch
      %79 = sbr.rel (0) target = $region33
    $region32: #{cnn_small_forward.1} parent=1 // pred_region
      %s81 = ssub.s32 16, 16
      %82 = vsyncadd [#allocation12], %s81
      %s84 = sshll.u32 [#allocation11], 4
      %s85 = int_to_ptr.vmem [resolvable:$true] %s84
      %87 = dma.hbm_to_vmem [thread:$0]  %s7, 16, %s85, [#allocation12]
    $region33: #{cnn_small_forward.1} parent=1 // pred_fallthru
      _
    // Predicated region
    $region34: #{cnn_small_forward.1} parent=1 // pred_check
      _
    $region35: #{cnn_small_forward.1} parent=1 // pred_check_branch
      %89 = sbr.rel (0) target = $region37
    $region36: #{cnn_small_forward.1} parent=1 // pred_region
      %90 = dma.done [#allocation3], 7680
    $region37: #{cnn_small_forward.1} parent=1 // pred_fallthru
      _
    // Predicated region
    $region38: #{cnn_small_forward.1} parent=1 // pred_check
      _
    $region39: #{cnn_small_forward.1} parent=1 // pred_check_branch
      %92 = sbr.rel (0) target = $region41
    $region40: #{cnn_small_forward.1} parent=1 // pred_region
      %93 = dma.done [#allocation6], 48
    $region41: #{cnn_small_forward.1} parent=1 // pred_fallthru
      _
    // Predicated region
    $region42: #{cnn_small_forward.1} parent=1 // pred_check
      _
    $region43: #{cnn_small_forward.1} parent=1 // pred_check_branch
      %95 = sbr.rel (0) target = $region45
    $region44: #{cnn_small_forward.1} parent=1 // pred_region
      %96 = dma.done [#allocation6], 70656
    $region45: #{cnn_small_forward.1} parent=1 // pred_fallthru
      _
    // Predicated region
    $region46: #{cnn_small_forward.1} parent=1 // pred_check
      _
    $region47: #{cnn_small_forward.1} parent=1 // pred_check_branch
      %98 = sbr.rel (0) target = $region49
    $region48: #{cnn_small_forward.1} parent=1 // pred_region
      %99 = dma.done [#allocation9], 16
    $region49: #{cnn_small_forward.1} parent=1 // pred_fallthru
      _
    // Predicated region
    $region50: #{cnn_small_forward.1} parent=1 // pred_check
      _
    $region51: #{cnn_small_forward.1} parent=1 // pred_check_branch
      %101 = sbr.rel (0) target = $region53
    $region52: #{cnn_small_forward.1} parent=1 // pred_region
      %102 = dma.done [#allocation9], 2048
    $region53: #{cnn_small_forward.1} parent=1 // pred_fallthru
      _
    // Predicated region
    $region54: #{cnn_small_forward.1} parent=1 // pred_check
      _
    $region55: #{cnn_small_forward.1} parent=1 // pred_check_branch
      %104 = sbr.rel (0) target = $region57
    $region56: #{cnn_small_forward.1} parent=1 // pred_region
      %105 = dma.done [#allocation12], 16
    $region57: #{cnn_small_forward.1} parent=1 // pred_fallthru
      _
    %v106 = vld [vmem:[%s0] sm:$0x3]
    %v107 = vld [vmem:[%s0 + $0x2] sm:$0x3]
    %v108 = vld [vmem:[%s0 + $0x4] sm:$0x3]
    %v109 = vld [vmem:[%s0 + $0x6] sm:$0x3]
    %v110 = vld [vmem:[%s0 + $0x8] sm:$0x3]
    %v111 = vld [vmem:[%s0 + $0xa] sm:$0x3]
    %v112 = vld [vmem:[%s0 + $0xc] sm:$0x3]
    %v113 = vld [vmem:[%s0 + $0xe] sm:$0x3]
    %v114 = vld [vmem:[%s0 + $0x10] sm:$0x3]
    %v115 = vld [vmem:[%s0 + $0x12] sm:$0x3]
    %v116 = vld [vmem:[%s0 + $0x14] sm:$0x3]
    %v117 = vld [vmem:[%s0 + $0x16] sm:$0x3]
    %v118 = vld [vmem:[%s0 + $0x18] sm:$0x3]
    %v119 = vld [vmem:[%s0 + $0x1a] sm:$0x3]
    %v120 = vld [vmem:[%s1] sm:$0x3]
    %v121 = vld [vmem:[%s1 + $0x2] sm:$0x3]
    %v122 = vld [vmem:[%s1 + $0x4] sm:$0x3]
    %v123 = vld [vmem:[%s1 + $0x6] sm:$0x3]
    %v124 = vld [vmem:[%s1 + $0x8] sm:$0x3]
    %v125 = vld [vmem:[%s1 + $0xa] sm:$0x3]
    %v126 = vld [vmem:[%s1 + $0xc] sm:$0x3]
    %v127 = vld [vmem:[%s1 + $0xe] sm:$0x3]
    %v128 = vld [vmem:[%s1 + $0x10] sm:$0x3]
    %v129 = vld [vmem:[%s1 + $0x12] sm:$0x3]
    %v130 = vld [vmem:[%s1 + $0x14] sm:$0x3]
    %v131 = vld [vmem:[%s1 + $0x16] sm:$0x3]
    %v132 = vld [vmem:[%s1 + $0x18] sm:$0x3]
    %v133 = vld [vmem:[%s1 + $0x1a] sm:$0x3]
    %v134 = vld [vmem:[#allocation2] sm:$0xff]
    %v135 = vld [vmem:[#allocation2 + $0x8] sm:$0xff]
    %v136 = vld [vmem:[#allocation2 + $0x10] sm:$0xff]
    %v137 = vld [vmem:[#allocation2 + $0x18] sm:$0xff]
    %v138 = vld [vmem:[#allocation2 + $0x20] sm:$0xff]
    %v139 = vld [vmem:[#allocation2 + $0x28] sm:$0xff]
    %v140 = vld [vmem:[#allocation2 + $0x30] sm:$0xff]
    %v141 = vld [vmem:[#allocation2 + $0x38] sm:$0xff]
    %v142 = vld [vmem:[#allocation2 + $0x40] sm:$0xff]
    %v143 = vld [vmem:[#allocation2 + $0x48] sm:$0xf]
    %v144 = vld [vmem:[#allocation2 + $0x50] sm:$0xf]
    %v145 = vld [vmem:[#allocation2 + $0x58] sm:$0xf]
    %s146 = scalar_lea.vmem [#allocation2], 96
    %v147 = vld [vmem:[%s146] sm:$0xff]
    %v148 = vld [vmem:[%s146 + $0x8] sm:$0xff]
    %v149 = vld [vmem:[%s146 + $0x10] sm:$0xff]
    %v150 = vld [vmem:[%s146 + $0x18] sm:$0xff]
    %v151 = vld [vmem:[%s146 + $0x20] sm:$0xff]
    %v152 = vld [vmem:[%s146 + $0x28] sm:$0xff]
    %v153 = vld [vmem:[%s146 + $0x30] sm:$0xff]
    %v154 = vld [vmem:[%s146 + $0x38] sm:$0xff]
    %v155 = vld [vmem:[%s146 + $0x40] sm:$0xff]
    %v156 = vld [vmem:[%s146 + $0x48] sm:$0xf]
    %v157 = vld [vmem:[%s146 + $0x50] sm:$0xf]
    %v158 = vld [vmem:[%s146 + $0x58] sm:$0xf]
    %v171 = vcombine.low %v120, %v121
    %v172 = vcombine.low %v122, %v123
    %v174 = vunpack.c.l.s4 1983009808
    %v175 = vunpack.c.0.s8 %v174
    %v176 = vlaneseq
    %v177 = vshrl.u32 %v176, 7
    %v178 = vsub.s32 %v175, %v177
    %v179 = vrot.slane %v171, %v178
    %v181 = vunpack.c.l.s4 1983009808
    %v182 = vunpack.c.0.s8 %v181
    %v183 = vlaneseq
    %v184 = vshrl.u32 %v183, 7
    %v185 = vsub.s32 %v182, %v184
    %v186 = vrot.slane %v172, %v185
    %v187 = vcombine.low %v179, %v186
    %v188 = vcombine.low %v124, %v125
    %v189 = vcombine.low %v126, %v127
    %v191 = vunpack.c.l.s4 1983009808
    %v192 = vunpack.c.0.s8 %v191
    %v193 = vlaneseq
    %v194 = vshrl.u32 %v193, 7
    %v195 = vsub.s32 %v192, %v194
    %v196 = vrot.slane %v188, %v195
    %v198 = vunpack.c.l.s4 1983009808
    %v199 = vunpack.c.0.s8 %v198
    %v200 = vlaneseq
    %v201 = vshrl.u32 %v200, 7
    %v202 = vsub.s32 %v199, %v201
    %v203 = vrot.slane %v189, %v202
    %v204 = vcombine.low %v196, %v203
    %v205 = vcombine.low %v128, %v129
    %v206 = vcombine.low %v130, %v131
    %v208 = vunpack.c.l.s4 1983009808
    %v209 = vunpack.c.0.s8 %v208
    %v210 = vlaneseq
    %v211 = vshrl.u32 %v210, 7
    %v212 = vsub.s32 %v209, %v211
    %v213 = vrot.slane %v205, %v212
    %v215 = vunpack.c.l.s4 1983009808
    %v216 = vunpack.c.0.s8 %v215
    %v217 = vlaneseq
    %v218 = vshrl.u32 %v217, 7
    %v219 = vsub.s32 %v216, %v218
    %v220 = vrot.slane %v206, %v219
    %v221 = vcombine.low %v213, %v220
    %vm222 = vcmask 228352
    %v223 = vsel %vm222, %v187, 0
    %v225 = vsel %vm222, %v204, 0
    %v227 = vsel %vm222, %v221, 0
    %vm229 = vcmask 1043456
    %v231 = vsel %vm229, %v156, 0
    %v234 = vsel %vm229, %v157, 0
    %v237 = vsel %vm229, %v158, 0
    %239 = vmatprep.subr.mxu0 %v148
    %240 = vmatpush1.msra.mxu0 %v147
    %241 = vmatprep.subr.mxu0 %v151
    %242 = vmatpush1.msra.mxu0 %v150
    %243 = vmatprep.subr.mxu0 %v154
    %244 = vmatpush1.msra.mxu0 %v153
    %245 = vmatprep.subr.mxu0 %v234
    %246 = vmatpush1.msra.mxu0 %v231
    %247 = vmatprep.subr.mxu0 0.0
    %248 = vmatpush1.msra.mxu0 0.0
    %249 = vmatprep.subr.mxu0 0.0
    %250 = vmatpush1.msra.mxu0 0.0
    %251 = vmatprep.subr.mxu0 0.0
    %252 = vmatpush1.msra.mxu0 0.0
    %253 = vmatprep.subr.mxu0 0.0
    %254 = vmatpush1.msra.mxu0 0.0
    %255 = vmatprep.subr.mxu0 0.0
    %256 = vmatpush1.msra.mxu0 0.0
    %257 = vmatprep.subr.mxu0 0.0
    %258 = vmatpush1.msra.mxu0 0.0
    %259 = vmatprep.subr.mxu0 0.0
    %260 = vmatpush1.msra.mxu0 0.0
    %261 = vmatprep.subr.mxu0 0.0
    %262 = vmatpush1.msra.mxu0 0.0
    %263 = vmatprep.subr.mxu0 0.0
    %264 = vmatpush1.msra.mxu0 0.0
    %265 = vmatprep.subr.mxu0 0.0
    %266 = vmatpush1.msra.mxu0 0.0
    %267 = vmatprep.subr.mxu0 0.0
    %268 = vmatpush1.msra.mxu0 0.0
    %269 = vmatprep.subr.mxu0 0.0
    %270 = vmatpush1.msra.mxu0 0.0
    %271 = vmatprep.subr.mxu0 0.0
    %272 = vmatpush1.msra.mxu0 0.0
    %273 = vmatprep.subr.mxu0 0.0
    %274 = vmatpush1.msra.mxu0 0.0
    %275 = vmatprep.subr.mxu0 0.0
    %276 = vmatpush1.msra.mxu0 0.0
    %277 = vmatprep.subr.mxu0 0.0
    %278 = vmatpush1.msra.mxu0 0.0
    %279 = vmatprep.subr.mxu0 0.0
    %280 = vmatpush1.msra.mxu0 0.0
    %281 = vmatprep.subr.mxu0 0.0
    %282 = vmatpush1.msra.mxu0 0.0
    %283 = vmatprep.subr.mxu0 0.0
    %284 = vmatpush1.msra.mxu0 0.0
    %285 = vmatprep.subr.mxu0 0.0
    %286 = vmatpush1.msra.mxu0 0.0
    %287 = vmatprep.subr.mxu0 0.0
    %288 = vmatpush1.msra.mxu0 0.0
    %289 = vmatprep.subr.mxu0 0.0
    %290 = vmatpush1.msra.mxu0 0.0
    %291 = vmatprep.subr.mxu0 0.0
    %292 = vmatpush1.msra.mxu0 0.0
    %293 = vmatprep.subr.mxu0 0.0
    %294 = vmatpush1.msra.mxu0 0.0
    %295 = vmatprep.subr.mxu0 0.0
    %296 = vmatpush1.msra.mxu0 0.0
    %297 = vmatprep.subr.mxu0 0.0
    %298 = vmatpush1.msra.mxu0 0.0
    %299 = vmatprep.subr.mxu0 0.0
    %300 = vmatpush1.msra.mxu0 0.0
    %301 = vmatprep.subr.mxu0 0.0
    %302 = vmatpush1.msra.mxu0 0.0
    %303 = vmatprep.mubr.f32.mxu0 0.0
    %304 = vmatmul.mubr.f32.gmra.mrb[0].mxu0 %v223
    %v305 = vpop.f32.mrb[0].mxu0
    %v306 = vadd.f32 0.0, %v305
    %v307 = vpop.f32.mrb[0].mxu0
    %v308 = vadd.f32 0.0, %v307
    %309 = vmatprep.mubr.f32.mxu0 0.0
    %310 = vmatmul.mubr.f32.gmra.mrb[0].mxu0 %v225
    %v311 = vpop.f32.mrb[0].mxu0
    %v312 = vadd.f32 0.0, %v311
    %v313 = vpop.f32.mrb[0].mxu0
    %v314 = vadd.f32 0.0, %v313
    %315 = vmatprep.mubr.f32.mxu0 0.0
    %316 = vmatmul.mubr.f32.gmra.mrb[0].mxu0 %v227
    %v317 = vpop.f32.mrb[0].mxu0
    %v318 = vadd.f32 0.0, %v317
    %v319 = vpop.f32.mrb[0].mxu0
    %v320 = vadd.f32 0.0, %v319
    %321 = vdwg.mxu0
    %322 = vmatprep.subr.mxu0 0.0
    %323 = vmatpush1.msra.mxu0 %v149
    %324 = vmatprep.subr.mxu0 0.0
    %325 = vmatpush1.msra.mxu0 %v152
    %326 = vmatprep.subr.mxu0 0.0
    %327 = vmatpush1.msra.mxu0 %v155
    %328 = vmatprep.subr.mxu0 0.0
    %329 = vmatpush1.msra.mxu0 %v237
    %330 = vmatprep.subr.mxu0 0.0
    %331 = vmatpush1.msra.mxu0 0.0
    %332 = vmatprep.subr.mxu0 0.0
    %333 = vmatpush1.msra.mxu0 0.0
    %334 = vmatprep.subr.mxu0 0.0
    %335 = vmatpush1.msra.mxu0 0.0
    %336 = vmatprep.subr.mxu0 0.0
    %337 = vmatpush1.msra.mxu0 0.0
    %338 = vmatprep.subr.mxu0 0.0
    %339 = vmatpush1.msra.mxu0 0.0
    %340 = vmatprep.subr.mxu0 0.0
    %341 = vmatpush1.msra.mxu0 0.0
    %342 = vmatprep.subr.mxu0 0.0
    %343 = vmatpush1.msra.mxu0 0.0
    %344 = vmatprep.subr.mxu0 0.0
    %345 = vmatpush1.msra.mxu0 0.0
    %346 = vmatprep.subr.mxu0 0.0
    %347 = vmatpush1.msra.mxu0 0.0
    %348 = vmatprep.subr.mxu0 0.0
    %349 = vmatpush1.msra.mxu0 0.0
    %350 = vmatprep.subr.mxu0 0.0
    %351 = vmatpush1.msra.mxu0 0.0
    %352 = vmatprep.subr.mxu0 0.0
    %353 = vmatpush1.msra.mxu0 0.0
    %354 = vmatprep.subr.mxu0 0.0
    %355 = vmatpush1.msra.mxu0 0.0
    %356 = vmatprep.subr.mxu0 0.0
    %357 = vmatpush1.msra.mxu0 0.0
    %358 = vmatprep.subr.mxu0 0.0
    %359 = vmatpush1.msra.mxu0 0.0
    %360 = vmatprep.subr.mxu0 0.0
    %361 = vmatpush1.msra.mxu0 0.0
    %362 = vmatprep.subr.mxu0 0.0
    %363 = vmatpush1.msra.mxu0 0.0
    %364 = vmatprep.subr.mxu0 0.0
    %365 = vmatpush1.msra.mxu0 0.0
    %366 = vmatprep.subr.mxu0 0.0
    %367 = vmatpush1.msra.mxu0 0.0
    %368 = vmatprep.subr.mxu0 0.0
    %369 = vmatpush1.msra.mxu0 0.0
    %370 = vmatprep.subr.mxu0 0.0
    %371 = vmatpush1.msra.mxu0 0.0
    %372 = vmatprep.subr.mxu0 0.0
    %373 = vmatpush1.msra.mxu0 0.0
    %374 = vmatprep.subr.mxu0 0.0
    %375 = vmatpush1.msra.mxu0 0.0
    %376 = vmatprep.subr.mxu0 0.0
    %377 = vmatpush1.msra.mxu0 0.0
    %378 = vmatprep.subr.mxu0 0.0
    %379 = vmatpush1.msra.mxu0 0.0
    %380 = vmatprep.subr.mxu0 0.0
    %381 = vmatpush1.msra.mxu0 0.0
    %382 = vmatprep.subr.mxu0 0.0
    %383 = vmatpush1.msra.mxu0 0.0
    %384 = vmatprep.subr.mxu0 0.0
    %385 = vmatpush1.msra.mxu0 0.0
    %386 = vmatprep.mubr.f32.mxu0 0.0
    %387 = vmatmul.mubr.f32.gmra.mrb[0].mxu0 %v223
    %v388 = vpop.f32.mrb[0].mxu0
    %v389 = vadd.f32 0.0, %v388
    %v390 = vpop.f32.mrb[0].mxu0
    %391 = vmatprep.mubr.f32.mxu0 0.0
    %392 = vmatmul.mubr.f32.gmra.mrb[0].mxu0 %v225
    %v393 = vpop.f32.mrb[0].mxu0
    %v394 = vadd.f32 0.0, %v393
    %v395 = vpop.f32.mrb[0].mxu0
    %396 = vmatprep.mubr.f32.mxu0 0.0
    %397 = vmatmul.mubr.f32.gmra.mrb[0].mxu0 %v227
    %v398 = vpop.f32.mrb[0].mxu0
    %v399 = vadd.f32 0.0, %v398
    %v400 = vpop.f32.mrb[0].mxu0
    %401 = vdwg.mxu0
    %v414 = vcombine.low %v106, %v107
    %v415 = vcombine.low %v108, %v109
    %v417 = vunpack.c.l.s4 1983009808
    %v418 = vunpack.c.0.s8 %v417
    %v419 = vlaneseq
    %v420 = vshrl.u32 %v419, 7
    %v421 = vsub.s32 %v418, %v420
    %v422 = vrot.slane %v414, %v421
    %v424 = vunpack.c.l.s4 1983009808
    %v425 = vunpack.c.0.s8 %v424
    %v426 = vlaneseq
    %v427 = vshrl.u32 %v426, 7
    %v428 = vsub.s32 %v425, %v427
    %v429 = vrot.slane %v415, %v428
    %v430 = vcombine.low %v422, %v429
    %v431 = vcombine.low %v110, %v111
    %v432 = vcombine.low %v112, %v113
    %v434 = vunpack.c.l.s4 1983009808
    %v435 = vunpack.c.0.s8 %v434
    %v436 = vlaneseq
    %v437 = vshrl.u32 %v436, 7
    %v438 = vsub.s32 %v435, %v437
    %v439 = vrot.slane %v431, %v438
    %v441 = vunpack.c.l.s4 1983009808
    %v442 = vunpack.c.0.s8 %v441
    %v443 = vlaneseq
    %v444 = vshrl.u32 %v443, 7
    %v445 = vsub.s32 %v442, %v444
    %v446 = vrot.slane %v432, %v445
    %v447 = vcombine.low %v439, %v446
    %v448 = vcombine.low %v114, %v115
    %v449 = vcombine.low %v116, %v117
    %v451 = vunpack.c.l.s4 1983009808
    %v452 = vunpack.c.0.s8 %v451
    %v453 = vlaneseq
    %v454 = vshrl.u32 %v453, 7
    %v455 = vsub.s32 %v452, %v454
    %v456 = vrot.slane %v448, %v455
    %v458 = vunpack.c.l.s4 1983009808
    %v459 = vunpack.c.0.s8 %v458
    %v460 = vlaneseq
    %v461 = vshrl.u32 %v460, 7
    %v462 = vsub.s32 %v459, %v461
    %v463 = vrot.slane %v449, %v462
    %v464 = vcombine.low %v456, %v463
    %v465 = vsel %vm222, %v430, 0
    %v467 = vsel %vm222, %v447, 0
    %v469 = vsel %vm222, %v464, 0
    %v472 = vsel %vm229, %v143, 0
    %v475 = vsel %vm229, %v144, 0
    %v478 = vsel %vm229, %v145, 0
    %480 = vmatprep.subr.mxu0 %v135
    %481 = vmatpush1.msra.mxu0 %v134
    %482 = vmatprep.subr.mxu0 %v138
    %483 = vmatpush1.msra.mxu0 %v137
    %484 = vmatprep.subr.mxu0 %v141
    %485 = vmatpush1.msra.mxu0 %v140
    %486 = vmatprep.subr.mxu0 %v475
    %487 = vmatpush1.msra.mxu0 %v472
    %488 = vmatprep.subr.mxu0 0.0
    %489 = vmatpush1.msra.mxu0 0.0
    %490 = vmatprep.subr.mxu0 0.0
    %491 = vmatpush1.msra.mxu0 0.0
    %492 = vmatprep.subr.mxu0 0.0
    %493 = vmatpush1.msra.mxu0 0.0
    %494 = vmatprep.subr.mxu0 0.0
    %495 = vmatpush1.msra.mxu0 0.0
    %496 = vmatprep.subr.mxu0 0.0
    %497 = vmatpush1.msra.mxu0 0.0
    %498 = vmatprep.subr.mxu0 0.0
    %499 = vmatpush1.msra.mxu0 0.0
    %500 = vmatprep.subr.mxu0 0.0
    %501 = vmatpush1.msra.mxu0 0.0
    %502 = vmatprep.subr.mxu0 0.0
    %503 = vmatpush1.msra.mxu0 0.0
    %504 = vmatprep.subr.mxu0 0.0
    %505 = vmatpush1.msra.mxu0 0.0
    %506 = vmatprep.subr.mxu0 0.0
    %507 = vmatpush1.msra.mxu0 0.0
    %508 = vmatprep.subr.mxu0 0.0
    %509 = vmatpush1.msra.mxu0 0.0
    %510 = vmatprep.subr.mxu0 0.0
    %511 = vmatpush1.msra.mxu0 0.0
    %512 = vmatprep.subr.mxu0 0.0
    %513 = vmatpush1.msra.mxu0 0.0
    %514 = vmatprep.subr.mxu0 0.0
    %515 = vmatpush1.msra.mxu0 0.0
    %516 = vmatprep.subr.mxu0 0.0
    %517 = vmatpush1.msra.mxu0 0.0
    %518 = vmatprep.subr.mxu0 0.0
    %519 = vmatpush1.msra.mxu0 0.0
    %520 = vmatprep.subr.mxu0 0.0
    %521 = vmatpush1.msra.mxu0 0.0
    %522 = vmatprep.subr.mxu0 0.0
    %523 = vmatpush1.msra.mxu0 0.0
    %524 = vmatprep.subr.mxu0 0.0
    %525 = vmatpush1.msra.mxu0 0.0
    %526 = vmatprep.subr.mxu0 0.0
    %527 = vmatpush1.msra.mxu0 0.0
    %528 = vmatprep.subr.mxu0 0.0
    %529 = vmatpush1.msra.mxu0 0.0
    %530 = vmatprep.subr.mxu0 0.0
    %531 = vmatpush1.msra.mxu0 0.0
    %532 = vmatprep.subr.mxu0 0.0
    %533 = vmatpush1.msra.mxu0 0.0
    %534 = vmatprep.subr.mxu0 0.0
    %535 = vmatpush1.msra.mxu0 0.0
    %536 = vmatprep.subr.mxu0 0.0
    %537 = vmatpush1.msra.mxu0 0.0
    %538 = vmatprep.subr.mxu0 0.0
    %539 = vmatpush1.msra.mxu0 0.0
    %540 = vmatprep.subr.mxu0 0.0
    %541 = vmatpush1.msra.mxu0 0.0
    %542 = vmatprep.subr.mxu0 0.0
    %543 = vmatpush1.msra.mxu0 0.0
    %544 = vmatprep.mubr.f32.mxu0 0.0
    %545 = vmatmul.mubr.f32.gmra.mrb[0].mxu0 %v465
    %v546 = vpop.f32.mrb[0].mxu0
    %v547 = vadd.f32 %v306, %v546
    %v548 = vpop.f32.mrb[0].mxu0
    %v549 = vadd.f32 %v308, %v548
    %550 = vmatprep.mubr.f32.mxu0 0.0
    %551 = vmatmul.mubr.f32.gmra.mrb[0].mxu0 %v467
    %v552 = vpop.f32.mrb[0].mxu0
    %v553 = vadd.f32 %v312, %v552
    %v554 = vpop.f32.mrb[0].mxu0
    %v555 = vadd.f32 %v314, %v554
    %556 = vmatprep.mubr.f32.mxu0 0.0
    %557 = vmatmul.mubr.f32.gmra.mrb[0].mxu0 %v469
    %v558 = vpop.f32.mrb[0].mxu0
    %v559 = vadd.f32 %v318, %v558
    %v560 = vpop.f32.mrb[0].mxu0
    %v561 = vadd.f32 %v320, %v560
    %562 = vdwg.mxu0
    %563 = vmatprep.subr.mxu0 0.0
    %564 = vmatpush1.msra.mxu0 %v136
    %565 = vmatprep.subr.mxu0 0.0
    %566 = vmatpush1.msra.mxu0 %v139
    %567 = vmatprep.subr.mxu0 0.0
    %568 = vmatpush1.msra.mxu0 %v142
    %569 = vmatprep.subr.mxu0 0.0
    %570 = vmatpush1.msra.mxu0 %v478
    %571 = vmatprep.subr.mxu0 0.0
    %572 = vmatpush1.msra.mxu0 0.0
    %573 = vmatprep.subr.mxu0 0.0
    %574 = vmatpush1.msra.mxu0 0.0
    %575 = vmatprep.subr.mxu0 0.0
    %576 = vmatpush1.msra.mxu0 0.0
    %577 = vmatprep.subr.mxu0 0.0
    %578 = vmatpush1.msra.mxu0 0.0
    %579 = vmatprep.subr.mxu0 0.0
    %580 = vmatpush1.msra.mxu0 0.0
    %581 = vmatprep.subr.mxu0 0.0
    %582 = vmatpush1.msra.mxu0 0.0
    %583 = vmatprep.subr.mxu0 0.0
    %584 = vmatpush1.msra.mxu0 0.0
    %585 = vmatprep.subr.mxu0 0.0
    %586 = vmatpush1.msra.mxu0 0.0
    %587 = vmatprep.subr.mxu0 0.0
    %588 = vmatpush1.msra.mxu0 0.0
    %589 = vmatprep.subr.mxu0 0.0
    %590 = vmatpush1.msra.mxu0 0.0
    %591 = vmatprep.subr.mxu0 0.0
    %592 = vmatpush1.msra.mxu0 0.0
    %593 = vmatprep.subr.mxu0 0.0
    %594 = vmatpush1.msra.mxu0 0.0
    %595 = vmatprep.subr.mxu0 0.0
    %596 = vmatpush1.msra.mxu0 0.0
    %597 = vmatprep.subr.mxu0 0.0
    %598 = vmatpush1.msra.mxu0 0.0
    %599 = vmatprep.subr.mxu0 0.0
    %600 = vmatpush1.msra.mxu0 0.0
    %601 = vmatprep.subr.mxu0 0.0
    %602 = vmatpush1.msra.mxu0 0.0
    %603 = vmatprep.subr.mxu0 0.0
    %604 = vmatpush1.msra.mxu0 0.0
    %605 = vmatprep.subr.mxu0 0.0
    %606 = vmatpush1.msra.mxu0 0.0
    %607 = vmatprep.subr.mxu0 0.0
    %608 = vmatpush1.msra.mxu0 0.0
    %609 = vmatprep.subr.mxu0 0.0
    %610 = vmatpush1.msra.mxu0 0.0
    %611 = vmatprep.subr.mxu0 0.0
    %612 = vmatpush1.msra.mxu0 0.0
    %613 = vmatprep.subr.mxu0 0.0
    %614 = vmatpush1.msra.mxu0 0.0
    %615 = vmatprep.subr.mxu0 0.0
    %616 = vmatpush1.msra.mxu0 0.0
    %617 = vmatprep.subr.mxu0 0.0
    %618 = vmatpush1.msra.mxu0 0.0
    %619 = vmatprep.subr.mxu0 0.0
    %620 = vmatpush1.msra.mxu0 0.0
    %621 = vmatprep.subr.mxu0 0.0
    %622 = vmatpush1.msra.mxu0 0.0
    %623 = vmatprep.subr.mxu0 0.0
    %624 = vmatpush1.msra.mxu0 0.0
    %625 = vmatprep.subr.mxu0 0.0
    %626 = vmatpush1.msra.mxu0 0.0
    %627 = vmatprep.mubr.f32.mxu0 0.0
    %628 = vmatmul.mubr.f32.gmra.mrb[0].mxu0 %v465
    %v629 = vpop.f32.mrb[0].mxu0
    %v630 = vadd.f32 %v389, %v629
    %v631 = vpop.f32.mrb[0].mxu0
    %632 = vmatprep.mubr.f32.mxu0 0.0
    %633 = vmatmul.mubr.f32.gmra.mrb[0].mxu0 %v467
    %v634 = vpop.f32.mrb[0].mxu0
    %v635 = vadd.f32 %v394, %v634
    %v636 = vpop.f32.mrb[0].mxu0
    %637 = vmatprep.mubr.f32.mxu0 0.0
    %638 = vmatmul.mubr.f32.gmra.mrb[0].mxu0 %v469
    %v639 = vpop.f32.mrb[0].mxu0
    %v640 = vadd.f32 %v399, %v639
    %v641 = vpop.f32.mrb[0].mxu0
    %642 = vdwg.mxu0
    %s643 = scalar_lea.vmem [#allocation2], 192
    %v644 = vld [vmem:[%s643] sm:$0xff]
    %v645 = vld [vmem:[%s643 + $0x8] sm:$0xff]
    %v646 = vld [vmem:[%s643 + $0x10] sm:$0xff]
    %v647 = vld [vmem:[%s643 + $0x18] sm:$0xff]
    %v648 = vld [vmem:[%s643 + $0x20] sm:$0xff]
    %v649 = vld [vmem:[%s643 + $0x28] sm:$0xff]
    %v650 = vld [vmem:[%s643 + $0x30] sm:$0xff]
    %v651 = vld [vmem:[%s643 + $0x38] sm:$0xff]
    %v652 = vld [vmem:[%s643 + $0x40] sm:$0xff]
    %v653 = vld [vmem:[%s643 + $0x48] sm:$0xf]
    %v654 = vld [vmem:[%s643 + $0x50] sm:$0xf]
    %v655 = vld [vmem:[%s643 + $0x58] sm:$0xf]
    %v657 = vcombine.low %v107, %v108
    %v658 = vcombine.low %v109, %v110
    %v660 = vunpack.c.l.s4 1983009808
    %v661 = vunpack.c.0.s8 %v660
    %v662 = vlaneseq
    %v663 = vshrl.u32 %v662, 7
    %v664 = vsub.s32 %v661, %v663
    %v665 = vrot.slane %v657, %v664
    %v667 = vunpack.c.l.s4 1983009808
    %v668 = vunpack.c.0.s8 %v667
    %v669 = vlaneseq
    %v670 = vshrl.u32 %v669, 7
    %v671 = vsub.s32 %v668, %v670
    %v672 = vrot.slane %v658, %v671
    %v673 = vcombine.low %v665, %v672
    %v674 = vcombine.low %v111, %v112
    %v675 = vcombine.low %v113, %v114
    %v677 = vunpack.c.l.s4 1983009808
    %v678 = vunpack.c.0.s8 %v677
    %v679 = vlaneseq
    %v680 = vshrl.u32 %v679, 7
    %v681 = vsub.s32 %v678, %v680
    %v682 = vrot.slane %v674, %v681
    %v684 = vunpack.c.l.s4 1983009808
    %v685 = vunpack.c.0.s8 %v684
    %v686 = vlaneseq
    %v687 = vshrl.u32 %v686, 7
    %v688 = vsub.s32 %v685, %v687
    %v689 = vrot.slane %v675, %v688
    %v690 = vcombine.low %v682, %v689
    %v691 = vcombine.low %v115, %v116
    %v692 = vcombine.low %v117, %v118
    %v694 = vunpack.c.l.s4 1983009808
    %v695 = vunpack.c.0.s8 %v694
    %v696 = vlaneseq
    %v697 = vshrl.u32 %v696, 7
    %v698 = vsub.s32 %v695, %v697
    %v699 = vrot.slane %v691, %v698
    %v701 = vunpack.c.l.s4 1983009808
    %v702 = vunpack.c.0.s8 %v701
    %v703 = vlaneseq
    %v704 = vshrl.u32 %v703, 7
    %v705 = vsub.s32 %v702, %v704
    %v706 = vrot.slane %v692, %v705
    %v707 = vcombine.low %v699, %v706
    %v708 = vsel %vm222, %v673, 0
    %v710 = vsel %vm222, %v690, 0
    %v712 = vsel %vm222, %v707, 0
    %v715 = vsel %vm229, %v653, 0
    %v718 = vsel %vm229, %v654, 0
    %v721 = vsel %vm229, %v655, 0
    %723 = vmatprep.subr.mxu0 %v645
    %724 = vmatpush1.msra.mxu0 %v644
    %725 = vmatprep.subr.mxu0 %v648
    %726 = vmatpush1.msra.mxu0 %v647
    %727 = vmatprep.subr.mxu0 %v651
    %728 = vmatpush1.msra.mxu0 %v650
    %729 = vmatprep.subr.mxu0 %v718
    %730 = vmatpush1.msra.mxu0 %v715
    %731 = vmatprep.subr.mxu0 0.0
    %732 = vmatpush1.msra.mxu0 0.0
    %733 = vmatprep.subr.mxu0 0.0
    %734 = vmatpush1.msra.mxu0 0.0
    %735 = vmatprep.subr.mxu0 0.0
    %736 = vmatpush1.msra.mxu0 0.0
    %737 = vmatprep.subr.mxu0 0.0
    %738 = vmatpush1.msra.mxu0 0.0
    %739 = vmatprep.subr.mxu0 0.0
    %740 = vmatpush1.msra.mxu0 0.0
    %741 = vmatprep.subr.mxu0 0.0
    %742 = vmatpush1.msra.mxu0 0.0
    %743 = vmatprep.subr.mxu0 0.0
    %744 = vmatpush1.msra.mxu0 0.0
    %745 = vmatprep.subr.mxu0 0.0
    %746 = vmatpush1.msra.mxu0 0.0
    %747 = vmatprep.subr.mxu0 0.0
    %748 = vmatpush1.msra.mxu0 0.0
    %749 = vmatprep.subr.mxu0 0.0
    %750 = vmatpush1.msra.mxu0 0.0
    %751 = vmatprep.subr.mxu0 0.0
    %752 = vmatpush1.msra.mxu0 0.0
    %753 = vmatprep.subr.mxu0 0.0
    %754 = vmatpush1.msra.mxu0 0.0
    %755 = vmatprep.subr.mxu0 0.0
    %756 = vmatpush1.msra.mxu0 0.0
    %757 = vmatprep.subr.mxu0 0.0
    %758 = vmatpush1.msra.mxu0 0.0
    %759 = vmatprep.subr.mxu0 0.0
    %760 = vmatpush1.msra.mxu0 0.0
    %761 = vmatprep.subr.mxu0 0.0
    %762 = vmatpush1.msra.mxu0 0.0
    %763 = vmatprep.subr.mxu0 0.0
    %764 = vmatpush1.msra.mxu0 0.0
    %765 = vmatprep.subr.mxu0 0.0
    %766 = vmatpush1.msra.mxu0 0.0
    %767 = vmatprep.subr.mxu0 0.0
    %768 = vmatpush1.msra.mxu0 0.0
    %769 = vmatprep.subr.mxu0 0.0
    %770 = vmatpush1.msra.mxu0 0.0
    %771 = vmatprep.subr.mxu0 0.0
    %772 = vmatpush1.msra.mxu0 0.0
    %773 = vmatprep.subr.mxu0 0.0
    %774 = vmatpush1.msra.mxu0 0.0
    %775 = vmatprep.subr.mxu0 0.0
    %776 = vmatpush1.msra.mxu0 0.0
    %777 = vmatprep.subr.mxu0 0.0
    %778 = vmatpush1.msra.mxu0 0.0
    %779 = vmatprep.subr.mxu0 0.0
    %780 = vmatpush1.msra.mxu0 0.0
    %781 = vmatprep.subr.mxu0 0.0
    %782 = vmatpush1.msra.mxu0 0.0
    %783 = vmatprep.subr.mxu0 0.0
    %784 = vmatpush1.msra.mxu0 0.0
    %785 = vmatprep.subr.mxu0 0.0
    %786 = vmatpush1.msra.mxu0 0.0
    %787 = vmatprep.mubr.f32.mxu0 0.0
    %788 = vmatmul.mubr.f32.gmra.mrb[0].mxu0 %v708
    %v789 = vpop.f32.mrb[0].mxu0
    %v790 = vadd.f32 0.0, %v789
    %v791 = vpop.f32.mrb[0].mxu0
    %v792 = vadd.f32 0.0, %v791
    %793 = vmatprep.mubr.f32.mxu0 0.0
    %794 = vmatmul.mubr.f32.gmra.mrb[0].mxu0 %v710
    %v795 = vpop.f32.mrb[0].mxu0
    %v796 = vadd.f32 0.0, %v795
    %v797 = vpop.f32.mrb[0].mxu0
    %v798 = vadd.f32 0.0, %v797
    %799 = vmatprep.mubr.f32.mxu0 0.0
    %800 = vmatmul.mubr.f32.gmra.mrb[0].mxu0 %v712
    %v801 = vpop.f32.mrb[0].mxu0
    %v802 = vadd.f32 0.0, %v801
    %v803 = vpop.f32.mrb[0].mxu0
    %v804 = vadd.f32 0.0, %v803
    %805 = vdwg.mxu0
    %806 = vmatprep.subr.mxu0 0.0
    %807 = vmatpush1.msra.mxu0 %v646
    %808 = vmatprep.subr.mxu0 0.0
    %809 = vmatpush1.msra.mxu0 %v649
    %810 = vmatprep.subr.mxu0 0.0
    %811 = vmatpush1.msra.mxu0 %v652
    %812 = vmatprep.subr.mxu0 0.0
    %813 = vmatpush1.msra.mxu0 %v721
    %814 = vmatprep.subr.mxu0 0.0
    %815 = vmatpush1.msra.mxu0 0.0
    %816 = vmatprep.subr.mxu0 0.0
    %817 = vmatpush1.msra.mxu0 0.0
    %818 = vmatprep.subr.mxu0 0.0
    %819 = vmatpush1.msra.mxu0 0.0
    %820 = vmatprep.subr.mxu0 0.0
    %821 = vmatpush1.msra.mxu0 0.0
    %822 = vmatprep.subr.mxu0 0.0
    %823 = vmatpush1.msra.mxu0 0.0
    %824 = vmatprep.subr.mxu0 0.0
    %825 = vmatpush1.msra.mxu0 0.0
    %826 = vmatprep.subr.mxu0 0.0
    %827 = vmatpush1.msra.mxu0 0.0
    %828 = vmatprep.subr.mxu0 0.0
    %829 = vmatpush1.msra.mxu0 0.0
    %830 = vmatprep.subr.mxu0 0.0
    %831 = vmatpush1.msra.mxu0 0.0
    %832 = vmatprep.subr.mxu0 0.0
    %833 = vmatpush1.msra.mxu0 0.0
    %834 = vmatprep.subr.mxu0 0.0
    %835 = vmatpush1.msra.mxu0 0.0
    %836 = vmatprep.subr.mxu0 0.0
    %837 = vmatpush1.msra.mxu0 0.0
    %838 = vmatprep.subr.mxu0 0.0
    %839 = vmatpush1.msra.mxu0 0.0
    %840 = vmatprep.subr.mxu0 0.0
    %841 = vmatpush1.msra.mxu0 0.0
    %842 = vmatprep.subr.mxu0 0.0
    %843 = vmatpush1.msra.mxu0 0.0
    %844 = vmatprep.subr.mxu0 0.0
    %845 = vmatpush1.msra.mxu0 0.0
    %846 = vmatprep.subr.mxu0 0.0
    %847 = vmatpush1.msra.mxu0 0.0
    %848 = vmatprep.subr.mxu0 0.0
    %849 = vmatpush1.msra.mxu0 0.0
    %850 = vmatprep.subr.mxu0 0.0
    %851 = vmatpush1.msra.mxu0 0.0
    %852 = vmatprep.subr.mxu0 0.0
    %853 = vmatpush1.msra.mxu0 0.0
    %854 = vmatprep.subr.mxu0 0.0
    %855 = vmatpush1.msra.mxu0 0.0
    %856 = vmatprep.subr.mxu0 0.0
    %857 = vmatpush1.msra.mxu0 0.0
    %858 = vmatprep.subr.mxu0 0.0
    %859 = vmatpush1.msra.mxu0 0.0
    %860 = vmatprep.subr.mxu0 0.0
    %861 = vmatpush1.msra.mxu0 0.0
    %862 = vmatprep.subr.mxu0 0.0
    %863 = vmatpush1.msra.mxu0 0.0
    %864 = vmatprep.subr.mxu0 0.0
    %865 = vmatpush1.msra.mxu0 0.0
    %866 = vmatprep.subr.mxu0 0.0
    %867 = vmatpush1.msra.mxu0 0.0
    %868 = vmatprep.subr.mxu0 0.0
    %869 = vmatpush1.msra.mxu0 0.0
    %870 = vmatprep.mubr.f32.mxu0 0.0
    %871 = vmatmul.mubr.f32.gmra.mrb[0].mxu0 %v708
    %v872 = vpop.f32.mrb[0].mxu0
    %v873 = vadd.f32 0.0, %v872
    %v874 = vpop.f32.mrb[0].mxu0
    %875 = vmatprep.mubr.f32.mxu0 0.0
    %876 = vmatmul.mubr.f32.gmra.mrb[0].mxu0 %v710
    %v877 = vpop.f32.mrb[0].mxu0
    %v878 = vadd.f32 0.0, %v877
    %v879 = vpop.f32.mrb[0].mxu0
    %880 = vmatprep.mubr.f32.mxu0 0.0
    %881 = vmatmul.mubr.f32.gmra.mrb[0].mxu0 %v712
    %v882 = vpop.f32.mrb[0].mxu0
    %v883 = vadd.f32 0.0, %v882
    %v884 = vpop.f32.mrb[0].mxu0
    %885 = vdwg.mxu0
    %v886 = vadd.f32 %v547, %v790
    %v887 = vadd.f32 %v549, %v792
    %v888 = vadd.f32 %v630, %v873
    %v889 = vadd.f32 %v553, %v796
    %v890 = vadd.f32 %v555, %v798
    %v891 = vadd.f32 %v635, %v878
    %v892 = vadd.f32 %v559, %v802
    %v893 = vadd.f32 %v561, %v804
    %v894 = vadd.f32 %v640, %v883
    %s895 = scalar_lea.vmem [#allocation2], 288
    %v896 = vld [vmem:[%s895] sm:$0xff]
    %v897 = vld [vmem:[%s895 + $0x8] sm:$0xff]
    %v898 = vld [vmem:[%s895 + $0x10] sm:$0xff]
    %v899 = vld [vmem:[%s895 + $0x18] sm:$0xff]
    %v900 = vld [vmem:[%s895 + $0x20] sm:$0xff]
    %v901 = vld [vmem:[%s895 + $0x28] sm:$0xff]
    %v902 = vld [vmem:[%s895 + $0x30] sm:$0xff]
    %v903 = vld [vmem:[%s895 + $0x38] sm:$0xff]
    %v904 = vld [vmem:[%s895 + $0x40] sm:$0xff]
    %v905 = vld [vmem:[%s895 + $0x48] sm:$0xf]
    %v906 = vld [vmem:[%s895 + $0x50] sm:$0xf]
    %v907 = vld [vmem:[%s895 + $0x58] sm:$0xf]
    %v909 = vcombine.low %v121, %v122
    %v910 = vcombine.low %v123, %v124
    %v912 = vunpack.c.l.s4 1983009808
    %v913 = vunpack.c.0.s8 %v912
    %v914 = vlaneseq
    %v915 = vshrl.u32 %v914, 7
    %v916 = vsub.s32 %v913, %v915
    %v917 = vrot.slane %v909, %v916
    %v919 = vunpack.c.l.s4 1983009808
    %v920 = vunpack.c.0.s8 %v919
    %v921 = vlaneseq
    %v922 = vshrl.u32 %v921, 7
    %v923 = vsub.s32 %v920, %v922
    %v924 = vrot.slane %v910, %v923
    %v925 = vcombine.low %v917, %v924
    %v926 = vcombine.low %v125, %v126
    %v927 = vcombine.low %v127, %v128
    %v929 = vunpack.c.l.s4 1983009808
    %v930 = vunpack.c.0.s8 %v929
    %v931 = vlaneseq
    %v932 = vshrl.u32 %v931, 7
    %v933 = vsub.s32 %v930, %v932
    %v934 = vrot.slane %v926, %v933
    %v936 = vunpack.c.l.s4 1983009808
    %v937 = vunpack.c.0.s8 %v936
    %v938 = vlaneseq
    %v939 = vshrl.u32 %v938, 7
    %v940 = vsub.s32 %v937, %v939
    %v941 = vrot.slane %v927, %v940
    %v942 = vcombine.low %v934, %v941
    %v943 = vcombine.low %v129, %v130
    %v944 = vcombine.low %v131, %v132
    %v946 = vunpack.c.l.s4 1983009808
    %v947 = vunpack.c.0.s8 %v946
    %v948 = vlaneseq
    %v949 = vshrl.u32 %v948, 7
    %v950 = vsub.s32 %v947, %v949
    %v951 = vrot.slane %v943, %v950
    %v953 = vunpack.c.l.s4 1983009808
    %v954 = vunpack.c.0.s8 %v953
    %v955 = vlaneseq
    %v956 = vshrl.u32 %v955, 7
    %v957 = vsub.s32 %v954, %v956
    %v958 = vrot.slane %v944, %v957
    %v959 = vcombine.low %v951, %v958
    %v960 = vsel %vm222, %v925, 0
    %v962 = vsel %vm222, %v942, 0
    %v964 = vsel %vm222, %v959, 0
    %v967 = vsel %vm229, %v905, 0
    %v970 = vsel %vm229, %v906, 0
    %v973 = vsel %vm229, %v907, 0
    %975 = vmatprep.subr.mxu0 %v897
    %976 = vmatpush1.msra.mxu0 %v896
    %977 = vmatprep.subr.mxu0 %v900
    %978 = vmatpush1.msra.mxu0 %v899
    %979 = vmatprep.subr.mxu0 %v903
    %980 = vmatpush1.msra.mxu0 %v902
    %981 = vmatprep.subr.mxu0 %v970
    %982 = vmatpush1.msra.mxu0 %v967
    %983 = vmatprep.subr.mxu0 0.0
    %984 = vmatpush1.msra.mxu0 0.0
    %985 = vmatprep.subr.mxu0 0.0
    %986 = vmatpush1.msra.mxu0 0.0
    %987 = vmatprep.subr.mxu0 0.0
    %988 = vmatpush1.msra.mxu0 0.0
    %989 = vmatprep.subr.mxu0 0.0
    %990 = vmatpush1.msra.mxu0 0.0
    %991 = vmatprep.subr.mxu0 0.0
    %992 = vmatpush1.msra.mxu0 0.0
    %993 = vmatprep.subr.mxu0 0.0
    %994 = vmatpush1.msra.mxu0 0.0
    %995 = vmatprep.subr.mxu0 0.0
    %996 = vmatpush1.msra.mxu0 0.0
    %997 = vmatprep.subr.mxu0 0.0
    %998 = vmatpush1.msra.mxu0 0.0
    %999 = vmatprep.subr.mxu0 0.0
    %1000 = vmatpush1.msra.mxu0 0.0
    %1001 = vmatprep.subr.mxu0 0.0
    %1002 = vmatpush1.msra.mxu0 0.0
    %1003 = vmatprep.subr.mxu0 0.0
    %1004 = vmatpush1.msra.mxu0 0.0
    %1005 = vmatprep.subr.mxu0 0.0
    %1006 = vmatpush1.msra.mxu0 0.0
    %1007 = vmatprep.subr.mxu0 0.0
    %1008 = vmatpush1.msra.mxu0 0.0
    %1009 = vmatprep.subr.mxu0 0.0
    %1010 = vmatpush1.msra.mxu0 0.0
    %1011 = vmatprep.subr.mxu0 0.0
    %1012 = vmatpush1.msra.mxu0 0.0
    %1013 = vmatprep.subr.mxu0 0.0
    %1014 = vmatpush1.msra.mxu0 0.0
    %1015 = vmatprep.subr.mxu0 0.0
    %1016 = vmatpush1.msra.mxu0 0.0
    %1017 = vmatprep.subr.mxu0 0.0
    %1018 = vmatpush1.msra.mxu0 0.0
    %1019 = vmatprep.subr.mxu0 0.0
    %1020 = vmatpush1.msra.mxu0 0.0
    %1021 = vmatprep.subr.mxu0 0.0
    %1022 = vmatpush1.msra.mxu0 0.0
    %1023 = vmatprep.subr.mxu0 0.0
    %1024 = vmatpush1.msra.mxu0 0.0
    %1025 = vmatprep.subr.mxu0 0.0
    %1026 = vmatpush1.msra.mxu0 0.0
    %1027 = vmatprep.subr.mxu0 0.0
    %1028 = vmatpush1.msra.mxu0 0.0
    %1029 = vmatprep.subr.mxu0 0.0
    %1030 = vmatpush1.msra.mxu0 0.0
    %1031 = vmatprep.subr.mxu0 0.0
    %1032 = vmatpush1.msra.mxu0 0.0
    %1033 = vmatprep.subr.mxu0 0.0
    %1034 = vmatpush1.msra.mxu0 0.0
    %1035 = vmatprep.subr.mxu0 0.0
    %1036 = vmatpush1.msra.mxu0 0.0
    %1037 = vmatprep.subr.mxu0 0.0
    %1038 = vmatpush1.msra.mxu0 0.0
    %1039 = vmatprep.mubr.f32.mxu0 0.0
    %1040 = vmatmul.mubr.f32.gmra.mrb[0].mxu0 %v960
    %v1041 = vpop.f32.mrb[0].mxu0
    %v1042 = vadd.f32 0.0, %v1041
    %v1043 = vpop.f32.mrb[0].mxu0
    %v1044 = vadd.f32 0.0, %v1043
    %1045 = vmatprep.mubr.f32.mxu0 0.0
    %1046 = vmatmul.mubr.f32.gmra.mrb[0].mxu0 %v962
    %v1047 = vpop.f32.mrb[0].mxu0
    %v1048 = vadd.f32 0.0, %v1047
    %v1049 = vpop.f32.mrb[0].mxu0
    %v1050 = vadd.f32 0.0, %v1049
    %1051 = vmatprep.mubr.f32.mxu0 0.0
    %1052 = vmatmul.mubr.f32.gmra.mrb[0].mxu0 %v964
    %v1053 = vpop.f32.mrb[0].mxu0
    %v1054 = vadd.f32 0.0, %v1053
    %v1055 = vpop.f32.mrb[0].mxu0
    %v1056 = vadd.f32 0.0, %v1055
    %1057 = vdwg.mxu0
    %1058 = vmatprep.subr.mxu0 0.0
    %1059 = vmatpush1.msra.mxu0 %v898
    %1060 = vmatprep.subr.mxu0 0.0
    %1061 = vmatpush1.msra.mxu0 %v901
    %1062 = vmatprep.subr.mxu0 0.0
    %1063 = vmatpush1.msra.mxu0 %v904
    %1064 = vmatprep.subr.mxu0 0.0
    %1065 = vmatpush1.msra.mxu0 %v973
    %1066 = vmatprep.subr.mxu0 0.0
    %1067 = vmatpush1.msra.mxu0 0.0
    %1068 = vmatprep.subr.mxu0 0.0
    %1069 = vmatpush1.msra.mxu0 0.0
    %1070 = vmatprep.subr.mxu0 0.0
    %1071 = vmatpush1.msra.mxu0 0.0
    %1072 = vmatprep.subr.mxu0 0.0
    %1073 = vmatpush1.msra.mxu0 0.0
    %1074 = vmatprep.subr.mxu0 0.0
    %1075 = vmatpush1.msra.mxu0 0.0
    %1076 = vmatprep.subr.mxu0 0.0
    %1077 = vmatpush1.msra.mxu0 0.0
    %1078 = vmatprep.subr.mxu0 0.0
    %1079 = vmatpush1.msra.mxu0 0.0
    %1080 = vmatprep.subr.mxu0 0.0
    %1081 = vmatpush1.msra.mxu0 0.0
    %1082 = vmatprep.subr.mxu0 0.0
    %1083 = vmatpush1.msra.mxu0 0.0
    %1084 = vmatprep.subr.mxu0 0.0
    %1085 = vmatpush1.msra.mxu0 0.0
    %1086 = vmatprep.subr.mxu0 0.0
    %1087 = vmatpush1.msra.mxu0 0.0
    %1088 = vmatprep.subr.mxu0 0.0
    %1089 = vmatpush1.msra.mxu0 0.0
    %1090 = vmatprep.subr.mxu0 0.0
    %1091 = vmatpush1.msra.mxu0 0.0
    %1092 = vmatprep.subr.mxu0 0.0
    %1093 = vmatpush1.msra.mxu0 0.0
    %1094 = vmatprep.subr.mxu0 0.0
    %1095 = vmatpush1.msra.mxu0 0.0
    %1096 = vmatprep.subr.mxu0 0.0
    %1097 = vmatpush1.msra.mxu0 0.0
    %1098 = vmatprep.subr.mxu0 0.0
    %1099 = vmatpush1.msra.mxu0 0.0
    %1100 = vmatprep.subr.mxu0 0.0
    %1101 = vmatpush1.msra.mxu0 0.0
    %1102 = vmatprep.subr.mxu0 0.0
    %1103 = vmatpush1.msra.mxu0 0.0
    %1104 = vmatprep.subr.mxu0 0.0
    %1105 = vmatpush1.msra.mxu0 0.0
    %1106 = vmatprep.subr.mxu0 0.0
    %1107 = vmatpush1.msra.mxu0 0.0
    %1108 = vmatprep.subr.mxu0 0.0
    %1109 = vmatpush1.msra.mxu0 0.0
    %1110 = vmatprep.subr.mxu0 0.0
    %1111 = vmatpush1.msra.mxu0 0.0
    %1112 = vmatprep.subr.mxu0 0.0
    %1113 = vmatpush1.msra.mxu0 0.0
    %1114 = vmatprep.subr.mxu0 0.0
    %1115 = vmatpush1.msra.mxu0 0.0
    %1116 = vmatprep.subr.mxu0 0.0
    %1117 = vmatpush1.msra.mxu0 0.0
    %1118 = vmatprep.subr.mxu0 0.0
    %1119 = vmatpush1.msra.mxu0 0.0
    %1120 = vmatprep.subr.mxu0 0.0
    %1121 = vmatpush1.msra.mxu0 0.0
    %1122 = vmatprep.mubr.f32.mxu0 0.0
    %1123 = vmatmul.mubr.f32.gmra.mrb[0].mxu0 %v960
    %v1124 = vpop.f32.mrb[0].mxu0
    %v1125 = vadd.f32 0.0, %v1124
    %v1126 = vpop.f32.mrb[0].mxu0
    %1127 = vmatprep.mubr.f32.mxu0 0.0
    %1128 = vmatmul.mubr.f32.gmra.mrb[0].mxu0 %v962
    %v1129 = vpop.f32.mrb[0].mxu0
    %v1130 = vadd.f32 0.0, %v1129
    %v1131 = vpop.f32.mrb[0].mxu0
    %1132 = vmatprep.mubr.f32.mxu0 0.0
    %1133 = vmatmul.mubr.f32.gmra.mrb[0].mxu0 %v964
    %v1134 = vpop.f32.mrb[0].mxu0
    %v1135 = vadd.f32 0.0, %v1134
    %v1136 = vpop.f32.mrb[0].mxu0
    %1137 = vdwg.mxu0
    %v1138 = vadd.f32 %v886, %v1042
    %v1139 = vadd.f32 %v887, %v1044
    %v1140 = vadd.f32 %v888, %v1125
    %v1141 = vadd.f32 %v889, %v1048
    %v1142 = vadd.f32 %v890, %v1050
    %v1143 = vadd.f32 %v891, %v1130
    %v1144 = vadd.f32 %v892, %v1054
    %v1145 = vadd.f32 %v893, %v1056
    %v1146 = vadd.f32 %v894, %v1135
    %s1147 = scalar_lea.vmem [#allocation2], 384
    %v1148 = vld [vmem:[%s1147] sm:$0xff]
    %v1149 = vld [vmem:[%s1147 + $0x8] sm:$0xff]
    %v1150 = vld [vmem:[%s1147 + $0x10] sm:$0xff]
    %v1151 = vld [vmem:[%s1147 + $0x18] sm:$0xff]
    %v1152 = vld [vmem:[%s1147 + $0x20] sm:$0xff]
    %v1153 = vld [vmem:[%s1147 + $0x28] sm:$0xff]
    %v1154 = vld [vmem:[%s1147 + $0x30] sm:$0xff]
    %v1155 = vld [vmem:[%s1147 + $0x38] sm:$0xff]
    %v1156 = vld [vmem:[%s1147 + $0x40] sm:$0xff]
    %v1157 = vld [vmem:[%s1147 + $0x48] sm:$0xf]
    %v1158 = vld [vmem:[%s1147 + $0x50] sm:$0xf]
    %v1159 = vld [vmem:[%s1147 + $0x58] sm:$0xf]
    %v1161 = vcombine.low %v429, %v439
    %v1162 = vcombine.low %v446, %v456
    %v1163 = vcombine.low %v118, %v119
    %v1165 = vunpack.c.l.s4 1983009808
    %v1166 = vunpack.c.0.s8 %v1165
    %v1167 = vlaneseq
    %v1168 = vshrl.u32 %v1167, 7
    %v1169 = vsub.s32 %v1166, %v1168
    %v1170 = vrot.slane %v1163, %v1169
    %v1171 = vcombine.low %v463, %v1170
    %v1172 = vsel %vm222, %v1161, 0
    %v1174 = vsel %vm222, %v1162, 0
    %v1176 = vsel %vm222, %v1171, 0
    %v1179 = vsel %vm229, %v1157, 0
    %v1182 = vsel %vm229, %v1158, 0
    %v1185 = vsel %vm229, %v1159, 0
    %1187 = vmatprep.subr.mxu0 %v1149
    %1188 = vmatpush1.msra.mxu0 %v1148
    %1189 = vmatprep.subr.mxu0 %v1152
    %1190 = vmatpush1.msra.mxu0 %v1151
    %1191 = vmatprep.subr.mxu0 %v1155
    %1192 = vmatpush1.msra.mxu0 %v1154
    %1193 = vmatprep.subr.mxu0 %v1182
    %1194 = vmatpush1.msra.mxu0 %v1179
    %1195 = vmatprep.subr.mxu0 0.0
    %1196 = vmatpush1.msra.mxu0 0.0
    %1197 = vmatprep.subr.mxu0 0.0
    %1198 = vmatpush1.msra.mxu0 0.0
    %1199 = vmatprep.subr.mxu0 0.0
    %1200 = vmatpush1.msra.mxu0 0.0
    %1201 = vmatprep.subr.mxu0 0.0
    %1202 = vmatpush1.msra.mxu0 0.0
    %1203 = vmatprep.subr.mxu0 0.0
    %1204 = vmatpush1.msra.mxu0 0.0
    %1205 = vmatprep.subr.mxu0 0.0
    %1206 = vmatpush1.msra.mxu0 0.0
    %1207 = vmatprep.subr.mxu0 0.0
    %1208 = vmatpush1.msra.mxu0 0.0
    %1209 = vmatprep.subr.mxu0 0.0
    %1210 = vmatpush1.msra.mxu0 0.0
    %1211 = vmatprep.subr.mxu0 0.0
    %1212 = vmatpush1.msra.mxu0 0.0
    %1213 = vmatprep.subr.mxu0 0.0
    %1214 = vmatpush1.msra.mxu0 0.0
    %1215 = vmatprep.subr.mxu0 0.0
    %1216 = vmatpush1.msra.mxu0 0.0
    %1217 = vmatprep.subr.mxu0 0.0
    %1218 = vmatpush1.msra.mxu0 0.0
    %1219 = vmatprep.subr.mxu0 0.0
    %1220 = vmatpush1.msra.mxu0 0.0
    %1221 = vmatprep.subr.mxu0 0.0
    %1222 = vmatpush1.msra.mxu0 0.0
    %1223 = vmatprep.subr.mxu0 0.0
    %1224 = vmatpush1.msra.mxu0 0.0
    %1225 = vmatprep.subr.mxu0 0.0
    %1226 = vmatpush1.msra.mxu0 0.0
    %1227 = vmatprep.subr.mxu0 0.0
    %1228 = vmatpush1.msra.mxu0 0.0
    %1229 = vmatprep.subr.mxu0 0.0
    %1230 = vmatpush1.msra.mxu0 0.0
    %1231 = vmatprep.subr.mxu0 0.0
    %1232 = vmatpush1.msra.mxu0 0.0
    %1233 = vmatprep.subr.mxu0 0.0
    %1234 = vmatpush1.msra.mxu0 0.0
    %1235 = vmatprep.subr.mxu0 0.0
    %1236 = vmatpush1.msra.mxu0 0.0
    %1237 = vmatprep.subr.mxu0 0.0
    %1238 = vmatpush1.msra.mxu0 0.0
    %1239 = vmatprep.subr.mxu0 0.0
    %1240 = vmatpush1.msra.mxu0 0.0
    %1241 = vmatprep.subr.mxu0 0.0
    %1242 = vmatpush1.msra.mxu0 0.0
    %1243 = vmatprep.subr.mxu0 0.0
    %1244 = vmatpush1.msra.mxu0 0.0
    %1245 = vmatprep.subr.mxu0 0.0
    %1246 = vmatpush1.msra.mxu0 0.0
    %1247 = vmatprep.subr.mxu0 0.0
    %1248 = vmatpush1.msra.mxu0 0.0
    %1249 = vmatprep.subr.mxu0 0.0
    %1250 = vmatpush1.msra.mxu0 0.0
    %1251 = vmatprep.mubr.f32.mxu0 0.0
    %1252 = vmatmul.mubr.f32.gmra.mrb[0].mxu0 %v1172
    %v1253 = vpop.f32.mrb[0].mxu0
    %v1254 = vadd.f32 0.0, %v1253
    %v1255 = vpop.f32.mrb[0].mxu0
    %v1256 = vadd.f32 0.0, %v1255
    %1257 = vmatprep.mubr.f32.mxu0 0.0
    %1258 = vmatmul.mubr.f32.gmra.mrb[0].mxu0 %v1174
    %v1259 = vpop.f32.mrb[0].mxu0
    %v1260 = vadd.f32 0.0, %v1259
    %v1261 = vpop.f32.mrb[0].mxu0
    %v1262 = vadd.f32 0.0, %v1261
    %1263 = vmatprep.mubr.f32.mxu0 0.0
    %1264 = vmatmul.mubr.f32.gmra.mrb[0].mxu0 %v1176
    %v1265 = vpop.f32.mrb[0].mxu0
    %v1266 = vadd.f32 0.0, %v1265
    %v1267 = vpop.f32.mrb[0].mxu0
    %v1268 = vadd.f32 0.0, %v1267
    %1269 = vdwg.mxu0
    %1270 = vmatprep.subr.mxu0 0.0
    %1271 = vmatpush1.msra.mxu0 %v1150
    %1272 = vmatprep.subr.mxu0 0.0
    %1273 = vmatpush1.msra.mxu0 %v1153
    %1274 = vmatprep.subr.mxu0 0.0
    %1275 = vmatpush1.msra.mxu0 %v1156
    %1276 = vmatprep.subr.mxu0 0.0
    %1277 = vmatpush1.msra.mxu0 %v1185
    %1278 = vmatprep.subr.mxu0 0.0
    %1279 = vmatpush1.msra.mxu0 0.0
    %1280 = vmatprep.subr.mxu0 0.0
    %1281 = vmatpush1.msra.mxu0 0.0
    %1282 = vmatprep.subr.mxu0 0.0
    %1283 = vmatpush1.msra.mxu0 0.0
    %1284 = vmatprep.subr.mxu0 0.0
    %1285 = vmatpush1.msra.mxu0 0.0
    %1286 = vmatprep.subr.mxu0 0.0
    %1287 = vmatpush1.msra.mxu0 0.0
    %1288 = vmatprep.subr.mxu0 0.0
    %1289 = vmatpush1.msra.mxu0 0.0
    %1290 = vmatprep.subr.mxu0 0.0
    %1291 = vmatpush1.msra.mxu0 0.0
    %1292 = vmatprep.subr.mxu0 0.0
    %1293 = vmatpush1.msra.mxu0 0.0
    %1294 = vmatprep.subr.mxu0 0.0
    %1295 = vmatpush1.msra.mxu0 0.0
    %1296 = vmatprep.subr.mxu0 0.0
    %1297 = vmatpush1.msra.mxu0 0.0
    %1298 = vmatprep.subr.mxu0 0.0
    %1299 = vmatpush1.msra.mxu0 0.0
    %1300 = vmatprep.subr.mxu0 0.0
    %1301 = vmatpush1.msra.mxu0 0.0
    %1302 = vmatprep.subr.mxu0 0.0
    %1303 = vmatpush1.msra.mxu0 0.0
    %1304 = vmatprep.subr.mxu0 0.0
    %1305 = vmatpush1.msra.mxu0 0.0
    %1306 = vmatprep.subr.mxu0 0.0
    %1307 = vmatpush1.msra.mxu0 0.0
    %1308 = vmatprep.subr.mxu0 0.0
    %1309 = vmatpush1.msra.mxu0 0.0
    %1310 = vmatprep.subr.mxu0 0.0
    %1311 = vmatpush1.msra.mxu0 0.0
    %1312 = vmatprep.subr.mxu0 0.0
    %1313 = vmatpush1.msra.mxu0 0.0
    %1314 = vmatprep.subr.mxu0 0.0
    %1315 = vmatpush1.msra.mxu0 0.0
    %1316 = vmatprep.subr.mxu0 0.0
    %1317 = vmatpush1.msra.mxu0 0.0
    %1318 = vmatprep.subr.mxu0 0.0
    %1319 = vmatpush1.msra.mxu0 0.0
    %1320 = vmatprep.subr.mxu0 0.0
    %1321 = vmatpush1.msra.mxu0 0.0
    %1322 = vmatprep.subr.mxu0 0.0
    %1323 = vmatpush1.msra.mxu0 0.0
    %1324 = vmatprep.subr.mxu0 0.0
    %1325 = vmatpush1.msra.mxu0 0.0
    %1326 = vmatprep.subr.mxu0 0.0
    %1327 = vmatpush1.msra.mxu0 0.0
    %1328 = vmatprep.subr.mxu0 0.0
    %1329 = vmatpush1.msra.mxu0 0.0
    %1330 = vmatprep.subr.mxu0 0.0
    %1331 = vmatpush1.msra.mxu0 0.0
    %1332 = vmatprep.subr.mxu0 0.0
    %1333 = vmatpush1.msra.mxu0 0.0
    %1334 = vmatprep.mubr.f32.mxu0 0.0
    %1335 = vmatmul.mubr.f32.gmra.mrb[0].mxu0 %v1172
    %v1336 = vpop.f32.mrb[0].mxu0
    %v1337 = vadd.f32 0.0, %v1336
    %v1338 = vpop.f32.mrb[0].mxu0
    %1339 = vmatprep.mubr.f32.mxu0 0.0
    %1340 = vmatmul.mubr.f32.gmra.mrb[0].mxu0 %v1174
    %v1341 = vpop.f32.mrb[0].mxu0
    %v1342 = vadd.f32 0.0, %v1341
    %v1343 = vpop.f32.mrb[0].mxu0
    %1344 = vmatprep.mubr.f32.mxu0 0.0
    %1345 = vmatmul.mubr.f32.gmra.mrb[0].mxu0 %v1176
    %v1346 = vpop.f32.mrb[0].mxu0
    %v1347 = vadd.f32 0.0, %v1346
    %v1348 = vpop.f32.mrb[0].mxu0
    %1349 = vdwg.mxu0
    %v1350 = vadd.f32 %v1138, %v1254
    %v1351 = vadd.f32 %v1139, %v1256
    %v1352 = vadd.f32 %v1140, %v1337
    %v1353 = vadd.f32 %v1141, %v1260
    %v1354 = vadd.f32 %v1142, %v1262
    %v1355 = vadd.f32 %v1143, %v1342
    %v1356 = vadd.f32 %v1144, %v1266
    %v1357 = vadd.f32 %v1145, %v1268
    %v1358 = vadd.f32 %v1146, %v1347
    %1359 = vmatprep.subr.mxu0 %v148
    %1360 = vmatpush1.msra.mxu0 %v147
    %1361 = vmatprep.subr.mxu0 %v151
    %1362 = vmatpush1.msra.mxu0 %v150
    %1363 = vmatprep.subr.mxu0 %v154
    %1364 = vmatpush1.msra.mxu0 %v153
    %1365 = vmatprep.subr.mxu0 %v234
    %1366 = vmatpush1.msra.mxu0 %v231
    %1367 = vmatprep.subr.mxu0 0.0
    %1368 = vmatpush1.msra.mxu0 0.0
    %1369 = vmatprep.subr.mxu0 0.0
    %1370 = vmatpush1.msra.mxu0 0.0
    %1371 = vmatprep.subr.mxu0 0.0
    %1372 = vmatpush1.msra.mxu0 0.0
    %1373 = vmatprep.subr.mxu0 0.0
    %1374 = vmatpush1.msra.mxu0 0.0
    %1375 = vmatprep.subr.mxu0 0.0
    %1376 = vmatpush1.msra.mxu0 0.0
    %1377 = vmatprep.subr.mxu0 0.0
    %1378 = vmatpush1.msra.mxu0 0.0
    %1379 = vmatprep.subr.mxu0 0.0
    %1380 = vmatpush1.msra.mxu0 0.0
    %1381 = vmatprep.subr.mxu0 0.0
    %1382 = vmatpush1.msra.mxu0 0.0
    %1383 = vmatprep.subr.mxu0 0.0
    %1384 = vmatpush1.msra.mxu0 0.0
    %1385 = vmatprep.subr.mxu0 0.0
    %1386 = vmatpush1.msra.mxu0 0.0
    %1387 = vmatprep.subr.mxu0 0.0
    %1388 = vmatpush1.msra.mxu0 0.0
    %1389 = vmatprep.subr.mxu0 0.0
    %1390 = vmatpush1.msra.mxu0 0.0
    %1391 = vmatprep.subr.mxu0 0.0
    %1392 = vmatpush1.msra.mxu0 0.0
    %1393 = vmatprep.subr.mxu0 0.0
    %1394 = vmatpush1.msra.mxu0 0.0
    %1395 = vmatprep.subr.mxu0 0.0
    %1396 = vmatpush1.msra.mxu0 0.0
    %1397 = vmatprep.subr.mxu0 0.0
    %1398 = vmatpush1.msra.mxu0 0.0
    %1399 = vmatprep.subr.mxu0 0.0
    %1400 = vmatpush1.msra.mxu0 0.0
    %1401 = vmatprep.subr.mxu0 0.0
    %1402 = vmatpush1.msra.mxu0 0.0
    %1403 = vmatprep.subr.mxu0 0.0
    %1404 = vmatpush1.msra.mxu0 0.0
    %1405 = vmatprep.subr.mxu0 0.0
    %1406 = vmatpush1.msra.mxu0 0.0
    %1407 = vmatprep.subr.mxu0 0.0
    %1408 = vmatpush1.msra.mxu0 0.0
    %1409 = vmatprep.subr.mxu0 0.0
    %1410 = vmatpush1.msra.mxu0 0.0
    %1411 = vmatprep.subr.mxu0 0.0
    %1412 = vmatpush1.msra.mxu0 0.0
    %1413 = vmatprep.subr.mxu0 0.0
    %1414 = vmatpush1.msra.mxu0 0.0
    %1415 = vmatprep.subr.mxu0 0.0
    %1416 = vmatpush1.msra.mxu0 0.0
    %1417 = vmatprep.subr.mxu0 0.0
    %1418 = vmatpush1.msra.mxu0 0.0
    %1419 = vmatprep.subr.mxu0 0.0
    %1420 = vmatpush1.msra.mxu0 0.0
    %1421 = vmatprep.subr.mxu0 0.0
    %1422 = vmatpush1.msra.mxu0 0.0
    %1423 = vmatprep.mubr.f32.mxu0 0.0
    %1424 = vmatmul.mubr.f32.gmra.mrb[0].mxu0 %v708
    %v1425 = vpop.f32.mrb[0].mxu0
    %v1426 = vadd.f32 0.0, %v1425
    %v1427 = vpop.f32.mrb[0].mxu0
    %v1428 = vadd.f32 0.0, %v1427
    %1429 = vmatprep.mubr.f32.mxu0 0.0
    %1430 = vmatmul.mubr.f32.gmra.mrb[0].mxu0 %v710
    %v1431 = vpop.f32.mrb[0].mxu0
    %v1432 = vadd.f32 0.0, %v1431
    %v1433 = vpop.f32.mrb[0].mxu0
    %v1434 = vadd.f32 0.0, %v1433
    %1435 = vmatprep.mubr.f32.mxu0 0.0
    %1436 = vmatmul.mubr.f32.gmra.mrb[0].mxu0 %v712
    %v1437 = vpop.f32.mrb[0].mxu0
    %v1438 = vadd.f32 0.0, %v1437
    %v1439 = vpop.f32.mrb[0].mxu0
    %v1440 = vadd.f32 0.0, %v1439
    %1441 = vdwg.mxu0
    %1442 = vmatprep.subr.mxu0 0.0
    %1443 = vmatpush1.msra.mxu0 %v149
    %1444 = vmatprep.subr.mxu0 0.0
    %1445 = vmatpush1.msra.mxu0 %v152
    %1446 = vmatprep.subr.mxu0 0.0
    %1447 = vmatpush1.msra.mxu0 %v155
    %1448 = vmatprep.subr.mxu0 0.0
    %1449 = vmatpush1.msra.mxu0 %v237
    %1450 = vmatprep.subr.mxu0 0.0
    %1451 = vmatpush1.msra.mxu0 0.0
    %1452 = vmatprep.subr.mxu0 0.0
    %1453 = vmatpush1.msra.mxu0 0.0
    %1454 = vmatprep.subr.mxu0 0.0
    %1455 = vmatpush1.msra.mxu0 0.0
    %1456 = vmatprep.subr.mxu0 0.0
    %1457 = vmatpush1.msra.mxu0 0.0
    %1458 = vmatprep.subr.mxu0 0.0
    %1459 = vmatpush1.msra.mxu0 0.0
    %1460 = vmatprep.subr.mxu0 0.0
    %1461 = vmatpush1.msra.mxu0 0.0
    %1462 = vmatprep.subr.mxu0 0.0
    %1463 = vmatpush1.msra.mxu0 0.0
    %1464 = vmatprep.subr.mxu0 0.0
    %1465 = vmatpush1.msra.mxu0 0.0
    %1466 = vmatprep.subr.mxu0 0.0
    %1467 = vmatpush1.msra.mxu0 0.0
    %1468 = vmatprep.subr.mxu0 0.0
    %1469 = vmatpush1.msra.mxu0 0.0
    %1470 = vmatprep.subr.mxu0 0.0
    %1471 = vmatpush1.msra.mxu0 0.0
    %1472 = vmatprep.subr.mxu0 0.0
    %1473 = vmatpush1.msra.mxu0 0.0
    %1474 = vmatprep.subr.mxu0 0.0
    %1475 = vmatpush1.msra.mxu0 0.0
    %1476 = vmatprep.subr.mxu0 0.0
    %1477 = vmatpush1.msra.mxu0 0.0
    %1478 = vmatprep.subr.mxu0 0.0
    %1479 = vmatpush1.msra.mxu0 0.0
    %1480 = vmatprep.subr.mxu0 0.0
    %1481 = vmatpush1.msra.mxu0 0.0
    %1482 = vmatprep.subr.mxu0 0.0
    %1483 = vmatpush1.msra.mxu0 0.0
    %1484 = vmatprep.subr.mxu0 0.0
    %1485 = vmatpush1.msra.mxu0 0.0
    %1486 = vmatprep.subr.mxu0 0.0
    %1487 = vmatpush1.msra.mxu0 0.0
    %1488 = vmatprep.subr.mxu0 0.0
    %1489 = vmatpush1.msra.mxu0 0.0
    %1490 = vmatprep.subr.mxu0 0.0
    %1491 = vmatpush1.msra.mxu0 0.0
    %1492 = vmatprep.subr.mxu0 0.0
    %1493 = vmatpush1.msra.mxu0 0.0
    %1494 = vmatprep.subr.mxu0 0.0
    %1495 = vmatpush1.msra.mxu0 0.0
    %1496 = vmatprep.subr.mxu0 0.0
    %1497 = vmatpush1.msra.mxu0 0.0
    %1498 = vmatprep.subr.mxu0 0.0
    %1499 = vmatpush1.msra.mxu0 0.0
    %1500 = vmatprep.subr.mxu0 0.0
    %1501 = vmatpush1.msra.mxu0 0.0
    %1502 = vmatprep.subr.mxu0 0.0
    %1503 = vmatpush1.msra.mxu0 0.0
    %1504 = vmatprep.subr.mxu0 0.0
    %1505 = vmatpush1.msra.mxu0 0.0
    %1506 = vmatprep.mubr.f32.mxu0 0.0
    %1507 = vmatmul.mubr.f32.gmra.mrb[0].mxu0 %v708
    %v1508 = vpop.f32.mrb[0].mxu0
    %v1509 = vadd.f32 0.0, %v1508
    %v1510 = vpop.f32.mrb[0].mxu0
    %1511 = vmatprep.mubr.f32.mxu0 0.0
    %1512 = vmatmul.mubr.f32.gmra.mrb[0].mxu0 %v710
    %v1513 = vpop.f32.mrb[0].mxu0
    %v1514 = vadd.f32 0.0, %v1513
    %v1515 = vpop.f32.mrb[0].mxu0
    %1516 = vmatprep.mubr.f32.mxu0 0.0
    %1517 = vmatmul.mubr.f32.gmra.mrb[0].mxu0 %v712
    %v1518 = vpop.f32.mrb[0].mxu0
    %v1519 = vadd.f32 0.0, %v1518
    %v1520 = vpop.f32.mrb[0].mxu0
    %1521 = vdwg.mxu0
    %1522 = vmatprep.subr.mxu0 %v135
    %1523 = vmatpush1.msra.mxu0 %v134
    %1524 = vmatprep.subr.mxu0 %v138
    %1525 = vmatpush1.msra.mxu0 %v137
    %1526 = vmatprep.subr.mxu0 %v141
    %1527 = vmatpush1.msra.mxu0 %v140
    %1528 = vmatprep.subr.mxu0 %v475
    %1529 = vmatpush1.msra.mxu0 %v472
    %1530 = vmatprep.subr.mxu0 0.0
    %1531 = vmatpush1.msra.mxu0 0.0
    %1532 = vmatprep.subr.mxu0 0.0
    %1533 = vmatpush1.msra.mxu0 0.0
    %1534 = vmatprep.subr.mxu0 0.0
    %1535 = vmatpush1.msra.mxu0 0.0
    %1536 = vmatprep.subr.mxu0 0.0
    %1537 = vmatpush1.msra.mxu0 0.0
    %1538 = vmatprep.subr.mxu0 0.0
    %1539 = vmatpush1.msra.mxu0 0.0
    %1540 = vmatprep.subr.mxu0 0.0
    %1541 = vmatpush1.msra.mxu0 0.0
    %1542 = vmatprep.subr.mxu0 0.0
    %1543 = vmatpush1.msra.mxu0 0.0
    %1544 = vmatprep.subr.mxu0 0.0
    %1545 = vmatpush1.msra.mxu0 0.0
    %1546 = vmatprep.subr.mxu0 0.0
    %1547 = vmatpush1.msra.mxu0 0.0
    %1548 = vmatprep.subr.mxu0 0.0
    %1549 = vmatpush1.msra.mxu0 0.0
    %1550 = vmatprep.subr.mxu0 0.0
    %1551 = vmatpush1.msra.mxu0 0.0
    %1552 = vmatprep.subr.mxu0 0.0
    %1553 = vmatpush1.msra.mxu0 0.0
    %1554 = vmatprep.subr.mxu0 0.0
    %1555 = vmatpush1.msra.mxu0 0.0
    %1556 = vmatprep.subr.mxu0 0.0
    %1557 = vmatpush1.msra.mxu0 0.0
    %1558 = vmatprep.subr.mxu0 0.0
    %1559 = vmatpush1.msra.mxu0 0.0
    %1560 = vmatprep.subr.mxu0 0.0
    %1561 = vmatpush1.msra.mxu0 0.0
    %1562 = vmatprep.subr.mxu0 0.0
    %1563 = vmatpush1.msra.mxu0 0.0
    %1564 = vmatprep.subr.mxu0 0.0
    %1565 = vmatpush1.msra.mxu0 0.0
    %1566 = vmatprep.subr.mxu0 0.0
    %1567 = vmatpush1.msra.mxu0 0.0
    %1568 = vmatprep.subr.mxu0 0.0
    %1569 = vmatpush1.msra.mxu0 0.0
    %1570 = vmatprep.subr.mxu0 0.0
    %1571 = vmatpush1.msra.mxu0 0.0
    %1572 = vmatprep.subr.mxu0 0.0
    %1573 = vmatpush1.msra.mxu0 0.0
    %1574 = vmatprep.subr.mxu0 0.0
    %1575 = vmatpush1.msra.mxu0 0.0
    %1576 = vmatprep.subr.mxu0 0.0
    %1577 = vmatpush1.msra.mxu0 0.0
    %1578 = vmatprep.subr.mxu0 0.0
    %1579 = vmatpush1.msra.mxu0 0.0
    %1580 = vmatprep.subr.mxu0 0.0
    %1581 = vmatpush1.msra.mxu0 0.0
    %1582 = vmatprep.subr.mxu0 0.0
    %1583 = vmatpush1.msra.mxu0 0.0
    %1584 = vmatprep.subr.mxu0 0.0
    %1585 = vmatpush1.msra.mxu0 0.0
    %1586 = vmatprep.mubr.f32.mxu0 0.0
    %1587 = vmatmul.mubr.f32.gmra.mrb[0].mxu0 %v223
    %v1588 = vpop.f32.mrb[0].mxu0
    %v1589 = vadd.f32 %v1426, %v1588
    %v1590 = vpop.f32.mrb[0].mxu0
    %v1591 = vadd.f32 %v1428, %v1590
    %1592 = vmatprep.mubr.f32.mxu0 0.0
    %1593 = vmatmul.mubr.f32.gmra.mrb[0].mxu0 %v225
    %v1594 = vpop.f32.mrb[0].mxu0
    %v1595 = vadd.f32 %v1432, %v1594
    %v1596 = vpop.f32.mrb[0].mxu0
    %v1597 = vadd.f32 %v1434, %v1596
    %1598 = vmatprep.mubr.f32.mxu0 0.0
    %1599 = vmatmul.mubr.f32.gmra.mrb[0].mxu0 %v227
    %v1600 = vpop.f32.mrb[0].mxu0
    %v1601 = vadd.f32 %v1438, %v1600
    %v1602 = vpop.f32.mrb[0].mxu0
    %v1603 = vadd.f32 %v1440, %v1602
    %1604 = vdwg.mxu0
    %1605 = vmatprep.subr.mxu0 0.0
    %1606 = vmatpush1.msra.mxu0 %v136
    %1607 = vmatprep.subr.mxu0 0.0
    %1608 = vmatpush1.msra.mxu0 %v139
    %1609 = vmatprep.subr.mxu0 0.0
    %1610 = vmatpush1.msra.mxu0 %v142
    %1611 = vmatprep.subr.mxu0 0.0
    %1612 = vmatpush1.msra.mxu0 %v478
    %1613 = vmatprep.subr.mxu0 0.0
    %1614 = vmatpush1.msra.mxu0 0.0
    %1615 = vmatprep.subr.mxu0 0.0
    %1616 = vmatpush1.msra.mxu0 0.0
    %1617 = vmatprep.subr.mxu0 0.0
    %1618 = vmatpush1.msra.mxu0 0.0
    %1619 = vmatprep.subr.mxu0 0.0
    %1620 = vmatpush1.msra.mxu0 0.0
    %1621 = vmatprep.subr.mxu0 0.0
    %1622 = vmatpush1.msra.mxu0 0.0
    %1623 = vmatprep.subr.mxu0 0.0
    %1624 = vmatpush1.msra.mxu0 0.0
    %1625 = vmatprep.subr.mxu0 0.0
    %1626 = vmatpush1.msra.mxu0 0.0
    %1627 = vmatprep.subr.mxu0 0.0
    %1628 = vmatpush1.msra.mxu0 0.0
    %1629 = vmatprep.subr.mxu0 0.0
    %1630 = vmatpush1.msra.mxu0 0.0
    %1631 = vmatprep.subr.mxu0 0.0
    %1632 = vmatpush1.msra.mxu0 0.0
    %1633 = vmatprep.subr.mxu0 0.0
    %1634 = vmatpush1.msra.mxu0 0.0
    %1635 = vmatprep.subr.mxu0 0.0
    %1636 = vmatpush1.msra.mxu0 0.0
    %1637 = vmatprep.subr.mxu0 0.0
    %1638 = vmatpush1.msra.mxu0 0.0
    %1639 = vmatprep.subr.mxu0 0.0
    %1640 = vmatpush1.msra.mxu0 0.0
    %1641 = vmatprep.subr.mxu0 0.0
    %1642 = vmatpush1.msra.mxu0 0.0
    %1643 = vmatprep.subr.mxu0 0.0
    %1644 = vmatpush1.msra.mxu0 0.0
    %1645 = vmatprep.subr.mxu0 0.0
    %1646 = vmatpush1.msra.mxu0 0.0
    %1647 = vmatprep.subr.mxu0 0.0
    %1648 = vmatpush1.msra.mxu0 0.0
    %1649 = vmatprep.subr.mxu0 0.0
    %1650 = vmatpush1.msra.mxu0 0.0
    %1651 = vmatprep.subr.mxu0 0.0
    %1652 = vmatpush1.msra.mxu0 0.0
    %1653 = vmatprep.subr.mxu0 0.0
    %1654 = vmatpush1.msra.mxu0 0.0
    %1655 = vmatprep.subr.mxu0 0.0
    %1656 = vmatpush1.msra.mxu0 0.0
    %1657 = vmatprep.subr.mxu0 0.0
    %1658 = vmatpush1.msra.mxu0 0.0
    %1659 = vmatprep.subr.mxu0 0.0
    %1660 = vmatpush1.msra.mxu0 0.0
    %1661 = vmatprep.subr.mxu0 0.0
    %1662 = vmatpush1.msra.mxu0 0.0
    %1663 = vmatprep.subr.mxu0 0.0
    %1664 = vmatpush1.msra.mxu0 0.0
    %1665 = vmatprep.subr.mxu0 0.0
    %1666 = vmatpush1.msra.mxu0 0.0
    %1667 = vmatprep.subr.mxu0 0.0
    %1668 = vmatpush1.msra.mxu0 0.0
    %1669 = vmatprep.mubr.f32.mxu0 0.0
    %1670 = vmatmul.mubr.f32.gmra.mrb[0].mxu0 %v223
    %v1671 = vpop.f32.mrb[0].mxu0
    %v1672 = vadd.f32 %v1509, %v1671
    %v1673 = vpop.f32.mrb[0].mxu0
    %1674 = vmatprep.mubr.f32.mxu0 0.0
    %1675 = vmatmul.mubr.f32.gmra.mrb[0].mxu0 %v225
    %v1676 = vpop.f32.mrb[0].mxu0
    %v1677 = vadd.f32 %v1514, %v1676
    %v1678 = vpop.f32.mrb[0].mxu0
    %1679 = vmatprep.mubr.f32.mxu0 0.0
    %1680 = vmatmul.mubr.f32.gmra.mrb[0].mxu0 %v227
    %v1681 = vpop.f32.mrb[0].mxu0
    %v1682 = vadd.f32 %v1519, %v1681
    %v1683 = vpop.f32.mrb[0].mxu0
    %1684 = vdwg.mxu0
    %1685 = vmatprep.subr.mxu0 %v645
    %1686 = vmatpush1.msra.mxu0 %v644
    %1687 = vmatprep.subr.mxu0 %v648
    %1688 = vmatpush1.msra.mxu0 %v647
    %1689 = vmatprep.subr.mxu0 %v651
    %1690 = vmatpush1.msra.mxu0 %v650
    %1691 = vmatprep.subr.mxu0 %v718
    %1692 = vmatpush1.msra.mxu0 %v715
    %1693 = vmatprep.subr.mxu0 0.0
    %1694 = vmatpush1.msra.mxu0 0.0
    %1695 = vmatprep.subr.mxu0 0.0
    %1696 = vmatpush1.msra.mxu0 0.0
    %1697 = vmatprep.subr.mxu0 0.0
    %1698 = vmatpush1.msra.mxu0 0.0
    %1699 = vmatprep.subr.mxu0 0.0
    %1700 = vmatpush1.msra.mxu0 0.0
    %1701 = vmatprep.subr.mxu0 0.0
    %1702 = vmatpush1.msra.mxu0 0.0
    %1703 = vmatprep.subr.mxu0 0.0
    %1704 = vmatpush1.msra.mxu0 0.0
    %1705 = vmatprep.subr.mxu0 0.0
    %1706 = vmatpush1.msra.mxu0 0.0
    %1707 = vmatprep.subr.mxu0 0.0
    %1708 = vmatpush1.msra.mxu0 0.0
    %1709 = vmatprep.subr.mxu0 0.0
    %1710 = vmatpush1.msra.mxu0 0.0
    %1711 = vmatprep.subr.mxu0 0.0
    %1712 = vmatpush1.msra.mxu0 0.0
    %1713 = vmatprep.subr.mxu0 0.0
    %1714 = vmatpush1.msra.mxu0 0.0
    %1715 = vmatprep.subr.mxu0 0.0
    %1716 = vmatpush1.msra.mxu0 0.0
    %1717 = vmatprep.subr.mxu0 0.0
    %1718 = vmatpush1.msra.mxu0 0.0
    %1719 = vmatprep.subr.mxu0 0.0
    %1720 = vmatpush1.msra.mxu0 0.0
    %1721 = vmatprep.subr.mxu0 0.0
    %1722 = vmatpush1.msra.mxu0 0.0
    %1723 = vmatprep.subr.mxu0 0.0
    %1724 = vmatpush1.msra.mxu0 0.0
    %1725 = vmatprep.subr.mxu0 0.0
    %1726 = vmatpush1.msra.mxu0 0.0
    %1727 = vmatprep.subr.mxu0 0.0
    %1728 = vmatpush1.msra.mxu0 0.0
    %1729 = vmatprep.subr.mxu0 0.0
    %1730 = vmatpush1.msra.mxu0 0.0
    %1731 = vmatprep.subr.mxu0 0.0
    %1732 = vmatpush1.msra.mxu0 0.0
    %1733 = vmatprep.subr.mxu0 0.0
    %1734 = vmatpush1.msra.mxu0 0.0
    %1735 = vmatprep.subr.mxu0 0.0
    %1736 = vmatpush1.msra.mxu0 0.0
    %1737 = vmatprep.subr.mxu0 0.0
    %1738 = vmatpush1.msra.mxu0 0.0
    %1739 = vmatprep.subr.mxu0 0.0
    %1740 = vmatpush1.msra.mxu0 0.0
    %1741 = vmatprep.subr.mxu0 0.0
    %1742 = vmatpush1.msra.mxu0 0.0
    %1743 = vmatprep.subr.mxu0 0.0
    %1744 = vmatpush1.msra.mxu0 0.0
    %1745 = vmatprep.subr.mxu0 0.0
    %1746 = vmatpush1.msra.mxu0 0.0
    %1747 = vmatprep.subr.mxu0 0.0
    %1748 = vmatpush1.msra.mxu0 0.0
    %1749 = vmatprep.mubr.f32.mxu0 0.0
    %1750 = vmatmul.mubr.f32.gmra.mrb[0].mxu0 %v960
    %v1751 = vpop.f32.mrb[0].mxu0
    %v1752 = vadd.f32 0.0, %v1751
    %v1753 = vpop.f32.mrb[0].mxu0
    %v1754 = vadd.f32 0.0, %v1753
    %1755 = vmatprep.mubr.f32.mxu0 0.0
    %1756 = vmatmul.mubr.f32.gmra.mrb[0].mxu0 %v962
    %v1757 = vpop.f32.mrb[0].mxu0
    %v1758 = vadd.f32 0.0, %v1757
    %v1759 = vpop.f32.mrb[0].mxu0
    %v1760 = vadd.f32 0.0, %v1759
    %1761 = vmatprep.mubr.f32.mxu0 0.0
    %1762 = vmatmul.mubr.f32.gmra.mrb[0].mxu0 %v964
    %v1763 = vpop.f32.mrb[0].mxu0
    %v1764 = vadd.f32 0.0, %v1763
    %v1765 = vpop.f32.mrb[0].mxu0
    %v1766 = vadd.f32 0.0, %v1765
    %1767 = vdwg.mxu0
    %1768 = vmatprep.subr.mxu0 0.0
    %1769 = vmatpush1.msra.mxu0 %v646
    %1770 = vmatprep.subr.mxu0 0.0
    %1771 = vmatpush1.msra.mxu0 %v649
    %1772 = vmatprep.subr.mxu0 0.0
    %1773 = vmatpush1.msra.mxu0 %v652
    %1774 = vmatprep.subr.mxu0 0.0
    %1775 = vmatpush1.msra.mxu0 %v721
    %1776 = vmatprep.subr.mxu0 0.0
    %1777 = vmatpush1.msra.mxu0 0.0
    %1778 = vmatprep.subr.mxu0 0.0
    %1779 = vmatpush1.msra.mxu0 0.0
    %1780 = vmatprep.subr.mxu0 0.0
    %1781 = vmatpush1.msra.mxu0 0.0
    %1782 = vmatprep.subr.mxu0 0.0
    %1783 = vmatpush1.msra.mxu0 0.0
    %1784 = vmatprep.subr.mxu0 0.0
    %1785 = vmatpush1.msra.mxu0 0.0
    %1786 = vmatprep.subr.mxu0 0.0
    %1787 = vmatpush1.msra.mxu0 0.0
    %1788 = vmatprep.subr.mxu0 0.0
    %1789 = vmatpush1.msra.mxu0 0.0
    %1790 = vmatprep.subr.mxu0 0.0
    %1791 = vmatpush1.msra.mxu0 0.0
    %1792 = vmatprep.subr.mxu0 0.0
    %1793 = vmatpush1.msra.mxu0 0.0
    %1794 = vmatprep.subr.mxu0 0.0
    %1795 = vmatpush1.msra.mxu0 0.0
    %1796 = vmatprep.subr.mxu0 0.0
    %1797 = vmatpush1.msra.mxu0 0.0
    %1798 = vmatprep.subr.mxu0 0.0
    %1799 = vmatpush1.msra.mxu0 0.0
    %1800 = vmatprep.subr.mxu0 0.0
    %1801 = vmatpush1.msra.mxu0 0.0
    %1802 = vmatprep.subr.mxu0 0.0
    %1803 = vmatpush1.msra.mxu0 0.0
    %1804 = vmatprep.subr.mxu0 0.0
    %1805 = vmatpush1.msra.mxu0 0.0
    %1806 = vmatprep.subr.mxu0 0.0
    %1807 = vmatpush1.msra.mxu0 0.0
    %1808 = vmatprep.subr.mxu0 0.0
    %1809 = vmatpush1.msra.mxu0 0.0
    %1810 = vmatprep.subr.mxu0 0.0
    %1811 = vmatpush1.msra.mxu0 0.0
    %1812 = vmatprep.subr.mxu0 0.0
    %1813 = vmatpush1.msra.mxu0 0.0
    %1814 = vmatprep.subr.mxu0 0.0
    %1815 = vmatpush1.msra.mxu0 0.0
    %1816 = vmatprep.subr.mxu0 0.0
    %1817 = vmatpush1.msra.mxu0 0.0
    %1818 = vmatprep.subr.mxu0 0.0
    %1819 = vmatpush1.msra.mxu0 0.0
    %1820 = vmatprep.subr.mxu0 0.0
    %1821 = vmatpush1.msra.mxu0 0.0
    %1822 = vmatprep.subr.mxu0 0.0
    %1823 = vmatpush1.msra.mxu0 0.0
    %1824 = vmatprep.subr.mxu0 0.0
    %1825 = vmatpush1.msra.mxu0 0.0
    %1826 = vmatprep.subr.mxu0 0.0
    %1827 = vmatpush1.msra.mxu0 0.0
    %1828 = vmatprep.subr.mxu0 0.0
    %1829 = vmatpush1.msra.mxu0 0.0
    %1830 = vmatprep.subr.mxu0 0.0
    %1831 = vmatpush1.msra.mxu0 0.0
    %1832 = vmatprep.mubr.f32.mxu0 0.0
    %1833 = vmatmul.mubr.f32.gmra.mrb[0].mxu0 %v960
    %v1834 = vpop.f32.mrb[0].mxu0
    %v1835 = vadd.f32 0.0, %v1834
    %v1836 = vpop.f32.mrb[0].mxu0
    %1837 = vmatprep.mubr.f32.mxu0 0.0
    %1838 = vmatmul.mubr.f32.gmra.mrb[0].mxu0 %v962
    %v1839 = vpop.f32.mrb[0].mxu0
    %v1840 = vadd.f32 0.0, %v1839
    %v1841 = vpop.f32.mrb[0].mxu0
    %1842 = vmatprep.mubr.f32.mxu0 0.0
    %1843 = vmatmul.mubr.f32.gmra.mrb[0].mxu0 %v964
    %v1844 = vpop.f32.mrb[0].mxu0
    %v1845 = vadd.f32 0.0, %v1844
    %v1846 = vpop.f32.mrb[0].mxu0
    %1847 = vdwg.mxu0
    %v1848 = vadd.f32 %v1589, %v1752
    %v1849 = vadd.f32 %v1591, %v1754
    %v1850 = vadd.f32 %v1672, %v1835
    %v1851 = vadd.f32 %v1595, %v1758
    %v1852 = vadd.f32 %v1597, %v1760
    %v1853 = vadd.f32 %v1677, %v1840
    %v1854 = vadd.f32 %v1601, %v1764
    %v1855 = vadd.f32 %v1603, %v1766
    %v1856 = vadd.f32 %v1682, %v1845
    %1857 = vmatprep.subr.mxu0 %v897
    %1858 = vmatpush1.msra.mxu0 %v896
    %1859 = vmatprep.subr.mxu0 %v900
    %1860 = vmatpush1.msra.mxu0 %v899
    %1861 = vmatprep.subr.mxu0 %v903
    %1862 = vmatpush1.msra.mxu0 %v902
    %1863 = vmatprep.subr.mxu0 %v970
    %1864 = vmatpush1.msra.mxu0 %v967
    %1865 = vmatprep.subr.mxu0 0.0
    %1866 = vmatpush1.msra.mxu0 0.0
    %1867 = vmatprep.subr.mxu0 0.0
    %1868 = vmatpush1.msra.mxu0 0.0
    %1869 = vmatprep.subr.mxu0 0.0
    %1870 = vmatpush1.msra.mxu0 0.0
    %1871 = vmatprep.subr.mxu0 0.0
    %1872 = vmatpush1.msra.mxu0 0.0
    %1873 = vmatprep.subr.mxu0 0.0
    %1874 = vmatpush1.msra.mxu0 0.0
    %1875 = vmatprep.subr.mxu0 0.0
    %1876 = vmatpush1.msra.mxu0 0.0
    %1877 = vmatprep.subr.mxu0 0.0
    %1878 = vmatpush1.msra.mxu0 0.0
    %1879 = vmatprep.subr.mxu0 0.0
    %1880 = vmatpush1.msra.mxu0 0.0
    %1881 = vmatprep.subr.mxu0 0.0
    %1882 = vmatpush1.msra.mxu0 0.0
    %1883 = vmatprep.subr.mxu0 0.0
    %1884 = vmatpush1.msra.mxu0 0.0
    %1885 = vmatprep.subr.mxu0 0.0
    %1886 = vmatpush1.msra.mxu0 0.0
    %1887 = vmatprep.subr.mxu0 0.0
    %1888 = vmatpush1.msra.mxu0 0.0
    %1889 = vmatprep.subr.mxu0 0.0
    %1890 = vmatpush1.msra.mxu0 0.0
    %1891 = vmatprep.subr.mxu0 0.0
    %1892 = vmatpush1.msra.mxu0 0.0
    %1893 = vmatprep.subr.mxu0 0.0
    %1894 = vmatpush1.msra.mxu0 0.0
    %1895 = vmatprep.subr.mxu0 0.0
    %1896 = vmatpush1.msra.mxu0 0.0
    %1897 = vmatprep.subr.mxu0 0.0
    %1898 = vmatpush1.msra.mxu0 0.0
    %1899 = vmatprep.subr.mxu0 0.0
    %1900 = vmatpush1.msra.mxu0 0.0
    %1901 = vmatprep.subr.mxu0 0.0
    %1902 = vmatpush1.msra.mxu0 0.0
    %1903 = vmatprep.subr.mxu0 0.0
    %1904 = vmatpush1.msra.mxu0 0.0
    %1905 = vmatprep.subr.mxu0 0.0
    %1906 = vmatpush1.msra.mxu0 0.0
    %1907 = vmatprep.subr.mxu0 0.0
    %1908 = vmatpush1.msra.mxu0 0.0
    %1909 = vmatprep.subr.mxu0 0.0
    %1910 = vmatpush1.msra.mxu0 0.0
    %1911 = vmatprep.subr.mxu0 0.0
    %1912 = vmatpush1.msra.mxu0 0.0
    %1913 = vmatprep.subr.mxu0 0.0
    %1914 = vmatpush1.msra.mxu0 0.0
    %1915 = vmatprep.subr.mxu0 0.0
    %1916 = vmatpush1.msra.mxu0 0.0
    %1917 = vmatprep.subr.mxu0 0.0
    %1918 = vmatpush1.msra.mxu0 0.0
    %1919 = vmatprep.subr.mxu0 0.0
    %1920 = vmatpush1.msra.mxu0 0.0
    %1921 = vmatprep.mubr.f32.mxu0 0.0
    %1922 = vmatmul.mubr.f32.gmra.mrb[0].mxu0 %v1172
    %v1923 = vpop.f32.mrb[0].mxu0
    %v1924 = vadd.f32 0.0, %v1923
    %v1925 = vpop.f32.mrb[0].mxu0
    %v1926 = vadd.f32 0.0, %v1925
    %1927 = vmatprep.mubr.f32.mxu0 0.0
    %1928 = vmatmul.mubr.f32.gmra.mrb[0].mxu0 %v1174
    %v1929 = vpop.f32.mrb[0].mxu0
    %v1930 = vadd.f32 0.0, %v1929
    %v1931 = vpop.f32.mrb[0].mxu0
    %v1932 = vadd.f32 0.0, %v1931
    %1933 = vmatprep.mubr.f32.mxu0 0.0
    %1934 = vmatmul.mubr.f32.gmra.mrb[0].mxu0 %v1176
    %v1935 = vpop.f32.mrb[0].mxu0
    %v1936 = vadd.f32 0.0, %v1935
    %v1937 = vpop.f32.mrb[0].mxu0
    %v1938 = vadd.f32 0.0, %v1937
    %1939 = vdwg.mxu0
    %1940 = vmatprep.subr.mxu0 0.0
    %1941 = vmatpush1.msra.mxu0 %v898
    %1942 = vmatprep.subr.mxu0 0.0
    %1943 = vmatpush1.msra.mxu0 %v901
    %1944 = vmatprep.subr.mxu0 0.0
    %1945 = vmatpush1.msra.mxu0 %v904
    %1946 = vmatprep.subr.mxu0 0.0
    %1947 = vmatpush1.msra.mxu0 %v973
    %1948 = vmatprep.subr.mxu0 0.0
    %1949 = vmatpush1.msra.mxu0 0.0
    %1950 = vmatprep.subr.mxu0 0.0
    %1951 = vmatpush1.msra.mxu0 0.0
    %1952 = vmatprep.subr.mxu0 0.0
    %1953 = vmatpush1.msra.mxu0 0.0
    %1954 = vmatprep.subr.mxu0 0.0
    %1955 = vmatpush1.msra.mxu0 0.0
    %1956 = vmatprep.subr.mxu0 0.0
    %1957 = vmatpush1.msra.mxu0 0.0
    %1958 = vmatprep.subr.mxu0 0.0
    %1959 = vmatpush1.msra.mxu0 0.0
    %1960 = vmatprep.subr.mxu0 0.0
    %1961 = vmatpush1.msra.mxu0 0.0
    %1962 = vmatprep.subr.mxu0 0.0
    %1963 = vmatpush1.msra.mxu0 0.0
    %1964 = vmatprep.subr.mxu0 0.0
    %1965 = vmatpush1.msra.mxu0 0.0
    %1966 = vmatprep.subr.mxu0 0.0
    %1967 = vmatpush1.msra.mxu0 0.0
    %1968 = vmatprep.subr.mxu0 0.0
    %1969 = vmatpush1.msra.mxu0 0.0
    %1970 = vmatprep.subr.mxu0 0.0
    %1971 = vmatpush1.msra.mxu0 0.0
    %1972 = vmatprep.subr.mxu0 0.0
    %1973 = vmatpush1.msra.mxu0 0.0
    %1974 = vmatprep.subr.mxu0 0.0
    %1975 = vmatpush1.msra.mxu0 0.0
    %1976 = vmatprep.subr.mxu0 0.0
    %1977 = vmatpush1.msra.mxu0 0.0
    %1978 = vmatprep.subr.mxu0 0.0
    %1979 = vmatpush1.msra.mxu0 0.0
    %1980 = vmatprep.subr.mxu0 0.0
    %1981 = vmatpush1.msra.mxu0 0.0
    %1982 = vmatprep.subr.mxu0 0.0
    %1983 = vmatpush1.msra.mxu0 0.0
    %1984 = vmatprep.subr.mxu0 0.0
    %1985 = vmatpush1.msra.mxu0 0.0
    %1986 = vmatprep.subr.mxu0 0.0
    %1987 = vmatpush1.msra.mxu0 0.0
    %1988 = vmatprep.subr.mxu0 0.0
    %1989 = vmatpush1.msra.mxu0 0.0
    %1990 = vmatprep.subr.mxu0 0.0
    %1991 = vmatpush1.msra.mxu0 0.0
    %1992 = vmatprep.subr.mxu0 0.0
    %1993 = vmatpush1.msra.mxu0 0.0
    %1994 = vmatprep.subr.mxu0 0.0
    %1995 = vmatpush1.msra.mxu0 0.0
    %1996 = vmatprep.subr.mxu0 0.0
    %1997 = vmatpush1.msra.mxu0 0.0
    %1998 = vmatprep.subr.mxu0 0.0
    %1999 = vmatpush1.msra.mxu0 0.0
    %2000 = vmatprep.subr.mxu0 0.0
    %2001 = vmatpush1.msra.mxu0 0.0
    %2002 = vmatprep.subr.mxu0 0.0
    %2003 = vmatpush1.msra.mxu0 0.0
    %2004 = vmatprep.mubr.f32.mxu0 0.0
    %2005 = vmatmul.mubr.f32.gmra.mrb[0].mxu0 %v1172
    %v2006 = vpop.f32.mrb[0].mxu0
    %v2007 = vadd.f32 0.0, %v2006
    %v2008 = vpop.f32.mrb[0].mxu0
    %2009 = vmatprep.mubr.f32.mxu0 0.0
    %2010 = vmatmul.mubr.f32.gmra.mrb[0].mxu0 %v1174
    %v2011 = vpop.f32.mrb[0].mxu0
    %v2012 = vadd.f32 0.0, %v2011
    %v2013 = vpop.f32.mrb[0].mxu0
    %2014 = vmatprep.mubr.f32.mxu0 0.0
    %2015 = vmatmul.mubr.f32.gmra.mrb[0].mxu0 %v1176
    %v2016 = vpop.f32.mrb[0].mxu0
    %v2017 = vadd.f32 0.0, %v2016
    %v2018 = vpop.f32.mrb[0].mxu0
    %2019 = vdwg.mxu0
    %v2020 = vadd.f32 %v1848, %v1924
    %v2021 = vadd.f32 %v1849, %v1926
    %v2022 = vadd.f32 %v1850, %v2007
    %v2023 = vadd.f32 %v1851, %v1930
    %v2024 = vadd.f32 %v1852, %v1932
    %v2025 = vadd.f32 %v1853, %v2012
    %v2026 = vadd.f32 %v1854, %v1936
    %v2027 = vadd.f32 %v1855, %v1938
    %v2028 = vadd.f32 %v1856, %v2017
    %v2030 = vcombine.low %v186, %v196
    %v2031 = vcombine.low %v203, %v213
    %v2032 = vcombine.low %v132, %v133
    %v2034 = vunpack.c.l.s4 1983009808
    %v2035 = vunpack.c.0.s8 %v2034
    %v2036 = vlaneseq
    %v2037 = vshrl.u32 %v2036, 7
    %v2038 = vsub.s32 %v2035, %v2037
    %v2039 = vrot.slane %v2032, %v2038
    %v2040 = vcombine.low %v220, %v2039
    %v2041 = vsel %vm222, %v2030, 0
    %v2043 = vsel %vm222, %v2031, 0
    %v2045 = vsel %vm222, %v2040, 0
    %2047 = vmatprep.subr.mxu0 %v1149
    %2048 = vmatpush1.msra.mxu0 %v1148
    %2049 = vmatprep.subr.mxu0 %v1152
    %2050 = vmatpush1.msra.mxu0 %v1151
    %2051 = vmatprep.subr.mxu0 %v1155
    %2052 = vmatpush1.msra.mxu0 %v1154
    %2053 = vmatprep.subr.mxu0 %v1182
    %2054 = vmatpush1.msra.mxu0 %v1179
    %2055 = vmatprep.subr.mxu0 0.0
    %2056 = vmatpush1.msra.mxu0 0.0
    %2057 = vmatprep.subr.mxu0 0.0
    %2058 = vmatpush1.msra.mxu0 0.0
    %2059 = vmatprep.subr.mxu0 0.0
    %2060 = vmatpush1.msra.mxu0 0.0
    %2061 = vmatprep.subr.mxu0 0.0
    %2062 = vmatpush1.msra.mxu0 0.0
    %2063 = vmatprep.subr.mxu0 0.0
    %2064 = vmatpush1.msra.mxu0 0.0
    %2065 = vmatprep.subr.mxu0 0.0
    %2066 = vmatpush1.msra.mxu0 0.0
    %2067 = vmatprep.subr.mxu0 0.0
    %2068 = vmatpush1.msra.mxu0 0.0
    %2069 = vmatprep.subr.mxu0 0.0
    %2070 = vmatpush1.msra.mxu0 0.0
    %2071 = vmatprep.subr.mxu0 0.0
    %2072 = vmatpush1.msra.mxu0 0.0
    %2073 = vmatprep.subr.mxu0 0.0
    %2074 = vmatpush1.msra.mxu0 0.0
    %2075 = vmatprep.subr.mxu0 0.0
    %2076 = vmatpush1.msra.mxu0 0.0
    %2077 = vmatprep.subr.mxu0 0.0
    %2078 = vmatpush1.msra.mxu0 0.0
    %2079 = vmatprep.subr.mxu0 0.0
    %2080 = vmatpush1.msra.mxu0 0.0
    %2081 = vmatprep.subr.mxu0 0.0
    %2082 = vmatpush1.msra.mxu0 0.0
    %2083 = vmatprep.subr.mxu0 0.0
    %2084 = vmatpush1.msra.mxu0 0.0
    %2085 = vmatprep.subr.mxu0 0.0
    %2086 = vmatpush1.msra.mxu0 0.0
    %2087 = vmatprep.subr.mxu0 0.0
    %2088 = vmatpush1.msra.mxu0 0.0
    %2089 = vmatprep.subr.mxu0 0.0
    %2090 = vmatpush1.msra.mxu0 0.0
    %2091 = vmatprep.subr.mxu0 0.0
    %2092 = vmatpush1.msra.mxu0 0.0
    %2093 = vmatprep.subr.mxu0 0.0
    %2094 = vmatpush1.msra.mxu0 0.0
    %2095 = vmatprep.subr.mxu0 0.0
    %2096 = vmatpush1.msra.mxu0 0.0
    %2097 = vmatprep.subr.mxu0 0.0
    %2098 = vmatpush1.msra.mxu0 0.0
    %2099 = vmatprep.subr.mxu0 0.0
    %2100 = vmatpush1.msra.mxu0 0.0
    %2101 = vmatprep.subr.mxu0 0.0
    %2102 = vmatpush1.msra.mxu0 0.0
    %2103 = vmatprep.subr.mxu0 0.0
    %2104 = vmatpush1.msra.mxu0 0.0
    %2105 = vmatprep.subr.mxu0 0.0
    %2106 = vmatpush1.msra.mxu0 0.0
    %2107 = vmatprep.subr.mxu0 0.0
    %2108 = vmatpush1.msra.mxu0 0.0
    %2109 = vmatprep.subr.mxu0 0.0
    %2110 = vmatpush1.msra.mxu0 0.0
    %2111 = vmatprep.mubr.f32.mxu0 0.0
    %2112 = vmatmul.mubr.f32.gmra.mrb[0].mxu0 %v2041
    %v2113 = vpop.f32.mrb[0].mxu0
    %v2114 = vadd.f32 0.0, %v2113
    %v2115 = vpop.f32.mrb[0].mxu0
    %v2116 = vadd.f32 0.0, %v2115
    %2117 = vmatprep.mubr.f32.mxu0 0.0
    %2118 = vmatmul.mubr.f32.gmra.mrb[0].mxu0 %v2043
    %v2119 = vpop.f32.mrb[0].mxu0
    %v2120 = vadd.f32 0.0, %v2119
    %v2121 = vpop.f32.mrb[0].mxu0
    %v2122 = vadd.f32 0.0, %v2121
    %2123 = vmatprep.mubr.f32.mxu0 0.0
    %2124 = vmatmul.mubr.f32.gmra.mrb[0].mxu0 %v2045
    %v2125 = vpop.f32.mrb[0].mxu0
    %v2126 = vadd.f32 0.0, %v2125
    %v2127 = vpop.f32.mrb[0].mxu0
    %v2128 = vadd.f32 0.0, %v2127
    %2129 = vdwg.mxu0
    %2130 = vmatprep.subr.mxu0 0.0
    %2131 = vmatpush1.msra.mxu0 %v1150
    %2132 = vmatprep.subr.mxu0 0.0
    %2133 = vmatpush1.msra.mxu0 %v1153
    %2134 = vmatprep.subr.mxu0 0.0
    %2135 = vmatpush1.msra.mxu0 %v1156
    %2136 = vmatprep.subr.mxu0 0.0
    %2137 = vmatpush1.msra.mxu0 %v1185
    %2138 = vmatprep.subr.mxu0 0.0
    %2139 = vmatpush1.msra.mxu0 0.0
    %2140 = vmatprep.subr.mxu0 0.0
    %2141 = vmatpush1.msra.mxu0 0.0
    %2142 = vmatprep.subr.mxu0 0.0
    %2143 = vmatpush1.msra.mxu0 0.0
    %2144 = vmatprep.subr.mxu0 0.0
    %2145 = vmatpush1.msra.mxu0 0.0
    %2146 = vmatprep.subr.mxu0 0.0
    %2147 = vmatpush1.msra.mxu0 0.0
    %2148 = vmatprep.subr.mxu0 0.0
    %2149 = vmatpush1.msra.mxu0 0.0
    %2150 = vmatprep.subr.mxu0 0.0
    %2151 = vmatpush1.msra.mxu0 0.0
    %2152 = vmatprep.subr.mxu0 0.0
    %2153 = vmatpush1.msra.mxu0 0.0
    %2154 = vmatprep.subr.mxu0 0.0
    %2155 = vmatpush1.msra.mxu0 0.0
    %2156 = vmatprep.subr.mxu0 0.0
    %2157 = vmatpush1.msra.mxu0 0.0
    %2158 = vmatprep.subr.mxu0 0.0
    %2159 = vmatpush1.msra.mxu0 0.0
    %2160 = vmatprep.subr.mxu0 0.0
    %2161 = vmatpush1.msra.mxu0 0.0
    %2162 = vmatprep.subr.mxu0 0.0
    %2163 = vmatpush1.msra.mxu0 0.0
    %2164 = vmatprep.subr.mxu0 0.0
    %2165 = vmatpush1.msra.mxu0 0.0
    %2166 = vmatprep.subr.mxu0 0.0
    %2167 = vmatpush1.msra.mxu0 0.0
    %2168 = vmatprep.subr.mxu0 0.0
    %2169 = vmatpush1.msra.mxu0 0.0
    %2170 = vmatprep.subr.mxu0 0.0
    %2171 = vmatpush1.msra.mxu0 0.0
    %2172 = vmatprep.subr.mxu0 0.0
    %2173 = vmatpush1.msra.mxu0 0.0
    %2174 = vmatprep.subr.mxu0 0.0
    %2175 = vmatpush1.msra.mxu0 0.0
    %2176 = vmatprep.subr.mxu0 0.0
    %2177 = vmatpush1.msra.mxu0 0.0
    %2178 = vmatprep.subr.mxu0 0.0
    %2179 = vmatpush1.msra.mxu0 0.0
    %2180 = vmatprep.subr.mxu0 0.0
    %2181 = vmatpush1.msra.mxu0 0.0
    %2182 = vmatprep.subr.mxu0 0.0
    %2183 = vmatpush1.msra.mxu0 0.0
    %2184 = vmatprep.subr.mxu0 0.0
    %2185 = vmatpush1.msra.mxu0 0.0
    %2186 = vmatprep.subr.mxu0 0.0
    %2187 = vmatpush1.msra.mxu0 0.0
    %2188 = vmatprep.subr.mxu0 0.0
    %2189 = vmatpush1.msra.mxu0 0.0
    %2190 = vmatprep.subr.mxu0 0.0
    %2191 = vmatpush1.msra.mxu0 0.0
    %2192 = vmatprep.subr.mxu0 0.0
    %2193 = vmatpush1.msra.mxu0 0.0
    %2194 = vmatprep.mubr.f32.mxu0 0.0
    %2195 = vmatmul.mubr.f32.gmra.mrb[0].mxu0 %v2041
    %v2196 = vpop.f32.mrb[0].mxu0
    %v2197 = vadd.f32 0.0, %v2196
    %v2198 = vpop.f32.mrb[0].mxu0
    %2199 = vmatprep.mubr.f32.mxu0 0.0
    %2200 = vmatmul.mubr.f32.gmra.mrb[0].mxu0 %v2043
    %v2201 = vpop.f32.mrb[0].mxu0
    %v2202 = vadd.f32 0.0, %v2201
    %v2203 = vpop.f32.mrb[0].mxu0
    %2204 = vmatprep.mubr.f32.mxu0 0.0
    %2205 = vmatmul.mubr.f32.gmra.mrb[0].mxu0 %v2045
    %v2206 = vpop.f32.mrb[0].mxu0
    %v2207 = vadd.f32 0.0, %v2206
    %v2208 = vpop.f32.mrb[0].mxu0
    %2209 = vdwg.mxu0
    %v2210 = vadd.f32 %v2020, %v2114
    %v2211 = vadd.f32 %v2021, %v2116
    %v2212 = vadd.f32 %v2022, %v2197
    %v2213 = vadd.f32 %v2023, %v2120
    %v2214 = vadd.f32 %v2024, %v2122
    %v2215 = vadd.f32 %v2025, %v2202
    %v2216 = vadd.f32 %v2026, %v2126
    %v2217 = vadd.f32 %v2027, %v2128
    %v2218 = vadd.f32 %v2028, %v2207
    %v2219 = vmax.f32 %v1350, %v2210
    %v2220 = vmax.f32 %v1351, %v2211
    %v2221 = vmax.f32 %v1352, %v2212
    %v2222 = vmax.f32 %v1353, %v2213
    %v2223 = vmax.f32 %v1354, %v2214
    %v2224 = vmax.f32 %v1355, %v2215
    %v2225 = vmax.f32 %v1356, %v2216
    %v2226 = vmax.f32 %v1357, %v2217
    %v2227 = vmax.f32 %v1358, %v2218
    %v2228 = vld [vmem:[#allocation5] sm:$0x7]
    %v2230 = vlaneseq
    %v2231 = vshrl.u32 %v2230, 7
    %v2232 = vsub.s32 0, %v2231
    %v2233 = vrot.slane %v2228, %v2232
    %v2234 = vlaneseq
    %v2235 = vshrl.u32 %v2234, 7
    %v2236 = vsub.s32 1, %v2235
    %v2237 = vrot.slane %v2228, %v2236
    %v2238 = vlaneseq
    %v2239 = vshrl.u32 %v2238, 7
    %v2240 = vsub.s32 2, %v2239
    %v2241 = vrot.slane %v2228, %v2240
    %v2245 = vadd.f32 %v2219, %v2233
    %v2246 = vadd.f32 %v2220, %v2237
    %v2247 = vadd.f32 %v2221, %v2241
    %v2248 = vadd.f32 %v2222, %v2233
    %v2249 = vadd.f32 %v2223, %v2237
    %v2250 = vadd.f32 %v2224, %v2241
    %v2251 = vadd.f32 %v2225, %v2233
    %v2252 = vadd.f32 %v2226, %v2237
    %v2253 = vadd.f32 %v2227, %v2241
    %2263 = vrot.lane.b32.xlu0 %v2245, 112
    %v2264 = vpop.permute.xlu0 %2263
    %2265 = vrot.lane.b32.xlu0 %v2246, 112
    %v2266 = vpop.permute.xlu0 %2265
    %2267 = vrot.lane.b32.xlu0 %v2247, 112
    %v2268 = vpop.permute.xlu0 %2267
    %2269 = vrot.lane.b32.xlu0 %v2248, 112
    %v2270 = vpop.permute.xlu0 %2269
    %2271 = vrot.lane.b32.xlu0 %v2249, 112
    %v2272 = vpop.permute.xlu0 %2271
    %2273 = vrot.lane.b32.xlu0 %v2250, 112
    %v2274 = vpop.permute.xlu0 %2273
    %2275 = vrot.lane.b32.xlu0 %v2251, 112
    %v2276 = vpop.permute.xlu0 %2275
    %2277 = vrot.lane.b32.xlu0 %v2252, 112
    %v2278 = vpop.permute.xlu0 %2277
    %2279 = vrot.lane.b32.xlu0 %v2253, 112
    %v2280 = vpop.permute.xlu0 %2279
    %vm2281 = vcmask 916480
    %v2282 = vsel %vm2281, %v2264, %v2266
    %v2283 = vsel %vm2281, %v2266, %v2268
    %v2284 = vsel %vm2281, %v2270, %v2272
    %v2285 = vsel %vm2281, %v2272, %v2274
    %v2286 = vsel %vm2281, %v2276, %v2278
    %v2287 = vsel %vm2281, %v2278, %v2280
    %v2297 = vmax.f32 %v2245, %v2282
    %v2298 = vmax.f32 %v2246, %v2283
    %v2299 = vmax.f32 %v2247, %v2268
    %v2300 = vmax.f32 %v2248, %v2284
    %v2301 = vmax.f32 %v2249, %v2285
    %v2302 = vmax.f32 %v2250, %v2274
    %v2303 = vmax.f32 %v2251, %v2286
    %v2304 = vmax.f32 %v2252, %v2287
    %v2305 = vmax.f32 %v2253, %v2280
    %v2306 = vmax.f32 %v2297, 0.0
    %v2307 = vmax.f32 %v2298, 0.0
    %v2308 = vmax.f32 %v2299, 0.0
    %v2309 = vmax.f32 %v2300, 0.0
    %v2310 = vmax.f32 %v2301, 0.0
    %v2311 = vmax.f32 %v2302, 0.0
    %v2312 = vmax.f32 %v2303, 0.0
    %v2313 = vmax.f32 %v2304, 0.0
    %v2314 = vmax.f32 %v2305, 0.0
    %v2315 = vld [vmem:[#allocation7] sm:$0xff]
    %v2316 = vld [vmem:[#allocation7 + $0x8] sm:$0xff]
    %v2317 = vld [vmem:[#allocation7 + $0x10] sm:$0xff]
    %v2318 = vld [vmem:[#allocation7 + $0x18] sm:$0xff]
    %v2319 = vld [vmem:[#allocation7 + $0x20] sm:$0xff]
    %v2320 = vld [vmem:[#allocation7 + $0x28] sm:$0xff]
    %v2321 = vld [vmem:[#allocation7 + $0x30] sm:$0xff]
    %v2322 = vld [vmem:[#allocation7 + $0x38] sm:$0xff]
    %v2323 = vld [vmem:[#allocation7 + $0x40] sm:$0xff]
    %v2324 = vld [vmem:[#allocation7 + $0x48] sm:$0xff]
    %v2325 = vld [vmem:[#allocation7 + $0x50] sm:$0xff]
    %v2326 = vld [vmem:[#allocation7 + $0x58] sm:$0xff]
    %v2327 = vld [vmem:[#allocation7 + $0x60] sm:$0xff]
    %v2328 = vld [vmem:[#allocation7 + $0x68] sm:$0xff]
    %v2329 = vld [vmem:[#allocation7 + $0x70] sm:$0xff]
    %v2330 = vld [vmem:[#allocation7 + $0x78] sm:$0xff]
    %v2331 = vld [vmem:[#allocation7 + $0x80] sm:$0xff]
    %v2332 = vld [vmem:[#allocation7 + $0x88] sm:$0xff]
    %v2333 = vld [vmem:[#allocation7 + $0x90] sm:$0xff]
    %v2334 = vld [vmem:[#allocation7 + $0x98] sm:$0xff]
    %v2335 = vld [vmem:[#allocation7 + $0xa0] sm:$0xff]
    %v2336 = vld [vmem:[#allocation7 + $0xa8] sm:$0xff]
    %v2337 = vld [vmem:[#allocation7 + $0xb0] sm:$0xff]
    %v2338 = vld [vmem:[#allocation7 + $0xb8] sm:$0xff]
    %v2339 = vld [vmem:[#allocation7 + $0xc0] sm:$0xff]
    %v2340 = vld [vmem:[#allocation7 + $0xc8] sm:$0xff]
    %v2341 = vld [vmem:[#allocation7 + $0xd0] sm:$0xff]
    %v2342 = vld [vmem:[#allocation7 + $0xd8] sm:$0xff]
    %v2343 = vld [vmem:[#allocation7 + $0xe0] sm:$0xff]
    %v2344 = vld [vmem:[#allocation7 + $0xe8] sm:$0xff]
    %v2345 = vld [vmem:[#allocation7 + $0xf0] sm:$0xff]
    %v2346 = vld [vmem:[#allocation7 + $0xf8] sm:$0xff]
    %v2347 = vld [vmem:[#allocation7 + $0x100] sm:$0xff]
    %v2348 = vld [vmem:[#allocation7 + $0x108] sm:$0xff]
    %v2349 = vld [vmem:[#allocation7 + $0x110] sm:$0xff]
    %v2350 = vld [vmem:[#allocation7 + $0x118] sm:$0xff]
    %v2351 = vld [vmem:[#allocation7 + $0x120] sm:$0xff]
    %v2352 = vld [vmem:[#allocation7 + $0x128] sm:$0xff]
    %v2353 = vld [vmem:[#allocation7 + $0x130] sm:$0xff]
    %v2354 = vld [vmem:[#allocation7 + $0x138] sm:$0xff]
    %v2355 = vld [vmem:[#allocation7 + $0x140] sm:$0xff]
    %v2356 = vld [vmem:[#allocation7 + $0x148] sm:$0xff]
    %v2357 = vld [vmem:[#allocation7 + $0x150] sm:$0xff]
    %v2358 = vld [vmem:[#allocation7 + $0x158] sm:$0xff]
    %v2359 = vld [vmem:[#allocation7 + $0x160] sm:$0xff]
    %v2360 = vld [vmem:[#allocation7 + $0x168] sm:$0xff]
    %s2361 = scalar_lea.vmem [#allocation7], 368
    %v2362 = vld [vmem:[%s2361] sm:$0xff]
    %v2363 = vld [vmem:[%s2361 + $0x8] sm:$0xff]
    %v2364 = vld [vmem:[%s2361 + $0x10] sm:$0xff]
    %v2365 = vld [vmem:[%s2361 + $0x18] sm:$0xff]
    %v2366 = vld [vmem:[%s2361 + $0x20] sm:$0xff]
    %v2367 = vld [vmem:[%s2361 + $0x28] sm:$0xff]
    %v2368 = vld [vmem:[%s2361 + $0x30] sm:$0xff]
    %v2369 = vld [vmem:[%s2361 + $0x38] sm:$0xff]
    %v2370 = vld [vmem:[%s2361 + $0x40] sm:$0xff]
    %v2371 = vld [vmem:[%s2361 + $0x48] sm:$0xff]
    %v2372 = vld [vmem:[%s2361 + $0x50] sm:$0xff]
    %v2373 = vld [vmem:[%s2361 + $0x58] sm:$0xff]
    %v2374 = vld [vmem:[%s2361 + $0x60] sm:$0xff]
    %v2375 = vld [vmem:[%s2361 + $0x68] sm:$0xff]
    %v2376 = vld [vmem:[%s2361 + $0x70] sm:$0xff]
    %v2377 = vld [vmem:[%s2361 + $0x78] sm:$0xff]
    %v2378 = vld [vmem:[%s2361 + $0x80] sm:$0xff]
    %v2379 = vld [vmem:[%s2361 + $0x88] sm:$0xff]
    %v2380 = vld [vmem:[%s2361 + $0x90] sm:$0xff]
    %v2381 = vld [vmem:[%s2361 + $0x98] sm:$0xff]
    %v2382 = vld [vmem:[%s2361 + $0xa0] sm:$0xff]
    %v2383 = vld [vmem:[%s2361 + $0xa8] sm:$0xff]
    %v2384 = vld [vmem:[%s2361 + $0xb0] sm:$0xff]
    %v2385 = vld [vmem:[%s2361 + $0xb8] sm:$0xff]
    %v2386 = vld [vmem:[%s2361 + $0xc0] sm:$0xff]
    %v2387 = vld [vmem:[%s2361 + $0xc8] sm:$0xff]
    %v2388 = vld [vmem:[%s2361 + $0xd0] sm:$0xff]
    %v2389 = vld [vmem:[%s2361 + $0xd8] sm:$0xff]
    %v2390 = vld [vmem:[%s2361 + $0xe0] sm:$0xff]
    %v2391 = vld [vmem:[%s2361 + $0xe8] sm:$0xff]
    %v2392 = vld [vmem:[%s2361 + $0xf0] sm:$0xff]
    %v2393 = vld [vmem:[%s2361 + $0xf8] sm:$0xff]
    %v2394 = vld [vmem:[%s2361 + $0x100] sm:$0xff]
    %v2395 = vld [vmem:[%s2361 + $0x108] sm:$0xff]
    %v2396 = vld [vmem:[%s2361 + $0x110] sm:$0xff]
    %v2397 = vld [vmem:[%s2361 + $0x118] sm:$0xff]
    %v2398 = vld [vmem:[%s2361 + $0x120] sm:$0xff]
    %v2399 = vld [vmem:[%s2361 + $0x128] sm:$0xff]
    %v2400 = vld [vmem:[%s2361 + $0x130] sm:$0xff]
    %v2401 = vld [vmem:[%s2361 + $0x138] sm:$0xff]
    %v2402 = vld [vmem:[%s2361 + $0x140] sm:$0xff]
    %v2403 = vld [vmem:[%s2361 + $0x148] sm:$0xff]
    %v2404 = vld [vmem:[%s2361 + $0x150] sm:$0xff]
    %v2405 = vld [vmem:[%s2361 + $0x158] sm:$0xff]
    %v2406 = vld [vmem:[%s2361 + $0x160] sm:$0xff]
    %v2407 = vld [vmem:[%s2361 + $0x168] sm:$0xff]
    %v2411 = vrot.slane %v2306, 2
    %v2412 = vrot.slane %v2307, 2
    %v2413 = vrot.slane %v2308, 2
    %v2416 = vsel %vm2281, %v2413, 0
    %2418 = vmatprep.subr.mxu0 0.0
    %2419 = vmatpush1.msra.mxu0 %v2362
    %2420 = vmatprep.subr.mxu0 0.0
    %2421 = vmatpush1.msra.mxu0 %v2363
    %2422 = vmatprep.subr.mxu0 0.0
    %2423 = vmatpush1.msra.mxu0 %v2364
    %2424 = vmatprep.subr.mxu0 0.0
    %2425 = vmatpush1.msra.mxu0 %v2365
    %2426 = vmatprep.subr.mxu0 0.0
    %2427 = vmatpush1.msra.mxu0 %v2366
    %2428 = vmatprep.subr.mxu0 0.0
    %2429 = vmatpush1.msra.mxu0 %v2367
    %2430 = vmatprep.subr.mxu0 0.0
    %2431 = vmatpush1.msra.mxu0 %v2368
    %2432 = vmatprep.subr.mxu0 0.0
    %2433 = vmatpush1.msra.mxu0 %v2369
    %2434 = vmatprep.subr.mxu0 0.0
    %2435 = vmatpush1.msra.mxu0 %v2370
    %2436 = vmatprep.subr.mxu0 0.0
    %2437 = vmatpush1.msra.mxu0 %v2371
    %2438 = vmatprep.subr.mxu0 0.0
    %2439 = vmatpush1.msra.mxu0 %v2372
    %2440 = vmatprep.subr.mxu0 0.0
    %2441 = vmatpush1.msra.mxu0 %v2373
    %2442 = vmatprep.subr.mxu0 0.0
    %2443 = vmatpush1.msra.mxu0 %v2374
    %2444 = vmatprep.subr.mxu0 0.0
    %2445 = vmatpush1.msra.mxu0 %v2375
    %2446 = vmatprep.subr.mxu0 0.0
    %2447 = vmatpush1.msra.mxu0 %v2376
    %2448 = vmatprep.subr.mxu0 0.0
    %2449 = vmatpush1.msra.mxu0 %v2377
    %2450 = vmatprep.subr.mxu0 0.0
    %2451 = vmatpush1.msra.mxu0 %v2378
    %2452 = vmatprep.subr.mxu0 0.0
    %2453 = vmatpush1.msra.mxu0 %v2379
    %2454 = vmatprep.subr.mxu0 0.0
    %2455 = vmatpush1.msra.mxu0 %v2380
    %2456 = vmatprep.subr.mxu0 0.0
    %2457 = vmatpush1.msra.mxu0 %v2381
    %2458 = vmatprep.subr.mxu0 0.0
    %2459 = vmatpush1.msra.mxu0 %v2382
    %2460 = vmatprep.subr.mxu0 0.0
    %2461 = vmatpush1.msra.mxu0 %v2383
    %2462 = vmatprep.subr.mxu0 0.0
    %2463 = vmatpush1.msra.mxu0 %v2384
    %2464 = vmatprep.subr.mxu0 0.0
    %2465 = vmatpush1.msra.mxu0 %v2385
    %2466 = vmatprep.subr.mxu0 0.0
    %2467 = vmatpush1.msra.mxu0 %v2386
    %2468 = vmatprep.subr.mxu0 0.0
    %2469 = vmatpush1.msra.mxu0 %v2387
    %2470 = vmatprep.subr.mxu0 0.0
    %2471 = vmatpush1.msra.mxu0 %v2388
    %2472 = vmatprep.subr.mxu0 0.0
    %2473 = vmatpush1.msra.mxu0 %v2389
    %2474 = vmatprep.subr.mxu0 0.0
    %2475 = vmatpush1.msra.mxu0 %v2390
    %2476 = vmatprep.subr.mxu0 0.0
    %2477 = vmatpush1.msra.mxu0 %v2391
    %2478 = vmatprep.subr.mxu0 0.0
    %2479 = vmatpush1.msra.mxu0 %v2392
    %2480 = vmatprep.subr.mxu0 0.0
    %2481 = vmatpush1.msra.mxu0 %v2393
    %2482 = vmatprep.mubr.f32.mxu0 %v2412
    %2483 = vmatmul.mubr.f32.gmra.mrb[0].mxu0 %v2411
    %v2484 = vpop.f32.mrb[0].mxu0
    %v2485 = vadd.f32 0.0, %v2484
    %v2486 = vpop.f32.mrb[0].mxu0
    %2487 = vdwg.mxu0
    %2488 = vmatprep.subr.mxu0 0.0
    %2489 = vmatpush1.msra.mxu0 %v2394
    %2490 = vmatprep.subr.mxu0 0.0
    %2491 = vmatpush1.msra.mxu0 %v2395
    %2492 = vmatprep.subr.mxu0 0.0
    %2493 = vmatpush1.msra.mxu0 %v2396
    %2494 = vmatprep.subr.mxu0 0.0
    %2495 = vmatpush1.msra.mxu0 %v2397
    %2496 = vmatprep.subr.mxu0 0.0
    %2497 = vmatpush1.msra.mxu0 %v2398
    %2498 = vmatprep.subr.mxu0 0.0
    %2499 = vmatpush1.msra.mxu0 %v2399
    %2500 = vmatprep.subr.mxu0 0.0
    %2501 = vmatpush1.msra.mxu0 %v2400
    %2502 = vmatprep.subr.mxu0 0.0
    %2503 = vmatpush1.msra.mxu0 %v2401
    %2504 = vmatprep.subr.mxu0 0.0
    %2505 = vmatpush1.msra.mxu0 %v2402
    %2506 = vmatprep.subr.mxu0 0.0
    %2507 = vmatpush1.msra.mxu0 %v2403
    %2508 = vmatprep.subr.mxu0 0.0
    %2509 = vmatpush1.msra.mxu0 %v2404
    %2510 = vmatprep.subr.mxu0 0.0
    %2511 = vmatpush1.msra.mxu0 %v2405
    %2512 = vmatprep.subr.mxu0 0.0
    %2513 = vmatpush1.msra.mxu0 %v2406
    %2514 = vmatprep.subr.mxu0 0.0
    %2515 = vmatpush1.msra.mxu0 %v2407
    %2516 = vmatprep.subr.mxu0 0.0
    %2517 = vmatpush1.msra.mxu0 0.0
    %2518 = vmatprep.subr.mxu0 0.0
    %2519 = vmatpush1.msra.mxu0 0.0
    %2520 = vmatprep.subr.mxu0 0.0
    %2521 = vmatpush1.msra.mxu0 0.0
    %2522 = vmatprep.subr.mxu0 0.0
    %2523 = vmatpush1.msra.mxu0 0.0
    %2524 = vmatprep.subr.mxu0 0.0
    %2525 = vmatpush1.msra.mxu0 0.0
    %2526 = vmatprep.subr.mxu0 0.0
    %2527 = vmatpush1.msra.mxu0 0.0
    %2528 = vmatprep.subr.mxu0 0.0
    %2529 = vmatpush1.msra.mxu0 0.0
    %2530 = vmatprep.subr.mxu0 0.0
    %2531 = vmatpush1.msra.mxu0 0.0
    %2532 = vmatprep.subr.mxu0 0.0
    %2533 = vmatpush1.msra.mxu0 0.0
    %2534 = vmatprep.subr.mxu0 0.0
    %2535 = vmatpush1.msra.mxu0 0.0
    %2536 = vmatprep.subr.mxu0 0.0
    %2537 = vmatpush1.msra.mxu0 0.0
    %2538 = vmatprep.subr.mxu0 0.0
    %2539 = vmatpush1.msra.mxu0 0.0
    %2540 = vmatprep.subr.mxu0 0.0
    %2541 = vmatpush1.msra.mxu0 0.0
    %2542 = vmatprep.subr.mxu0 0.0
    %2543 = vmatpush1.msra.mxu0 0.0
    %2544 = vmatprep.subr.mxu0 0.0
    %2545 = vmatpush1.msra.mxu0 0.0
    %2546 = vmatprep.subr.mxu0 0.0
    %2547 = vmatpush1.msra.mxu0 0.0
    %2548 = vmatprep.subr.mxu0 0.0
    %2549 = vmatpush1.msra.mxu0 0.0
    %2550 = vmatprep.subr.mxu0 0.0
    %2551 = vmatpush1.msra.mxu0 0.0
    %2552 = vmatprep.mubr.f32.mxu0 0.0
    %2553 = vmatmul.mubr.f32.gmra.mrb[0].mxu0 %v2416
    %v2554 = vpop.f32.mrb[0].mxu0
    %v2555 = vadd.f32 %v2485, %v2554
    %v2556 = vpop.f32.mrb[0].mxu0
    %2557 = vdwg.mxu0
    %v2558 = vsel %vm2281, %v2308, 0
    %2560 = vmatprep.subr.mxu0 0.0
    %2561 = vmatpush1.msra.mxu0 %v2315
    %2562 = vmatprep.subr.mxu0 0.0
    %2563 = vmatpush1.msra.mxu0 %v2316
    %2564 = vmatprep.subr.mxu0 0.0
    %2565 = vmatpush1.msra.mxu0 %v2317
    %2566 = vmatprep.subr.mxu0 0.0
    %2567 = vmatpush1.msra.mxu0 %v2318
    %2568 = vmatprep.subr.mxu0 0.0
    %2569 = vmatpush1.msra.mxu0 %v2319
    %2570 = vmatprep.subr.mxu0 0.0
    %2571 = vmatpush1.msra.mxu0 %v2320
    %2572 = vmatprep.subr.mxu0 0.0
    %2573 = vmatpush1.msra.mxu0 %v2321
    %2574 = vmatprep.subr.mxu0 0.0
    %2575 = vmatpush1.msra.mxu0 %v2322
    %2576 = vmatprep.subr.mxu0 0.0
    %2577 = vmatpush1.msra.mxu0 %v2323
    %2578 = vmatprep.subr.mxu0 0.0
    %2579 = vmatpush1.msra.mxu0 %v2324
    %2580 = vmatprep.subr.mxu0 0.0
    %2581 = vmatpush1.msra.mxu0 %v2325
    %2582 = vmatprep.subr.mxu0 0.0
    %2583 = vmatpush1.msra.mxu0 %v2326
    %2584 = vmatprep.subr.mxu0 0.0
    %2585 = vmatpush1.msra.mxu0 %v2327
    %2586 = vmatprep.subr.mxu0 0.0
    %2587 = vmatpush1.msra.mxu0 %v2328
    %2588 = vmatprep.subr.mxu0 0.0
    %2589 = vmatpush1.msra.mxu0 %v2329
    %2590 = vmatprep.subr.mxu0 0.0
    %2591 = vmatpush1.msra.mxu0 %v2330
    %2592 = vmatprep.subr.mxu0 0.0
    %2593 = vmatpush1.msra.mxu0 %v2331
    %2594 = vmatprep.subr.mxu0 0.0
    %2595 = vmatpush1.msra.mxu0 %v2332
    %2596 = vmatprep.subr.mxu0 0.0
    %2597 = vmatpush1.msra.mxu0 %v2333
    %2598 = vmatprep.subr.mxu0 0.0
    %2599 = vmatpush1.msra.mxu0 %v2334
    %2600 = vmatprep.subr.mxu0 0.0
    %2601 = vmatpush1.msra.mxu0 %v2335
    %2602 = vmatprep.subr.mxu0 0.0
    %2603 = vmatpush1.msra.mxu0 %v2336
    %2604 = vmatprep.subr.mxu0 0.0
    %2605 = vmatpush1.msra.mxu0 %v2337
    %2606 = vmatprep.subr.mxu0 0.0
    %2607 = vmatpush1.msra.mxu0 %v2338
    %2608 = vmatprep.subr.mxu0 0.0
    %2609 = vmatpush1.msra.mxu0 %v2339
    %2610 = vmatprep.subr.mxu0 0.0
    %2611 = vmatpush1.msra.mxu0 %v2340
    %2612 = vmatprep.subr.mxu0 0.0
    %2613 = vmatpush1.msra.mxu0 %v2341
    %2614 = vmatprep.subr.mxu0 0.0
    %2615 = vmatpush1.msra.mxu0 %v2342
    %2616 = vmatprep.subr.mxu0 0.0
    %2617 = vmatpush1.msra.mxu0 %v2343
    %2618 = vmatprep.subr.mxu0 0.0
    %2619 = vmatpush1.msra.mxu0 %v2344
    %2620 = vmatprep.subr.mxu0 0.0
    %2621 = vmatpush1.msra.mxu0 %v2345
    %2622 = vmatprep.subr.mxu0 0.0
    %2623 = vmatpush1.msra.mxu0 %v2346
    %2624 = vmatprep.mubr.f32.mxu0 %v2307
    %2625 = vmatmul.mubr.f32.gmra.mrb[0].mxu0 %v2306
    %v2626 = vpop.f32.mrb[0].mxu0
    %v2627 = vadd.f32 %v2555, %v2626
    %v2628 = vpop.f32.mrb[0].mxu0
    %2629 = vdwg.mxu0
    %2630 = vmatprep.subr.mxu0 0.0
    %2631 = vmatpush1.msra.mxu0 %v2347
    %2632 = vmatprep.subr.mxu0 0.0
    %2633 = vmatpush1.msra.mxu0 %v2348
    %2634 = vmatprep.subr.mxu0 0.0
    %2635 = vmatpush1.msra.mxu0 %v2349
    %2636 = vmatprep.subr.mxu0 0.0
    %2637 = vmatpush1.msra.mxu0 %v2350
    %2638 = vmatprep.subr.mxu0 0.0
    %2639 = vmatpush1.msra.mxu0 %v2351
    %2640 = vmatprep.subr.mxu0 0.0
    %2641 = vmatpush1.msra.mxu0 %v2352
    %2642 = vmatprep.subr.mxu0 0.0
    %2643 = vmatpush1.msra.mxu0 %v2353
    %2644 = vmatprep.subr.mxu0 0.0
    %2645 = vmatpush1.msra.mxu0 %v2354
    %2646 = vmatprep.subr.mxu0 0.0
    %2647 = vmatpush1.msra.mxu0 %v2355
    %2648 = vmatprep.subr.mxu0 0.0
    %2649 = vmatpush1.msra.mxu0 %v2356
    %2650 = vmatprep.subr.mxu0 0.0
    %2651 = vmatpush1.msra.mxu0 %v2357
    %2652 = vmatprep.subr.mxu0 0.0
    %2653 = vmatpush1.msra.mxu0 %v2358
    %2654 = vmatprep.subr.mxu0 0.0
    %2655 = vmatpush1.msra.mxu0 %v2359
    %2656 = vmatprep.subr.mxu0 0.0
    %2657 = vmatpush1.msra.mxu0 %v2360
    %2658 = vmatprep.subr.mxu0 0.0
    %2659 = vmatpush1.msra.mxu0 0.0
    %2660 = vmatprep.subr.mxu0 0.0
    %2661 = vmatpush1.msra.mxu0 0.0
    %2662 = vmatprep.subr.mxu0 0.0
    %2663 = vmatpush1.msra.mxu0 0.0
    %2664 = vmatprep.subr.mxu0 0.0
    %2665 = vmatpush1.msra.mxu0 0.0
    %2666 = vmatprep.subr.mxu0 0.0
    %2667 = vmatpush1.msra.mxu0 0.0
    %2668 = vmatprep.subr.mxu0 0.0
    %2669 = vmatpush1.msra.mxu0 0.0
    %2670 = vmatprep.subr.mxu0 0.0
    %2671 = vmatpush1.msra.mxu0 0.0
    %2672 = vmatprep.subr.mxu0 0.0
    %2673 = vmatpush1.msra.mxu0 0.0
    %2674 = vmatprep.subr.mxu0 0.0
    %2675 = vmatpush1.msra.mxu0 0.0
    %2676 = vmatprep.subr.mxu0 0.0
    %2677 = vmatpush1.msra.mxu0 0.0
    %2678 = vmatprep.subr.mxu0 0.0
    %2679 = vmatpush1.msra.mxu0 0.0
    %2680 = vmatprep.subr.mxu0 0.0
    %2681 = vmatpush1.msra.mxu0 0.0
    %2682 = vmatprep.subr.mxu0 0.0
    %2683 = vmatpush1.msra.mxu0 0.0
    %2684 = vmatprep.subr.mxu0 0.0
    %2685 = vmatpush1.msra.mxu0 0.0
    %2686 = vmatprep.subr.mxu0 0.0
    %2687 = vmatpush1.msra.mxu0 0.0
    %2688 = vmatprep.subr.mxu0 0.0
    %2689 = vmatpush1.msra.mxu0 0.0
    %2690 = vmatprep.subr.mxu0 0.0
    %2691 = vmatpush1.msra.mxu0 0.0
    %2692 = vmatprep.subr.mxu0 0.0
    %2693 = vmatpush1.msra.mxu0 0.0
    %2694 = vmatprep.mubr.f32.mxu0 0.0
    %2695 = vmatmul.mubr.f32.gmra.mrb[0].mxu0 %v2558
    %v2696 = vpop.f32.mrb[0].mxu0
    %v2697 = vadd.f32 %v2627, %v2696
    %v2698 = vpop.f32.mrb[0].mxu0
    %2699 = vdwg.mxu0
    %s2700 = scalar_lea.vmem [#allocation7], 736
    %v2701 = vld [vmem:[%s2700] sm:$0xff]
    %v2702 = vld [vmem:[%s2700 + $0x8] sm:$0xff]
    %v2703 = vld [vmem:[%s2700 + $0x10] sm:$0xff]
    %v2704 = vld [vmem:[%s2700 + $0x18] sm:$0xff]
    %v2705 = vld [vmem:[%s2700 + $0x20] sm:$0xff]
    %v2706 = vld [vmem:[%s2700 + $0x28] sm:$0xff]
    %v2707 = vld [vmem:[%s2700 + $0x30] sm:$0xff]
    %v2708 = vld [vmem:[%s2700 + $0x38] sm:$0xff]
    %v2709 = vld [vmem:[%s2700 + $0x40] sm:$0xff]
    %v2710 = vld [vmem:[%s2700 + $0x48] sm:$0xff]
    %v2711 = vld [vmem:[%s2700 + $0x50] sm:$0xff]
    %v2712 = vld [vmem:[%s2700 + $0x58] sm:$0xff]
    %v2713 = vld [vmem:[%s2700 + $0x60] sm:$0xff]
    %v2714 = vld [vmem:[%s2700 + $0x68] sm:$0xff]
    %v2715 = vld [vmem:[%s2700 + $0x70] sm:$0xff]
    %v2716 = vld [vmem:[%s2700 + $0x78] sm:$0xff]
    %v2717 = vld [vmem:[%s2700 + $0x80] sm:$0xff]
    %v2718 = vld [vmem:[%s2700 + $0x88] sm:$0xff]
    %v2719 = vld [vmem:[%s2700 + $0x90] sm:$0xff]
    %v2720 = vld [vmem:[%s2700 + $0x98] sm:$0xff]
    %v2721 = vld [vmem:[%s2700 + $0xa0] sm:$0xff]
    %v2722 = vld [vmem:[%s2700 + $0xa8] sm:$0xff]
    %v2723 = vld [vmem:[%s2700 + $0xb0] sm:$0xff]
    %v2724 = vld [vmem:[%s2700 + $0xb8] sm:$0xff]
    %v2725 = vld [vmem:[%s2700 + $0xc0] sm:$0xff]
    %v2726 = vld [vmem:[%s2700 + $0xc8] sm:$0xff]
    %v2727 = vld [vmem:[%s2700 + $0xd0] sm:$0xff]
    %v2728 = vld [vmem:[%s2700 + $0xd8] sm:$0xff]
    %v2729 = vld [vmem:[%s2700 + $0xe0] sm:$0xff]
    %v2730 = vld [vmem:[%s2700 + $0xe8] sm:$0xff]
    %v2731 = vld [vmem:[%s2700 + $0xf0] sm:$0xff]
    %v2732 = vld [vmem:[%s2700 + $0xf8] sm:$0xff]
    %v2733 = vld [vmem:[%s2700 + $0x100] sm:$0xff]
    %v2734 = vld [vmem:[%s2700 + $0x108] sm:$0xff]
    %v2735 = vld [vmem:[%s2700 + $0x110] sm:$0xff]
    %v2736 = vld [vmem:[%s2700 + $0x118] sm:$0xff]
    %v2737 = vld [vmem:[%s2700 + $0x120] sm:$0xff]
    %v2738 = vld [vmem:[%s2700 + $0x128] sm:$0xff]
    %v2739 = vld [vmem:[%s2700 + $0x130] sm:$0xff]
    %v2740 = vld [vmem:[%s2700 + $0x138] sm:$0xff]
    %v2741 = vld [vmem:[%s2700 + $0x140] sm:$0xff]
    %v2742 = vld [vmem:[%s2700 + $0x148] sm:$0xff]
    %v2743 = vld [vmem:[%s2700 + $0x150] sm:$0xff]
    %v2744 = vld [vmem:[%s2700 + $0x158] sm:$0xff]
    %v2745 = vld [vmem:[%s2700 + $0x160] sm:$0xff]
    %v2746 = vld [vmem:[%s2700 + $0x168] sm:$0xff]
    %v2747 = vrot.slane %v2306, 4
    %v2748 = vrot.slane %v2307, 4
    %v2749 = vrot.slane %v2308, 4
    %v2752 = vsel %vm2281, %v2749, 0
    %2754 = vmatprep.subr.mxu0 0.0
    %2755 = vmatpush1.msra.mxu0 %v2701
    %2756 = vmatprep.subr.mxu0 0.0
    %2757 = vmatpush1.msra.mxu0 %v2702
    %2758 = vmatprep.subr.mxu0 0.0
    %2759 = vmatpush1.msra.mxu0 %v2703
    %2760 = vmatprep.subr.mxu0 0.0
    %2761 = vmatpush1.msra.mxu0 %v2704
    %2762 = vmatprep.subr.mxu0 0.0
    %2763 = vmatpush1.msra.mxu0 %v2705
    %2764 = vmatprep.subr.mxu0 0.0
    %2765 = vmatpush1.msra.mxu0 %v2706
    %2766 = vmatprep.subr.mxu0 0.0
    %2767 = vmatpush1.msra.mxu0 %v2707
    %2768 = vmatprep.subr.mxu0 0.0
    %2769 = vmatpush1.msra.mxu0 %v2708
    %2770 = vmatprep.subr.mxu0 0.0
    %2771 = vmatpush1.msra.mxu0 %v2709
    %2772 = vmatprep.subr.mxu0 0.0
    %2773 = vmatpush1.msra.mxu0 %v2710
    %2774 = vmatprep.subr.mxu0 0.0
    %2775 = vmatpush1.msra.mxu0 %v2711
    %2776 = vmatprep.subr.mxu0 0.0
    %2777 = vmatpush1.msra.mxu0 %v2712
    %2778 = vmatprep.subr.mxu0 0.0
    %2779 = vmatpush1.msra.mxu0 %v2713
    %2780 = vmatprep.subr.mxu0 0.0
    %2781 = vmatpush1.msra.mxu0 %v2714
    %2782 = vmatprep.subr.mxu0 0.0
    %2783 = vmatpush1.msra.mxu0 %v2715
    %2784 = vmatprep.subr.mxu0 0.0
    %2785 = vmatpush1.msra.mxu0 %v2716
    %2786 = vmatprep.subr.mxu0 0.0
    %2787 = vmatpush1.msra.mxu0 %v2717
    %2788 = vmatprep.subr.mxu0 0.0
    %2789 = vmatpush1.msra.mxu0 %v2718
    %2790 = vmatprep.subr.mxu0 0.0
    %2791 = vmatpush1.msra.mxu0 %v2719
    %2792 = vmatprep.subr.mxu0 0.0
    %2793 = vmatpush1.msra.mxu0 %v2720
    %2794 = vmatprep.subr.mxu0 0.0
    %2795 = vmatpush1.msra.mxu0 %v2721
    %2796 = vmatprep.subr.mxu0 0.0
    %2797 = vmatpush1.msra.mxu0 %v2722
    %2798 = vmatprep.subr.mxu0 0.0
    %2799 = vmatpush1.msra.mxu0 %v2723
    %2800 = vmatprep.subr.mxu0 0.0
    %2801 = vmatpush1.msra.mxu0 %v2724
    %2802 = vmatprep.subr.mxu0 0.0
    %2803 = vmatpush1.msra.mxu0 %v2725
    %2804 = vmatprep.subr.mxu0 0.0
    %2805 = vmatpush1.msra.mxu0 %v2726
    %2806 = vmatprep.subr.mxu0 0.0
    %2807 = vmatpush1.msra.mxu0 %v2727
    %2808 = vmatprep.subr.mxu0 0.0
    %2809 = vmatpush1.msra.mxu0 %v2728
    %2810 = vmatprep.subr.mxu0 0.0
    %2811 = vmatpush1.msra.mxu0 %v2729
    %2812 = vmatprep.subr.mxu0 0.0
    %2813 = vmatpush1.msra.mxu0 %v2730
    %2814 = vmatprep.subr.mxu0 0.0
    %2815 = vmatpush1.msra.mxu0 %v2731
    %2816 = vmatprep.subr.mxu0 0.0
    %2817 = vmatpush1.msra.mxu0 %v2732
    %2818 = vmatprep.mubr.f32.mxu0 %v2748
    %2819 = vmatmul.mubr.f32.gmra.mrb[0].mxu0 %v2747
    %v2820 = vpop.f32.mrb[0].mxu0
    %v2821 = vadd.f32 0.0, %v2820
    %v2822 = vpop.f32.mrb[0].mxu0
    %2823 = vdwg.mxu0
    %2824 = vmatprep.subr.mxu0 0.0
    %2825 = vmatpush1.msra.mxu0 %v2733
    %2826 = vmatprep.subr.mxu0 0.0
    %2827 = vmatpush1.msra.mxu0 %v2734
    %2828 = vmatprep.subr.mxu0 0.0
    %2829 = vmatpush1.msra.mxu0 %v2735
    %2830 = vmatprep.subr.mxu0 0.0
    %2831 = vmatpush1.msra.mxu0 %v2736
    %2832 = vmatprep.subr.mxu0 0.0
    %2833 = vmatpush1.msra.mxu0 %v2737
    %2834 = vmatprep.subr.mxu0 0.0
    %2835 = vmatpush1.msra.mxu0 %v2738
    %2836 = vmatprep.subr.mxu0 0.0
    %2837 = vmatpush1.msra.mxu0 %v2739
    %2838 = vmatprep.subr.mxu0 0.0
    %2839 = vmatpush1.msra.mxu0 %v2740
    %2840 = vmatprep.subr.mxu0 0.0
    %2841 = vmatpush1.msra.mxu0 %v2741
    %2842 = vmatprep.subr.mxu0 0.0
    %2843 = vmatpush1.msra.mxu0 %v2742
    %2844 = vmatprep.subr.mxu0 0.0
    %2845 = vmatpush1.msra.mxu0 %v2743
    %2846 = vmatprep.subr.mxu0 0.0
    %2847 = vmatpush1.msra.mxu0 %v2744
    %2848 = vmatprep.subr.mxu0 0.0
    %2849 = vmatpush1.msra.mxu0 %v2745
    %2850 = vmatprep.subr.mxu0 0.0
    %2851 = vmatpush1.msra.mxu0 %v2746
    %2852 = vmatprep.subr.mxu0 0.0
    %2853 = vmatpush1.msra.mxu0 0.0
    %2854 = vmatprep.subr.mxu0 0.0
    %2855 = vmatpush1.msra.mxu0 0.0
    %2856 = vmatprep.subr.mxu0 0.0
    %2857 = vmatpush1.msra.mxu0 0.0
    %2858 = vmatprep.subr.mxu0 0.0
    %2859 = vmatpush1.msra.mxu0 0.0
    %2860 = vmatprep.subr.mxu0 0.0
    %2861 = vmatpush1.msra.mxu0 0.0
    %2862 = vmatprep.subr.mxu0 0.0
    %2863 = vmatpush1.msra.mxu0 0.0
    %2864 = vmatprep.subr.mxu0 0.0
    %2865 = vmatpush1.msra.mxu0 0.0
    %2866 = vmatprep.subr.mxu0 0.0
    %2867 = vmatpush1.msra.mxu0 0.0
    %2868 = vmatprep.subr.mxu0 0.0
    %2869 = vmatpush1.msra.mxu0 0.0
    %2870 = vmatprep.subr.mxu0 0.0
    %2871 = vmatpush1.msra.mxu0 0.0
    %2872 = vmatprep.subr.mxu0 0.0
    %2873 = vmatpush1.msra.mxu0 0.0
    %2874 = vmatprep.subr.mxu0 0.0
    %2875 = vmatpush1.msra.mxu0 0.0
    %2876 = vmatprep.subr.mxu0 0.0
    %2877 = vmatpush1.msra.mxu0 0.0
    %2878 = vmatprep.subr.mxu0 0.0
    %2879 = vmatpush1.msra.mxu0 0.0
    %2880 = vmatprep.subr.mxu0 0.0
    %2881 = vmatpush1.msra.mxu0 0.0
    %2882 = vmatprep.subr.mxu0 0.0
    %2883 = vmatpush1.msra.mxu0 0.0
    %2884 = vmatprep.subr.mxu0 0.0
    %2885 = vmatpush1.msra.mxu0 0.0
    %2886 = vmatprep.subr.mxu0 0.0
    %2887 = vmatpush1.msra.mxu0 0.0
    %2888 = vmatprep.mubr.f32.mxu0 0.0
    %2889 = vmatmul.mubr.f32.gmra.mrb[0].mxu0 %v2752
    %v2890 = vpop.f32.mrb[0].mxu0
    %v2891 = vadd.f32 %v2821, %v2890
    %v2892 = vpop.f32.mrb[0].mxu0
    %2893 = vdwg.mxu0
    %v2894 = vadd.f32 %v2697, %v2891
    %s2895 = scalar_lea.vmem [#allocation7], 1104
    %v2896 = vld [vmem:[%s2895] sm:$0xff]
    %v2897 = vld [vmem:[%s2895 + $0x8] sm:$0xff]
    %v2898 = vld [vmem:[%s2895 + $0x10] sm:$0xff]
    %v2899 = vld [vmem:[%s2895 + $0x18] sm:$0xff]
    %v2900 = vld [vmem:[%s2895 + $0x20] sm:$0xff]
    %v2901 = vld [vmem:[%s2895 + $0x28] sm:$0xff]
    %v2902 = vld [vmem:[%s2895 + $0x30] sm:$0xff]
    %v2903 = vld [vmem:[%s2895 + $0x38] sm:$0xff]
    %v2904 = vld [vmem:[%s2895 + $0x40] sm:$0xff]
    %v2905 = vld [vmem:[%s2895 + $0x48] sm:$0xff]
    %v2906 = vld [vmem:[%s2895 + $0x50] sm:$0xff]
    %v2907 = vld [vmem:[%s2895 + $0x58] sm:$0xff]
    %v2908 = vld [vmem:[%s2895 + $0x60] sm:$0xff]
    %v2909 = vld [vmem:[%s2895 + $0x68] sm:$0xff]
    %v2910 = vld [vmem:[%s2895 + $0x70] sm:$0xff]
    %v2911 = vld [vmem:[%s2895 + $0x78] sm:$0xff]
    %v2912 = vld [vmem:[%s2895 + $0x80] sm:$0xff]
    %v2913 = vld [vmem:[%s2895 + $0x88] sm:$0xff]
    %v2914 = vld [vmem:[%s2895 + $0x90] sm:$0xff]
    %v2915 = vld [vmem:[%s2895 + $0x98] sm:$0xff]
    %v2916 = vld [vmem:[%s2895 + $0xa0] sm:$0xff]
    %v2917 = vld [vmem:[%s2895 + $0xa8] sm:$0xff]
    %v2918 = vld [vmem:[%s2895 + $0xb0] sm:$0xff]
    %v2919 = vld [vmem:[%s2895 + $0xb8] sm:$0xff]
    %v2920 = vld [vmem:[%s2895 + $0xc0] sm:$0xff]
    %v2921 = vld [vmem:[%s2895 + $0xc8] sm:$0xff]
    %v2922 = vld [vmem:[%s2895 + $0xd0] sm:$0xff]
    %v2923 = vld [vmem:[%s2895 + $0xd8] sm:$0xff]
    %v2924 = vld [vmem:[%s2895 + $0xe0] sm:$0xff]
    %v2925 = vld [vmem:[%s2895 + $0xe8] sm:$0xff]
    %v2926 = vld [vmem:[%s2895 + $0xf0] sm:$0xff]
    %v2927 = vld [vmem:[%s2895 + $0xf8] sm:$0xff]
    %v2928 = vld [vmem:[%s2895 + $0x100] sm:$0xff]
    %v2929 = vld [vmem:[%s2895 + $0x108] sm:$0xff]
    %v2930 = vld [vmem:[%s2895 + $0x110] sm:$0xff]
    %v2931 = vld [vmem:[%s2895 + $0x118] sm:$0xff]
    %v2932 = vld [vmem:[%s2895 + $0x120] sm:$0xff]
    %v2933 = vld [vmem:[%s2895 + $0x128] sm:$0xff]
    %v2934 = vld [vmem:[%s2895 + $0x130] sm:$0xff]
    %v2935 = vld [vmem:[%s2895 + $0x138] sm:$0xff]
    %v2936 = vld [vmem:[%s2895 + $0x140] sm:$0xff]
    %v2937 = vld [vmem:[%s2895 + $0x148] sm:$0xff]
    %v2938 = vld [vmem:[%s2895 + $0x150] sm:$0xff]
    %v2939 = vld [vmem:[%s2895 + $0x158] sm:$0xff]
    %v2940 = vld [vmem:[%s2895 + $0x160] sm:$0xff]
    %v2941 = vld [vmem:[%s2895 + $0x168] sm:$0xff]
    %v2942 = vrot.slane %v2306, 6
    %v2943 = vrot.slane %v2307, 6
    %v2944 = vrot.slane %v2308, 6
    %v2947 = vsel %vm2281, %v2944, 0
    %2949 = vmatprep.subr.mxu0 0.0
    %2950 = vmatpush1.msra.mxu0 %v2896
    %2951 = vmatprep.subr.mxu0 0.0
    %2952 = vmatpush1.msra.mxu0 %v2897
    %2953 = vmatprep.subr.mxu0 0.0
    %2954 = vmatpush1.msra.mxu0 %v2898
    %2955 = vmatprep.subr.mxu0 0.0
    %2956 = vmatpush1.msra.mxu0 %v2899
    %2957 = vmatprep.subr.mxu0 0.0
    %2958 = vmatpush1.msra.mxu0 %v2900
    %2959 = vmatprep.subr.mxu0 0.0
    %2960 = vmatpush1.msra.mxu0 %v2901
    %2961 = vmatprep.subr.mxu0 0.0
    %2962 = vmatpush1.msra.mxu0 %v2902
    %2963 = vmatprep.subr.mxu0 0.0
    %2964 = vmatpush1.msra.mxu0 %v2903
    %2965 = vmatprep.subr.mxu0 0.0
    %2966 = vmatpush1.msra.mxu0 %v2904
    %2967 = vmatprep.subr.mxu0 0.0
    %2968 = vmatpush1.msra.mxu0 %v2905
    %2969 = vmatprep.subr.mxu0 0.0
    %2970 = vmatpush1.msra.mxu0 %v2906
    %2971 = vmatprep.subr.mxu0 0.0
    %2972 = vmatpush1.msra.mxu0 %v2907
    %2973 = vmatprep.subr.mxu0 0.0
    %2974 = vmatpush1.msra.mxu0 %v2908
    %2975 = vmatprep.subr.mxu0 0.0
    %2976 = vmatpush1.msra.mxu0 %v2909
    %2977 = vmatprep.subr.mxu0 0.0
    %2978 = vmatpush1.msra.mxu0 %v2910
    %2979 = vmatprep.subr.mxu0 0.0
    %2980 = vmatpush1.msra.mxu0 %v2911
    %2981 = vmatprep.subr.mxu0 0.0
    %2982 = vmatpush1.msra.mxu0 %v2912
    %2983 = vmatprep.subr.mxu0 0.0
    %2984 = vmatpush1.msra.mxu0 %v2913
    %2985 = vmatprep.subr.mxu0 0.0
    %2986 = vmatpush1.msra.mxu0 %v2914
    %2987 = vmatprep.subr.mxu0 0.0
    %2988 = vmatpush1.msra.mxu0 %v2915
    %2989 = vmatprep.subr.mxu0 0.0
    %2990 = vmatpush1.msra.mxu0 %v2916
    %2991 = vmatprep.subr.mxu0 0.0
    %2992 = vmatpush1.msra.mxu0 %v2917
    %2993 = vmatprep.subr.mxu0 0.0
    %2994 = vmatpush1.msra.mxu0 %v2918
    %2995 = vmatprep.subr.mxu0 0.0
    %2996 = vmatpush1.msra.mxu0 %v2919
    %2997 = vmatprep.subr.mxu0 0.0
    %2998 = vmatpush1.msra.mxu0 %v2920
    %2999 = vmatprep.subr.mxu0 0.0
    %3000 = vmatpush1.msra.mxu0 %v2921
    %3001 = vmatprep.subr.mxu0 0.0
    %3002 = vmatpush1.msra.mxu0 %v2922
    %3003 = vmatprep.subr.mxu0 0.0
    %3004 = vmatpush1.msra.mxu0 %v2923
    %3005 = vmatprep.subr.mxu0 0.0
    %3006 = vmatpush1.msra.mxu0 %v2924
    %3007 = vmatprep.subr.mxu0 0.0
    %3008 = vmatpush1.msra.mxu0 %v2925
    %3009 = vmatprep.subr.mxu0 0.0
    %3010 = vmatpush1.msra.mxu0 %v2926
    %3011 = vmatprep.subr.mxu0 0.0
    %3012 = vmatpush1.msra.mxu0 %v2927
    %3013 = vmatprep.mubr.f32.mxu0 %v2943
    %3014 = vmatmul.mubr.f32.gmra.mrb[0].mxu0 %v2942
    %v3015 = vpop.f32.mrb[0].mxu0
    %v3016 = vadd.f32 0.0, %v3015
    %v3017 = vpop.f32.mrb[0].mxu0
    %3018 = vdwg.mxu0
    %3019 = vmatprep.subr.mxu0 0.0
    %3020 = vmatpush1.msra.mxu0 %v2928
    %3021 = vmatprep.subr.mxu0 0.0
    %3022 = vmatpush1.msra.mxu0 %v2929
    %3023 = vmatprep.subr.mxu0 0.0
    %3024 = vmatpush1.msra.mxu0 %v2930
    %3025 = vmatprep.subr.mxu0 0.0
    %3026 = vmatpush1.msra.mxu0 %v2931
    %3027 = vmatprep.subr.mxu0 0.0
    %3028 = vmatpush1.msra.mxu0 %v2932
    %3029 = vmatprep.subr.mxu0 0.0
    %3030 = vmatpush1.msra.mxu0 %v2933
    %3031 = vmatprep.subr.mxu0 0.0
    %3032 = vmatpush1.msra.mxu0 %v2934
    %3033 = vmatprep.subr.mxu0 0.0
    %3034 = vmatpush1.msra.mxu0 %v2935
    %3035 = vmatprep.subr.mxu0 0.0
    %3036 = vmatpush1.msra.mxu0 %v2936
    %3037 = vmatprep.subr.mxu0 0.0
    %3038 = vmatpush1.msra.mxu0 %v2937
    %3039 = vmatprep.subr.mxu0 0.0
    %3040 = vmatpush1.msra.mxu0 %v2938
    %3041 = vmatprep.subr.mxu0 0.0
    %3042 = vmatpush1.msra.mxu0 %v2939
    %3043 = vmatprep.subr.mxu0 0.0
    %3044 = vmatpush1.msra.mxu0 %v2940
    %3045 = vmatprep.subr.mxu0 0.0
    %3046 = vmatpush1.msra.mxu0 %v2941
    %3047 = vmatprep.subr.mxu0 0.0
    %3048 = vmatpush1.msra.mxu0 0.0
    %3049 = vmatprep.subr.mxu0 0.0
    %3050 = vmatpush1.msra.mxu0 0.0
    %3051 = vmatprep.subr.mxu0 0.0
    %3052 = vmatpush1.msra.mxu0 0.0
    %3053 = vmatprep.subr.mxu0 0.0
    %3054 = vmatpush1.msra.mxu0 0.0
    %3055 = vmatprep.subr.mxu0 0.0
    %3056 = vmatpush1.msra.mxu0 0.0
    %3057 = vmatprep.subr.mxu0 0.0
    %3058 = vmatpush1.msra.mxu0 0.0
    %3059 = vmatprep.subr.mxu0 0.0
    %3060 = vmatpush1.msra.mxu0 0.0
    %3061 = vmatprep.subr.mxu0 0.0
    %3062 = vmatpush1.msra.mxu0 0.0
    %3063 = vmatprep.subr.mxu0 0.0
    %3064 = vmatpush1.msra.mxu0 0.0
    %3065 = vmatprep.subr.mxu0 0.0
    %3066 = vmatpush1.msra.mxu0 0.0
    %3067 = vmatprep.subr.mxu0 0.0
    %3068 = vmatpush1.msra.mxu0 0.0
    %3069 = vmatprep.subr.mxu0 0.0
    %3070 = vmatpush1.msra.mxu0 0.0
    %3071 = vmatprep.subr.mxu0 0.0
    %3072 = vmatpush1.msra.mxu0 0.0
    %3073 = vmatprep.subr.mxu0 0.0
    %3074 = vmatpush1.msra.mxu0 0.0
    %3075 = vmatprep.subr.mxu0 0.0
    %3076 = vmatpush1.msra.mxu0 0.0
    %3077 = vmatprep.subr.mxu0 0.0
    %3078 = vmatpush1.msra.mxu0 0.0
    %3079 = vmatprep.subr.mxu0 0.0
    %3080 = vmatpush1.msra.mxu0 0.0
    %3081 = vmatprep.subr.mxu0 0.0
    %3082 = vmatpush1.msra.mxu0 0.0
    %3083 = vmatprep.mubr.f32.mxu0 0.0
    %3084 = vmatmul.mubr.f32.gmra.mrb[0].mxu0 %v2947
    %v3085 = vpop.f32.mrb[0].mxu0
    %v3086 = vadd.f32 %v3016, %v3085
    %v3087 = vpop.f32.mrb[0].mxu0
    %3088 = vdwg.mxu0
    %v3089 = vadd.f32 %v2894, %v3086
    %s3090 = scalar_lea.vmem [#allocation7], 1472
    %v3091 = vld [vmem:[%s3090] sm:$0xff]
    %v3092 = vld [vmem:[%s3090 + $0x8] sm:$0xff]
    %v3093 = vld [vmem:[%s3090 + $0x10] sm:$0xff]
    %v3094 = vld [vmem:[%s3090 + $0x18] sm:$0xff]
    %v3095 = vld [vmem:[%s3090 + $0x20] sm:$0xff]
    %v3096 = vld [vmem:[%s3090 + $0x28] sm:$0xff]
    %v3097 = vld [vmem:[%s3090 + $0x30] sm:$0xff]
    %v3098 = vld [vmem:[%s3090 + $0x38] sm:$0xff]
    %v3099 = vld [vmem:[%s3090 + $0x40] sm:$0xff]
    %v3100 = vld [vmem:[%s3090 + $0x48] sm:$0xff]
    %v3101 = vld [vmem:[%s3090 + $0x50] sm:$0xff]
    %v3102 = vld [vmem:[%s3090 + $0x58] sm:$0xff]
    %v3103 = vld [vmem:[%s3090 + $0x60] sm:$0xff]
    %v3104 = vld [vmem:[%s3090 + $0x68] sm:$0xff]
    %v3105 = vld [vmem:[%s3090 + $0x70] sm:$0xff]
    %v3106 = vld [vmem:[%s3090 + $0x78] sm:$0xff]
    %v3107 = vld [vmem:[%s3090 + $0x80] sm:$0xff]
    %v3108 = vld [vmem:[%s3090 + $0x88] sm:$0xff]
    %v3109 = vld [vmem:[%s3090 + $0x90] sm:$0xff]
    %v3110 = vld [vmem:[%s3090 + $0x98] sm:$0xff]
    %v3111 = vld [vmem:[%s3090 + $0xa0] sm:$0xff]
    %v3112 = vld [vmem:[%s3090 + $0xa8] sm:$0xff]
    %v3113 = vld [vmem:[%s3090 + $0xb0] sm:$0xff]
    %v3114 = vld [vmem:[%s3090 + $0xb8] sm:$0xff]
    %v3115 = vld [vmem:[%s3090 + $0xc0] sm:$0xff]
    %v3116 = vld [vmem:[%s3090 + $0xc8] sm:$0xff]
    %v3117 = vld [vmem:[%s3090 + $0xd0] sm:$0xff]
    %v3118 = vld [vmem:[%s3090 + $0xd8] sm:$0xff]
    %v3119 = vld [vmem:[%s3090 + $0xe0] sm:$0xff]
    %v3120 = vld [vmem:[%s3090 + $0xe8] sm:$0xff]
    %v3121 = vld [vmem:[%s3090 + $0xf0] sm:$0xff]
    %v3122 = vld [vmem:[%s3090 + $0xf8] sm:$0xff]
    %v3123 = vld [vmem:[%s3090 + $0x100] sm:$0xff]
    %v3124 = vld [vmem:[%s3090 + $0x108] sm:$0xff]
    %v3125 = vld [vmem:[%s3090 + $0x110] sm:$0xff]
    %v3126 = vld [vmem:[%s3090 + $0x118] sm:$0xff]
    %v3127 = vld [vmem:[%s3090 + $0x120] sm:$0xff]
    %v3128 = vld [vmem:[%s3090 + $0x128] sm:$0xff]
    %v3129 = vld [vmem:[%s3090 + $0x130] sm:$0xff]
    %v3130 = vld [vmem:[%s3090 + $0x138] sm:$0xff]
    %v3131 = vld [vmem:[%s3090 + $0x140] sm:$0xff]
    %v3132 = vld [vmem:[%s3090 + $0x148] sm:$0xff]
    %v3133 = vld [vmem:[%s3090 + $0x150] sm:$0xff]
    %v3134 = vld [vmem:[%s3090 + $0x158] sm:$0xff]
    %v3135 = vld [vmem:[%s3090 + $0x160] sm:$0xff]
    %v3136 = vld [vmem:[%s3090 + $0x168] sm:$0xff]
    %v3138 = vsel %vm2281, %v2311, 0
    %3140 = vmatprep.subr.mxu0 0.0
    %3141 = vmatpush1.msra.mxu0 %v3091
    %3142 = vmatprep.subr.mxu0 0.0
    %3143 = vmatpush1.msra.mxu0 %v3092
    %3144 = vmatprep.subr.mxu0 0.0
    %3145 = vmatpush1.msra.mxu0 %v3093
    %3146 = vmatprep.subr.mxu0 0.0
    %3147 = vmatpush1.msra.mxu0 %v3094
    %3148 = vmatprep.subr.mxu0 0.0
    %3149 = vmatpush1.msra.mxu0 %v3095
    %3150 = vmatprep.subr.mxu0 0.0
    %3151 = vmatpush1.msra.mxu0 %v3096
    %3152 = vmatprep.subr.mxu0 0.0
    %3153 = vmatpush1.msra.mxu0 %v3097
    %3154 = vmatprep.subr.mxu0 0.0
    %3155 = vmatpush1.msra.mxu0 %v3098
    %3156 = vmatprep.subr.mxu0 0.0
    %3157 = vmatpush1.msra.mxu0 %v3099
    %3158 = vmatprep.subr.mxu0 0.0
    %3159 = vmatpush1.msra.mxu0 %v3100
    %3160 = vmatprep.subr.mxu0 0.0
    %3161 = vmatpush1.msra.mxu0 %v3101
    %3162 = vmatprep.subr.mxu0 0.0
    %3163 = vmatpush1.msra.mxu0 %v3102
    %3164 = vmatprep.subr.mxu0 0.0
    %3165 = vmatpush1.msra.mxu0 %v3103
    %3166 = vmatprep.subr.mxu0 0.0
    %3167 = vmatpush1.msra.mxu0 %v3104
    %3168 = vmatprep.subr.mxu0 0.0
    %3169 = vmatpush1.msra.mxu0 %v3105
    %3170 = vmatprep.subr.mxu0 0.0
    %3171 = vmatpush1.msra.mxu0 %v3106
    %3172 = vmatprep.subr.mxu0 0.0
    %3173 = vmatpush1.msra.mxu0 %v3107
    %3174 = vmatprep.subr.mxu0 0.0
    %3175 = vmatpush1.msra.mxu0 %v3108
    %3176 = vmatprep.subr.mxu0 0.0
    %3177 = vmatpush1.msra.mxu0 %v3109
    %3178 = vmatprep.subr.mxu0 0.0
    %3179 = vmatpush1.msra.mxu0 %v3110
    %3180 = vmatprep.subr.mxu0 0.0
    %3181 = vmatpush1.msra.mxu0 %v3111
    %3182 = vmatprep.subr.mxu0 0.0
    %3183 = vmatpush1.msra.mxu0 %v3112
    %3184 = vmatprep.subr.mxu0 0.0
    %3185 = vmatpush1.msra.mxu0 %v3113
    %3186 = vmatprep.subr.mxu0 0.0
    %3187 = vmatpush1.msra.mxu0 %v3114
    %3188 = vmatprep.subr.mxu0 0.0
    %3189 = vmatpush1.msra.mxu0 %v3115
    %3190 = vmatprep.subr.mxu0 0.0
    %3191 = vmatpush1.msra.mxu0 %v3116
    %3192 = vmatprep.subr.mxu0 0.0
    %3193 = vmatpush1.msra.mxu0 %v3117
    %3194 = vmatprep.subr.mxu0 0.0
    %3195 = vmatpush1.msra.mxu0 %v3118
    %3196 = vmatprep.subr.mxu0 0.0
    %3197 = vmatpush1.msra.mxu0 %v3119
    %3198 = vmatprep.subr.mxu0 0.0
    %3199 = vmatpush1.msra.mxu0 %v3120
    %3200 = vmatprep.subr.mxu0 0.0
    %3201 = vmatpush1.msra.mxu0 %v3121
    %3202 = vmatprep.subr.mxu0 0.0
    %3203 = vmatpush1.msra.mxu0 %v3122
    %3204 = vmatprep.mubr.f32.mxu0 %v2310
    %3205 = vmatmul.mubr.f32.gmra.mrb[0].mxu0 %v2309
    %v3206 = vpop.f32.mrb[0].mxu0
    %v3207 = vadd.f32 0.0, %v3206
    %v3208 = vpop.f32.mrb[0].mxu0
    %3209 = vdwg.mxu0
    %3210 = vmatprep.subr.mxu0 0.0
    %3211 = vmatpush1.msra.mxu0 %v3123
    %3212 = vmatprep.subr.mxu0 0.0
    %3213 = vmatpush1.msra.mxu0 %v3124
    %3214 = vmatprep.subr.mxu0 0.0
    %3215 = vmatpush1.msra.mxu0 %v3125
    %3216 = vmatprep.subr.mxu0 0.0
    %3217 = vmatpush1.msra.mxu0 %v3126
    %3218 = vmatprep.subr.mxu0 0.0
    %3219 = vmatpush1.msra.mxu0 %v3127
    %3220 = vmatprep.subr.mxu0 0.0
    %3221 = vmatpush1.msra.mxu0 %v3128
    %3222 = vmatprep.subr.mxu0 0.0
    %3223 = vmatpush1.msra.mxu0 %v3129
    %3224 = vmatprep.subr.mxu0 0.0
    %3225 = vmatpush1.msra.mxu0 %v3130
    %3226 = vmatprep.subr.mxu0 0.0
    %3227 = vmatpush1.msra.mxu0 %v3131
    %3228 = vmatprep.subr.mxu0 0.0
    %3229 = vmatpush1.msra.mxu0 %v3132
    %3230 = vmatprep.subr.mxu0 0.0
    %3231 = vmatpush1.msra.mxu0 %v3133
    %3232 = vmatprep.subr.mxu0 0.0
    %3233 = vmatpush1.msra.mxu0 %v3134
    %3234 = vmatprep.subr.mxu0 0.0
    %3235 = vmatpush1.msra.mxu0 %v3135
    %3236 = vmatprep.subr.mxu0 0.0
    %3237 = vmatpush1.msra.mxu0 %v3136
    %3238 = vmatprep.subr.mxu0 0.0
    %3239 = vmatpush1.msra.mxu0 0.0
    %3240 = vmatprep.subr.mxu0 0.0
    %3241 = vmatpush1.msra.mxu0 0.0
    %3242 = vmatprep.subr.mxu0 0.0
    %3243 = vmatpush1.msra.mxu0 0.0
    %3244 = vmatprep.subr.mxu0 0.0
    %3245 = vmatpush1.msra.mxu0 0.0
    %3246 = vmatprep.subr.mxu0 0.0
    %3247 = vmatpush1.msra.mxu0 0.0
    %3248 = vmatprep.subr.mxu0 0.0
    %3249 = vmatpush1.msra.mxu0 0.0
    %3250 = vmatprep.subr.mxu0 0.0
    %3251 = vmatpush1.msra.mxu0 0.0
    %3252 = vmatprep.subr.mxu0 0.0
    %3253 = vmatpush1.msra.mxu0 0.0
    %3254 = vmatprep.subr.mxu0 0.0
    %3255 = vmatpush1.msra.mxu0 0.0
    %3256 = vmatprep.subr.mxu0 0.0
    %3257 = vmatpush1.msra.mxu0 0.0
    %3258 = vmatprep.subr.mxu0 0.0
    %3259 = vmatpush1.msra.mxu0 0.0
    %3260 = vmatprep.subr.mxu0 0.0
    %3261 = vmatpush1.msra.mxu0 0.0
    %3262 = vmatprep.subr.mxu0 0.0
    %3263 = vmatpush1.msra.mxu0 0.0
    %3264 = vmatprep.subr.mxu0 0.0
    %3265 = vmatpush1.msra.mxu0 0.0
    %3266 = vmatprep.subr.mxu0 0.0
    %3267 = vmatpush1.msra.mxu0 0.0
    %3268 = vmatprep.subr.mxu0 0.0
    %3269 = vmatpush1.msra.mxu0 0.0
    %3270 = vmatprep.subr.mxu0 0.0
    %3271 = vmatpush1.msra.mxu0 0.0
    %3272 = vmatprep.subr.mxu0 0.0
    %3273 = vmatpush1.msra.mxu0 0.0
    %3274 = vmatprep.mubr.f32.mxu0 0.0
    %3275 = vmatmul.mubr.f32.gmra.mrb[0].mxu0 %v3138
    %v3276 = vpop.f32.mrb[0].mxu0
    %v3277 = vadd.f32 %v3207, %v3276
    %v3278 = vpop.f32.mrb[0].mxu0
    %3279 = vdwg.mxu0
    %v3280 = vadd.f32 %v3089, %v3277
    %s3281 = scalar_lea.vmem [#allocation7], 1840
    %v3282 = vld [vmem:[%s3281] sm:$0xff]
    %v3283 = vld [vmem:[%s3281 + $0x8] sm:$0xff]
    %v3284 = vld [vmem:[%s3281 + $0x10] sm:$0xff]
    %v3285 = vld [vmem:[%s3281 + $0x18] sm:$0xff]
    %v3286 = vld [vmem:[%s3281 + $0x20] sm:$0xff]
    %v3287 = vld [vmem:[%s3281 + $0x28] sm:$0xff]
    %v3288 = vld [vmem:[%s3281 + $0x30] sm:$0xff]
    %v3289 = vld [vmem:[%s3281 + $0x38] sm:$0xff]
    %v3290 = vld [vmem:[%s3281 + $0x40] sm:$0xff]
    %v3291 = vld [vmem:[%s3281 + $0x48] sm:$0xff]
    %v3292 = vld [vmem:[%s3281 + $0x50] sm:$0xff]
    %v3293 = vld [vmem:[%s3281 + $0x58] sm:$0xff]
    %v3294 = vld [vmem:[%s3281 + $0x60] sm:$0xff]
    %v3295 = vld [vmem:[%s3281 + $0x68] sm:$0xff]
    %v3296 = vld [vmem:[%s3281 + $0x70] sm:$0xff]
    %v3297 = vld [vmem:[%s3281 + $0x78] sm:$0xff]
    %v3298 = vld [vmem:[%s3281 + $0x80] sm:$0xff]
    %v3299 = vld [vmem:[%s3281 + $0x88] sm:$0xff]
    %v3300 = vld [vmem:[%s3281 + $0x90] sm:$0xff]
    %v3301 = vld [vmem:[%s3281 + $0x98] sm:$0xff]
    %v3302 = vld [vmem:[%s3281 + $0xa0] sm:$0xff]
    %v3303 = vld [vmem:[%s3281 + $0xa8] sm:$0xff]
    %v3304 = vld [vmem:[%s3281 + $0xb0] sm:$0xff]
    %v3305 = vld [vmem:[%s3281 + $0xb8] sm:$0xff]
    %v3306 = vld [vmem:[%s3281 + $0xc0] sm:$0xff]
    %v3307 = vld [vmem:[%s3281 + $0xc8] sm:$0xff]
    %v3308 = vld [vmem:[%s3281 + $0xd0] sm:$0xff]
    %v3309 = vld [vmem:[%s3281 + $0xd8] sm:$0xff]
    %v3310 = vld [vmem:[%s3281 + $0xe0] sm:$0xff]
    %v3311 = vld [vmem:[%s3281 + $0xe8] sm:$0xff]
    %v3312 = vld [vmem:[%s3281 + $0xf0] sm:$0xff]
    %v3313 = vld [vmem:[%s3281 + $0xf8] sm:$0xff]
    %v3314 = vld [vmem:[%s3281 + $0x100] sm:$0xff]
    %v3315 = vld [vmem:[%s3281 + $0x108] sm:$0xff]
    %v3316 = vld [vmem:[%s3281 + $0x110] sm:$0xff]
    %v3317 = vld [vmem:[%s3281 + $0x118] sm:$0xff]
    %v3318 = vld [vmem:[%s3281 + $0x120] sm:$0xff]
    %v3319 = vld [vmem:[%s3281 + $0x128] sm:$0xff]
    %v3320 = vld [vmem:[%s3281 + $0x130] sm:$0xff]
    %v3321 = vld [vmem:[%s3281 + $0x138] sm:$0xff]
    %v3322 = vld [vmem:[%s3281 + $0x140] sm:$0xff]
    %v3323 = vld [vmem:[%s3281 + $0x148] sm:$0xff]
    %v3324 = vld [vmem:[%s3281 + $0x150] sm:$0xff]
    %v3325 = vld [vmem:[%s3281 + $0x158] sm:$0xff]
    %v3326 = vld [vmem:[%s3281 + $0x160] sm:$0xff]
    %v3327 = vld [vmem:[%s3281 + $0x168] sm:$0xff]
    %v3330 = vrot.slane %v2309, 2
    %v3331 = vrot.slane %v2310, 2
    %v3332 = vrot.slane %v2311, 2
    %v3335 = vsel %vm2281, %v3332, 0
    %3337 = vmatprep.subr.mxu0 0.0
    %3338 = vmatpush1.msra.mxu0 %v3282
    %3339 = vmatprep.subr.mxu0 0.0
    %3340 = vmatpush1.msra.mxu0 %v3283
    %3341 = vmatprep.subr.mxu0 0.0
    %3342 = vmatpush1.msra.mxu0 %v3284
    %3343 = vmatprep.subr.mxu0 0.0
    %3344 = vmatpush1.msra.mxu0 %v3285
    %3345 = vmatprep.subr.mxu0 0.0
    %3346 = vmatpush1.msra.mxu0 %v3286
    %3347 = vmatprep.subr.mxu0 0.0
    %3348 = vmatpush1.msra.mxu0 %v3287
    %3349 = vmatprep.subr.mxu0 0.0
    %3350 = vmatpush1.msra.mxu0 %v3288
    %3351 = vmatprep.subr.mxu0 0.0
    %3352 = vmatpush1.msra.mxu0 %v3289
    %3353 = vmatprep.subr.mxu0 0.0
    %3354 = vmatpush1.msra.mxu0 %v3290
    %3355 = vmatprep.subr.mxu0 0.0
    %3356 = vmatpush1.msra.mxu0 %v3291
    %3357 = vmatprep.subr.mxu0 0.0
    %3358 = vmatpush1.msra.mxu0 %v3292
    %3359 = vmatprep.subr.mxu0 0.0
    %3360 = vmatpush1.msra.mxu0 %v3293
    %3361 = vmatprep.subr.mxu0 0.0
    %3362 = vmatpush1.msra.mxu0 %v3294
    %3363 = vmatprep.subr.mxu0 0.0
    %3364 = vmatpush1.msra.mxu0 %v3295
    %3365 = vmatprep.subr.mxu0 0.0
    %3366 = vmatpush1.msra.mxu0 %v3296
    %3367 = vmatprep.subr.mxu0 0.0
    %3368 = vmatpush1.msra.mxu0 %v3297
    %3369 = vmatprep.subr.mxu0 0.0
    %3370 = vmatpush1.msra.mxu0 %v3298
    %3371 = vmatprep.subr.mxu0 0.0
    %3372 = vmatpush1.msra.mxu0 %v3299
    %3373 = vmatprep.subr.mxu0 0.0
    %3374 = vmatpush1.msra.mxu0 %v3300
    %3375 = vmatprep.subr.mxu0 0.0
    %3376 = vmatpush1.msra.mxu0 %v3301
    %3377 = vmatprep.subr.mxu0 0.0
    %3378 = vmatpush1.msra.mxu0 %v3302
    %3379 = vmatprep.subr.mxu0 0.0
    %3380 = vmatpush1.msra.mxu0 %v3303
    %3381 = vmatprep.subr.mxu0 0.0
    %3382 = vmatpush1.msra.mxu0 %v3304
    %3383 = vmatprep.subr.mxu0 0.0
    %3384 = vmatpush1.msra.mxu0 %v3305
    %3385 = vmatprep.subr.mxu0 0.0
    %3386 = vmatpush1.msra.mxu0 %v3306
    %3387 = vmatprep.subr.mxu0 0.0
    %3388 = vmatpush1.msra.mxu0 %v3307
    %3389 = vmatprep.subr.mxu0 0.0
    %3390 = vmatpush1.msra.mxu0 %v3308
    %3391 = vmatprep.subr.mxu0 0.0
    %3392 = vmatpush1.msra.mxu0 %v3309
    %3393 = vmatprep.subr.mxu0 0.0
    %3394 = vmatpush1.msra.mxu0 %v3310
    %3395 = vmatprep.subr.mxu0 0.0
    %3396 = vmatpush1.msra.mxu0 %v3311
    %3397 = vmatprep.subr.mxu0 0.0
    %3398 = vmatpush1.msra.mxu0 %v3312
    %3399 = vmatprep.subr.mxu0 0.0
    %3400 = vmatpush1.msra.mxu0 %v3313
    %3401 = vmatprep.mubr.f32.mxu0 %v3331
    %3402 = vmatmul.mubr.f32.gmra.mrb[0].mxu0 %v3330
    %v3403 = vpop.f32.mrb[0].mxu0
    %v3404 = vadd.f32 0.0, %v3403
    %v3405 = vpop.f32.mrb[0].mxu0
    %3406 = vdwg.mxu0
    %3407 = vmatprep.subr.mxu0 0.0
    %3408 = vmatpush1.msra.mxu0 %v3314
    %3409 = vmatprep.subr.mxu0 0.0
    %3410 = vmatpush1.msra.mxu0 %v3315
    %3411 = vmatprep.subr.mxu0 0.0
    %3412 = vmatpush1.msra.mxu0 %v3316
    %3413 = vmatprep.subr.mxu0 0.0
    %3414 = vmatpush1.msra.mxu0 %v3317
    %3415 = vmatprep.subr.mxu0 0.0
    %3416 = vmatpush1.msra.mxu0 %v3318
    %3417 = vmatprep.subr.mxu0 0.0
    %3418 = vmatpush1.msra.mxu0 %v3319
    %3419 = vmatprep.subr.mxu0 0.0
    %3420 = vmatpush1.msra.mxu0 %v3320
    %3421 = vmatprep.subr.mxu0 0.0
    %3422 = vmatpush1.msra.mxu0 %v3321
    %3423 = vmatprep.subr.mxu0 0.0
    %3424 = vmatpush1.msra.mxu0 %v3322
    %3425 = vmatprep.subr.mxu0 0.0
    %3426 = vmatpush1.msra.mxu0 %v3323
    %3427 = vmatprep.subr.mxu0 0.0
    %3428 = vmatpush1.msra.mxu0 %v3324
    %3429 = vmatprep.subr.mxu0 0.0
    %3430 = vmatpush1.msra.mxu0 %v3325
    %3431 = vmatprep.subr.mxu0 0.0
    %3432 = vmatpush1.msra.mxu0 %v3326
    %3433 = vmatprep.subr.mxu0 0.0
    %3434 = vmatpush1.msra.mxu0 %v3327
    %3435 = vmatprep.subr.mxu0 0.0
    %3436 = vmatpush1.msra.mxu0 0.0
    %3437 = vmatprep.subr.mxu0 0.0
    %3438 = vmatpush1.msra.mxu0 0.0
    %3439 = vmatprep.subr.mxu0 0.0
    %3440 = vmatpush1.msra.mxu0 0.0
    %3441 = vmatprep.subr.mxu0 0.0
    %3442 = vmatpush1.msra.mxu0 0.0
    %3443 = vmatprep.subr.mxu0 0.0
    %3444 = vmatpush1.msra.mxu0 0.0
    %3445 = vmatprep.subr.mxu0 0.0
    %3446 = vmatpush1.msra.mxu0 0.0
    %3447 = vmatprep.subr.mxu0 0.0
    %3448 = vmatpush1.msra.mxu0 0.0
    %3449 = vmatprep.subr.mxu0 0.0
    %3450 = vmatpush1.msra.mxu0 0.0
    %3451 = vmatprep.subr.mxu0 0.0
    %3452 = vmatpush1.msra.mxu0 0.0
    %3453 = vmatprep.subr.mxu0 0.0
    %3454 = vmatpush1.msra.mxu0 0.0
    %3455 = vmatprep.subr.mxu0 0.0
    %3456 = vmatpush1.msra.mxu0 0.0
    %3457 = vmatprep.subr.mxu0 0.0
    %3458 = vmatpush1.msra.mxu0 0.0
    %3459 = vmatprep.subr.mxu0 0.0
    %3460 = vmatpush1.msra.mxu0 0.0
    %3461 = vmatprep.subr.mxu0 0.0
    %3462 = vmatpush1.msra.mxu0 0.0
    %3463 = vmatprep.subr.mxu0 0.0
    %3464 = vmatpush1.msra.mxu0 0.0
    %3465 = vmatprep.subr.mxu0 0.0
    %3466 = vmatpush1.msra.mxu0 0.0
    %3467 = vmatprep.subr.mxu0 0.0
    %3468 = vmatpush1.msra.mxu0 0.0
    %3469 = vmatprep.subr.mxu0 0.0
    %3470 = vmatpush1.msra.mxu0 0.0
    %3471 = vmatprep.mubr.f32.mxu0 0.0
    %3472 = vmatmul.mubr.f32.gmra.mrb[0].mxu0 %v3335
    %v3473 = vpop.f32.mrb[0].mxu0
    %v3474 = vadd.f32 %v3404, %v3473
    %v3475 = vpop.f32.mrb[0].mxu0
    %3476 = vdwg.mxu0
    %v3477 = vadd.f32 %v3280, %v3474
    %s3478 = scalar_lea.vmem [#allocation7], 2208
    %v3479 = vld [vmem:[%s3478] sm:$0xff]
    %v3480 = vld [vmem:[%s3478 + $0x8] sm:$0xff]
    %v3481 = vld [vmem:[%s3478 + $0x10] sm:$0xff]
    %v3482 = vld [vmem:[%s3478 + $0x18] sm:$0xff]
    %v3483 = vld [vmem:[%s3478 + $0x20] sm:$0xff]
    %v3484 = vld [vmem:[%s3478 + $0x28] sm:$0xff]
    %v3485 = vld [vmem:[%s3478 + $0x30] sm:$0xff]
    %v3486 = vld [vmem:[%s3478 + $0x38] sm:$0xff]
    %v3487 = vld [vmem:[%s3478 + $0x40] sm:$0xff]
    %v3488 = vld [vmem:[%s3478 + $0x48] sm:$0xff]
    %v3489 = vld [vmem:[%s3478 + $0x50] sm:$0xff]
    %v3490 = vld [vmem:[%s3478 + $0x58] sm:$0xff]
    %v3491 = vld [vmem:[%s3478 + $0x60] sm:$0xff]
    %v3492 = vld [vmem:[%s3478 + $0x68] sm:$0xff]
    %v3493 = vld [vmem:[%s3478 + $0x70] sm:$0xff]
    %v3494 = vld [vmem:[%s3478 + $0x78] sm:$0xff]
    %v3495 = vld [vmem:[%s3478 + $0x80] sm:$0xff]
    %v3496 = vld [vmem:[%s3478 + $0x88] sm:$0xff]
    %v3497 = vld [vmem:[%s3478 + $0x90] sm:$0xff]
    %v3498 = vld [vmem:[%s3478 + $0x98] sm:$0xff]
    %v3499 = vld [vmem:[%s3478 + $0xa0] sm:$0xff]
    %v3500 = vld [vmem:[%s3478 + $0xa8] sm:$0xff]
    %v3501 = vld [vmem:[%s3478 + $0xb0] sm:$0xff]
    %v3502 = vld [vmem:[%s3478 + $0xb8] sm:$0xff]
    %v3503 = vld [vmem:[%s3478 + $0xc0] sm:$0xff]
    %v3504 = vld [vmem:[%s3478 + $0xc8] sm:$0xff]
    %v3505 = vld [vmem:[%s3478 + $0xd0] sm:$0xff]
    %v3506 = vld [vmem:[%s3478 + $0xd8] sm:$0xff]
    %v3507 = vld [vmem:[%s3478 + $0xe0] sm:$0xff]
    %v3508 = vld [vmem:[%s3478 + $0xe8] sm:$0xff]
    %v3509 = vld [vmem:[%s3478 + $0xf0] sm:$0xff]
    %v3510 = vld [vmem:[%s3478 + $0xf8] sm:$0xff]
    %v3511 = vld [vmem:[%s3478 + $0x100] sm:$0xff]
    %v3512 = vld [vmem:[%s3478 + $0x108] sm:$0xff]
    %v3513 = vld [vmem:[%s3478 + $0x110] sm:$0xff]
    %v3514 = vld [vmem:[%s3478 + $0x118] sm:$0xff]
    %v3515 = vld [vmem:[%s3478 + $0x120] sm:$0xff]
    %v3516 = vld [vmem:[%s3478 + $0x128] sm:$0xff]
    %v3517 = vld [vmem:[%s3478 + $0x130] sm:$0xff]
    %v3518 = vld [vmem:[%s3478 + $0x138] sm:$0xff]
    %v3519 = vld [vmem:[%s3478 + $0x140] sm:$0xff]
    %v3520 = vld [vmem:[%s3478 + $0x148] sm:$0xff]
    %v3521 = vld [vmem:[%s3478 + $0x150] sm:$0xff]
    %v3522 = vld [vmem:[%s3478 + $0x158] sm:$0xff]
    %v3523 = vld [vmem:[%s3478 + $0x160] sm:$0xff]
    %v3524 = vld [vmem:[%s3478 + $0x168] sm:$0xff]
    %v3525 = vrot.slane %v2309, 4
    %v3526 = vrot.slane %v2310, 4
    %v3527 = vrot.slane %v2311, 4
    %v3530 = vsel %vm2281, %v3527, 0
    %3532 = vmatprep.subr.mxu0 0.0
    %3533 = vmatpush1.msra.mxu0 %v3479
    %3534 = vmatprep.subr.mxu0 0.0
    %3535 = vmatpush1.msra.mxu0 %v3480
    %3536 = vmatprep.subr.mxu0 0.0
    %3537 = vmatpush1.msra.mxu0 %v3481
    %3538 = vmatprep.subr.mxu0 0.0
    %3539 = vmatpush1.msra.mxu0 %v3482
    %3540 = vmatprep.subr.mxu0 0.0
    %3541 = vmatpush1.msra.mxu0 %v3483
    %3542 = vmatprep.subr.mxu0 0.0
    %3543 = vmatpush1.msra.mxu0 %v3484
    %3544 = vmatprep.subr.mxu0 0.0
    %3545 = vmatpush1.msra.mxu0 %v3485
    %3546 = vmatprep.subr.mxu0 0.0
    %3547 = vmatpush1.msra.mxu0 %v3486
    %3548 = vmatprep.subr.mxu0 0.0
    %3549 = vmatpush1.msra.mxu0 %v3487
    %3550 = vmatprep.subr.mxu0 0.0
    %3551 = vmatpush1.msra.mxu0 %v3488
    %3552 = vmatprep.subr.mxu0 0.0
    %3553 = vmatpush1.msra.mxu0 %v3489
    %3554 = vmatprep.subr.mxu0 0.0
    %3555 = vmatpush1.msra.mxu0 %v3490
    %3556 = vmatprep.subr.mxu0 0.0
    %3557 = vmatpush1.msra.mxu0 %v3491
    %3558 = vmatprep.subr.mxu0 0.0
    %3559 = vmatpush1.msra.mxu0 %v3492
    %3560 = vmatprep.subr.mxu0 0.0
    %3561 = vmatpush1.msra.mxu0 %v3493
    %3562 = vmatprep.subr.mxu0 0.0
    %3563 = vmatpush1.msra.mxu0 %v3494
    %3564 = vmatprep.subr.mxu0 0.0
    %3565 = vmatpush1.msra.mxu0 %v3495
    %3566 = vmatprep.subr.mxu0 0.0
    %3567 = vmatpush1.msra.mxu0 %v3496
    %3568 = vmatprep.subr.mxu0 0.0
    %3569 = vmatpush1.msra.mxu0 %v3497
    %3570 = vmatprep.subr.mxu0 0.0
    %3571 = vmatpush1.msra.mxu0 %v3498
    %3572 = vmatprep.subr.mxu0 0.0
    %3573 = vmatpush1.msra.mxu0 %v3499
    %3574 = vmatprep.subr.mxu0 0.0
    %3575 = vmatpush1.msra.mxu0 %v3500
    %3576 = vmatprep.subr.mxu0 0.0
    %3577 = vmatpush1.msra.mxu0 %v3501
    %3578 = vmatprep.subr.mxu0 0.0
    %3579 = vmatpush1.msra.mxu0 %v3502
    %3580 = vmatprep.subr.mxu0 0.0
    %3581 = vmatpush1.msra.mxu0 %v3503
    %3582 = vmatprep.subr.mxu0 0.0
    %3583 = vmatpush1.msra.mxu0 %v3504
    %3584 = vmatprep.subr.mxu0 0.0
    %3585 = vmatpush1.msra.mxu0 %v3505
    %3586 = vmatprep.subr.mxu0 0.0
    %3587 = vmatpush1.msra.mxu0 %v3506
    %3588 = vmatprep.subr.mxu0 0.0
    %3589 = vmatpush1.msra.mxu0 %v3507
    %3590 = vmatprep.subr.mxu0 0.0
    %3591 = vmatpush1.msra.mxu0 %v3508
    %3592 = vmatprep.subr.mxu0 0.0
    %3593 = vmatpush1.msra.mxu0 %v3509
    %3594 = vmatprep.subr.mxu0 0.0
    %3595 = vmatpush1.msra.mxu0 %v3510
    %3596 = vmatprep.mubr.f32.mxu0 %v3526
    %3597 = vmatmul.mubr.f32.gmra.mrb[0].mxu0 %v3525
    %v3598 = vpop.f32.mrb[0].mxu0
    %v3599 = vadd.f32 0.0, %v3598
    %v3600 = vpop.f32.mrb[0].mxu0
    %3601 = vdwg.mxu0
    %3602 = vmatprep.subr.mxu0 0.0
    %3603 = vmatpush1.msra.mxu0 %v3511
    %3604 = vmatprep.subr.mxu0 0.0
    %3605 = vmatpush1.msra.mxu0 %v3512
    %3606 = vmatprep.subr.mxu0 0.0
    %3607 = vmatpush1.msra.mxu0 %v3513
    %3608 = vmatprep.subr.mxu0 0.0
    %3609 = vmatpush1.msra.mxu0 %v3514
    %3610 = vmatprep.subr.mxu0 0.0
    %3611 = vmatpush1.msra.mxu0 %v3515
    %3612 = vmatprep.subr.mxu0 0.0
    %3613 = vmatpush1.msra.mxu0 %v3516
    %3614 = vmatprep.subr.mxu0 0.0
    %3615 = vmatpush1.msra.mxu0 %v3517
    %3616 = vmatprep.subr.mxu0 0.0
    %3617 = vmatpush1.msra.mxu0 %v3518
    %3618 = vmatprep.subr.mxu0 0.0
    %3619 = vmatpush1.msra.mxu0 %v3519
    %3620 = vmatprep.subr.mxu0 0.0
    %3621 = vmatpush1.msra.mxu0 %v3520
    %3622 = vmatprep.subr.mxu0 0.0
    %3623 = vmatpush1.msra.mxu0 %v3521
    %3624 = vmatprep.subr.mxu0 0.0
    %3625 = vmatpush1.msra.mxu0 %v3522
    %3626 = vmatprep.subr.mxu0 0.0
    %3627 = vmatpush1.msra.mxu0 %v3523
    %3628 = vmatprep.subr.mxu0 0.0
    %3629 = vmatpush1.msra.mxu0 %v3524
    %3630 = vmatprep.subr.mxu0 0.0
    %3631 = vmatpush1.msra.mxu0 0.0
    %3632 = vmatprep.subr.mxu0 0.0
    %3633 = vmatpush1.msra.mxu0 0.0
    %3634 = vmatprep.subr.mxu0 0.0
    %3635 = vmatpush1.msra.mxu0 0.0
    %3636 = vmatprep.subr.mxu0 0.0
    %3637 = vmatpush1.msra.mxu0 0.0
    %3638 = vmatprep.subr.mxu0 0.0
    %3639 = vmatpush1.msra.mxu0 0.0
    %3640 = vmatprep.subr.mxu0 0.0
    %3641 = vmatpush1.msra.mxu0 0.0
    %3642 = vmatprep.subr.mxu0 0.0
    %3643 = vmatpush1.msra.mxu0 0.0
    %3644 = vmatprep.subr.mxu0 0.0
    %3645 = vmatpush1.msra.mxu0 0.0
    %3646 = vmatprep.subr.mxu0 0.0
    %3647 = vmatpush1.msra.mxu0 0.0
    %3648 = vmatprep.subr.mxu0 0.0
    %3649 = vmatpush1.msra.mxu0 0.0
    %3650 = vmatprep.subr.mxu0 0.0
    %3651 = vmatpush1.msra.mxu0 0.0
    %3652 = vmatprep.subr.mxu0 0.0
    %3653 = vmatpush1.msra.mxu0 0.0
    %3654 = vmatprep.subr.mxu0 0.0
    %3655 = vmatpush1.msra.mxu0 0.0
    %3656 = vmatprep.subr.mxu0 0.0
    %3657 = vmatpush1.msra.mxu0 0.0
    %3658 = vmatprep.subr.mxu0 0.0
    %3659 = vmatpush1.msra.mxu0 0.0
    %3660 = vmatprep.subr.mxu0 0.0
    %3661 = vmatpush1.msra.mxu0 0.0
    %3662 = vmatprep.subr.mxu0 0.0
    %3663 = vmatpush1.msra.mxu0 0.0
    %3664 = vmatprep.subr.mxu0 0.0
    %3665 = vmatpush1.msra.mxu0 0.0
    %3666 = vmatprep.mubr.f32.mxu0 0.0
    %3667 = vmatmul.mubr.f32.gmra.mrb[0].mxu0 %v3530
    %v3668 = vpop.f32.mrb[0].mxu0
    %v3669 = vadd.f32 %v3599, %v3668
    %v3670 = vpop.f32.mrb[0].mxu0
    %3671 = vdwg.mxu0
    %v3672 = vadd.f32 %v3477, %v3669
    %s3673 = scalar_lea.vmem [#allocation7], 2576
    %v3674 = vld [vmem:[%s3673] sm:$0xff]
    %v3675 = vld [vmem:[%s3673 + $0x8] sm:$0xff]
    %v3676 = vld [vmem:[%s3673 + $0x10] sm:$0xff]
    %v3677 = vld [vmem:[%s3673 + $0x18] sm:$0xff]
    %v3678 = vld [vmem:[%s3673 + $0x20] sm:$0xff]
    %v3679 = vld [vmem:[%s3673 + $0x28] sm:$0xff]
    %v3680 = vld [vmem:[%s3673 + $0x30] sm:$0xff]
    %v3681 = vld [vmem:[%s3673 + $0x38] sm:$0xff]
    %v3682 = vld [vmem:[%s3673 + $0x40] sm:$0xff]
    %v3683 = vld [vmem:[%s3673 + $0x48] sm:$0xff]
    %v3684 = vld [vmem:[%s3673 + $0x50] sm:$0xff]
    %v3685 = vld [vmem:[%s3673 + $0x58] sm:$0xff]
    %v3686 = vld [vmem:[%s3673 + $0x60] sm:$0xff]
    %v3687 = vld [vmem:[%s3673 + $0x68] sm:$0xff]
    %v3688 = vld [vmem:[%s3673 + $0x70] sm:$0xff]
    %v3689 = vld [vmem:[%s3673 + $0x78] sm:$0xff]
    %v3690 = vld [vmem:[%s3673 + $0x80] sm:$0xff]
    %v3691 = vld [vmem:[%s3673 + $0x88] sm:$0xff]
    %v3692 = vld [vmem:[%s3673 + $0x90] sm:$0xff]
    %v3693 = vld [vmem:[%s3673 + $0x98] sm:$0xff]
    %v3694 = vld [vmem:[%s3673 + $0xa0] sm:$0xff]
    %v3695 = vld [vmem:[%s3673 + $0xa8] sm:$0xff]
    %v3696 = vld [vmem:[%s3673 + $0xb0] sm:$0xff]
    %v3697 = vld [vmem:[%s3673 + $0xb8] sm:$0xff]
    %v3698 = vld [vmem:[%s3673 + $0xc0] sm:$0xff]
    %v3699 = vld [vmem:[%s3673 + $0xc8] sm:$0xff]
    %v3700 = vld [vmem:[%s3673 + $0xd0] sm:$0xff]
    %v3701 = vld [vmem:[%s3673 + $0xd8] sm:$0xff]
    %v3702 = vld [vmem:[%s3673 + $0xe0] sm:$0xff]
    %v3703 = vld [vmem:[%s3673 + $0xe8] sm:$0xff]
    %v3704 = vld [vmem:[%s3673 + $0xf0] sm:$0xff]
    %v3705 = vld [vmem:[%s3673 + $0xf8] sm:$0xff]
    %v3706 = vld [vmem:[%s3673 + $0x100] sm:$0xff]
    %v3707 = vld [vmem:[%s3673 + $0x108] sm:$0xff]
    %v3708 = vld [vmem:[%s3673 + $0x110] sm:$0xff]
    %v3709 = vld [vmem:[%s3673 + $0x118] sm:$0xff]
    %v3710 = vld [vmem:[%s3673 + $0x120] sm:$0xff]
    %v3711 = vld [vmem:[%s3673 + $0x128] sm:$0xff]
    %v3712 = vld [vmem:[%s3673 + $0x130] sm:$0xff]
    %v3713 = vld [vmem:[%s3673 + $0x138] sm:$0xff]
    %v3714 = vld [vmem:[%s3673 + $0x140] sm:$0xff]
    %v3715 = vld [vmem:[%s3673 + $0x148] sm:$0xff]
    %v3716 = vld [vmem:[%s3673 + $0x150] sm:$0xff]
    %v3717 = vld [vmem:[%s3673 + $0x158] sm:$0xff]
    %v3718 = vld [vmem:[%s3673 + $0x160] sm:$0xff]
    %v3719 = vld [vmem:[%s3673 + $0x168] sm:$0xff]
    %v3720 = vrot.slane %v2309, 6
    %v3721 = vrot.slane %v2310, 6
    %v3722 = vrot.slane %v2311, 6
    %v3725 = vsel %vm2281, %v3722, 0
    %3727 = vmatprep.subr.mxu0 0.0
    %3728 = vmatpush1.msra.mxu0 %v3674
    %3729 = vmatprep.subr.mxu0 0.0
    %3730 = vmatpush1.msra.mxu0 %v3675
    %3731 = vmatprep.subr.mxu0 0.0
    %3732 = vmatpush1.msra.mxu0 %v3676
    %3733 = vmatprep.subr.mxu0 0.0
    %3734 = vmatpush1.msra.mxu0 %v3677
    %3735 = vmatprep.subr.mxu0 0.0
    %3736 = vmatpush1.msra.mxu0 %v3678
    %3737 = vmatprep.subr.mxu0 0.0
    %3738 = vmatpush1.msra.mxu0 %v3679
    %3739 = vmatprep.subr.mxu0 0.0
    %3740 = vmatpush1.msra.mxu0 %v3680
    %3741 = vmatprep.subr.mxu0 0.0
    %3742 = vmatpush1.msra.mxu0 %v3681
    %3743 = vmatprep.subr.mxu0 0.0
    %3744 = vmatpush1.msra.mxu0 %v3682
    %3745 = vmatprep.subr.mxu0 0.0
    %3746 = vmatpush1.msra.mxu0 %v3683
    %3747 = vmatprep.subr.mxu0 0.0
    %3748 = vmatpush1.msra.mxu0 %v3684
    %3749 = vmatprep.subr.mxu0 0.0
    %3750 = vmatpush1.msra.mxu0 %v3685
    %3751 = vmatprep.subr.mxu0 0.0
    %3752 = vmatpush1.msra.mxu0 %v3686
    %3753 = vmatprep.subr.mxu0 0.0
    %3754 = vmatpush1.msra.mxu0 %v3687
    %3755 = vmatprep.subr.mxu0 0.0
    %3756 = vmatpush1.msra.mxu0 %v3688
    %3757 = vmatprep.subr.mxu0 0.0
    %3758 = vmatpush1.msra.mxu0 %v3689
    %3759 = vmatprep.subr.mxu0 0.0
    %3760 = vmatpush1.msra.mxu0 %v3690
    %3761 = vmatprep.subr.mxu0 0.0
    %3762 = vmatpush1.msra.mxu0 %v3691
    %3763 = vmatprep.subr.mxu0 0.0
    %3764 = vmatpush1.msra.mxu0 %v3692
    %3765 = vmatprep.subr.mxu0 0.0
    %3766 = vmatpush1.msra.mxu0 %v3693
    %3767 = vmatprep.subr.mxu0 0.0
    %3768 = vmatpush1.msra.mxu0 %v3694
    %3769 = vmatprep.subr.mxu0 0.0
    %3770 = vmatpush1.msra.mxu0 %v3695
    %3771 = vmatprep.subr.mxu0 0.0
    %3772 = vmatpush1.msra.mxu0 %v3696
    %3773 = vmatprep.subr.mxu0 0.0
    %3774 = vmatpush1.msra.mxu0 %v3697
    %3775 = vmatprep.subr.mxu0 0.0
    %3776 = vmatpush1.msra.mxu0 %v3698
    %3777 = vmatprep.subr.mxu0 0.0
    %3778 = vmatpush1.msra.mxu0 %v3699
    %3779 = vmatprep.subr.mxu0 0.0
    %3780 = vmatpush1.msra.mxu0 %v3700
    %3781 = vmatprep.subr.mxu0 0.0
    %3782 = vmatpush1.msra.mxu0 %v3701
    %3783 = vmatprep.subr.mxu0 0.0
    %3784 = vmatpush1.msra.mxu0 %v3702
    %3785 = vmatprep.subr.mxu0 0.0
    %3786 = vmatpush1.msra.mxu0 %v3703
    %3787 = vmatprep.subr.mxu0 0.0
    %3788 = vmatpush1.msra.mxu0 %v3704
    %3789 = vmatprep.subr.mxu0 0.0
    %3790 = vmatpush1.msra.mxu0 %v3705
    %3791 = vmatprep.mubr.f32.mxu0 %v3721
    %3792 = vmatmul.mubr.f32.gmra.mrb[0].mxu0 %v3720
    %v3793 = vpop.f32.mrb[0].mxu0
    %v3794 = vadd.f32 0.0, %v3793
    %v3795 = vpop.f32.mrb[0].mxu0
    %3796 = vdwg.mxu0
    %3797 = vmatprep.subr.mxu0 0.0
    %3798 = vmatpush1.msra.mxu0 %v3706
    %3799 = vmatprep.subr.mxu0 0.0
    %3800 = vmatpush1.msra.mxu0 %v3707
    %3801 = vmatprep.subr.mxu0 0.0
    %3802 = vmatpush1.msra.mxu0 %v3708
    %3803 = vmatprep.subr.mxu0 0.0
    %3804 = vmatpush1.msra.mxu0 %v3709
    %3805 = vmatprep.subr.mxu0 0.0
    %3806 = vmatpush1.msra.mxu0 %v3710
    %3807 = vmatprep.subr.mxu0 0.0
    %3808 = vmatpush1.msra.mxu0 %v3711
    %3809 = vmatprep.subr.mxu0 0.0
    %3810 = vmatpush1.msra.mxu0 %v3712
    %3811 = vmatprep.subr.mxu0 0.0
    %3812 = vmatpush1.msra.mxu0 %v3713
    %3813 = vmatprep.subr.mxu0 0.0
    %3814 = vmatpush1.msra.mxu0 %v3714
    %3815 = vmatprep.subr.mxu0 0.0
    %3816 = vmatpush1.msra.mxu0 %v3715
    %3817 = vmatprep.subr.mxu0 0.0
    %3818 = vmatpush1.msra.mxu0 %v3716
    %3819 = vmatprep.subr.mxu0 0.0
    %3820 = vmatpush1.msra.mxu0 %v3717
    %3821 = vmatprep.subr.mxu0 0.0
    %3822 = vmatpush1.msra.mxu0 %v3718
    %3823 = vmatprep.subr.mxu0 0.0
    %3824 = vmatpush1.msra.mxu0 %v3719
    %3825 = vmatprep.subr.mxu0 0.0
    %3826 = vmatpush1.msra.mxu0 0.0
    %3827 = vmatprep.subr.mxu0 0.0
    %3828 = vmatpush1.msra.mxu0 0.0
    %3829 = vmatprep.subr.mxu0 0.0
    %3830 = vmatpush1.msra.mxu0 0.0
    %3831 = vmatprep.subr.mxu0 0.0
    %3832 = vmatpush1.msra.mxu0 0.0
    %3833 = vmatprep.subr.mxu0 0.0
    %3834 = vmatpush1.msra.mxu0 0.0
    %3835 = vmatprep.subr.mxu0 0.0
    %3836 = vmatpush1.msra.mxu0 0.0
    %3837 = vmatprep.subr.mxu0 0.0
    %3838 = vmatpush1.msra.mxu0 0.0
    %3839 = vmatprep.subr.mxu0 0.0
    %3840 = vmatpush1.msra.mxu0 0.0
    %3841 = vmatprep.subr.mxu0 0.0
    %3842 = vmatpush1.msra.mxu0 0.0
    %3843 = vmatprep.subr.mxu0 0.0
    %3844 = vmatpush1.msra.mxu0 0.0
    %3845 = vmatprep.subr.mxu0 0.0
    %3846 = vmatpush1.msra.mxu0 0.0
    %3847 = vmatprep.subr.mxu0 0.0
    %3848 = vmatpush1.msra.mxu0 0.0
    %3849 = vmatprep.subr.mxu0 0.0
    %3850 = vmatpush1.msra.mxu0 0.0
    %3851 = vmatprep.subr.mxu0 0.0
    %3852 = vmatpush1.msra.mxu0 0.0
    %3853 = vmatprep.subr.mxu0 0.0
    %3854 = vmatpush1.msra.mxu0 0.0
    %3855 = vmatprep.subr.mxu0 0.0
    %3856 = vmatpush1.msra.mxu0 0.0
    %3857 = vmatprep.subr.mxu0 0.0
    %3858 = vmatpush1.msra.mxu0 0.0
    %3859 = vmatprep.subr.mxu0 0.0
    %3860 = vmatpush1.msra.mxu0 0.0
    %3861 = vmatprep.mubr.f32.mxu0 0.0
    %3862 = vmatmul.mubr.f32.gmra.mrb[0].mxu0 %v3725
    %v3863 = vpop.f32.mrb[0].mxu0
    %v3864 = vadd.f32 %v3794, %v3863
    %v3865 = vpop.f32.mrb[0].mxu0
    %3866 = vdwg.mxu0
    %v3867 = vadd.f32 %v3672, %v3864
    %s3868 = scalar_lea.vmem [#allocation7], 2944
    %v3869 = vld [vmem:[%s3868] sm:$0xff]
    %v3870 = vld [vmem:[%s3868 + $0x8] sm:$0xff]
    %v3871 = vld [vmem:[%s3868 + $0x10] sm:$0xff]
    %v3872 = vld [vmem:[%s3868 + $0x18] sm:$0xff]
    %v3873 = vld [vmem:[%s3868 + $0x20] sm:$0xff]
    %v3874 = vld [vmem:[%s3868 + $0x28] sm:$0xff]
    %v3875 = vld [vmem:[%s3868 + $0x30] sm:$0xff]
    %v3876 = vld [vmem:[%s3868 + $0x38] sm:$0xff]
    %v3877 = vld [vmem:[%s3868 + $0x40] sm:$0xff]
    %v3878 = vld [vmem:[%s3868 + $0x48] sm:$0xff]
    %v3879 = vld [vmem:[%s3868 + $0x50] sm:$0xff]
    %v3880 = vld [vmem:[%s3868 + $0x58] sm:$0xff]
    %v3881 = vld [vmem:[%s3868 + $0x60] sm:$0xff]
    %v3882 = vld [vmem:[%s3868 + $0x68] sm:$0xff]
    %v3883 = vld [vmem:[%s3868 + $0x70] sm:$0xff]
    %v3884 = vld [vmem:[%s3868 + $0x78] sm:$0xff]
    %v3885 = vld [vmem:[%s3868 + $0x80] sm:$0xff]
    %v3886 = vld [vmem:[%s3868 + $0x88] sm:$0xff]
    %v3887 = vld [vmem:[%s3868 + $0x90] sm:$0xff]
    %v3888 = vld [vmem:[%s3868 + $0x98] sm:$0xff]
    %v3889 = vld [vmem:[%s3868 + $0xa0] sm:$0xff]
    %v3890 = vld [vmem:[%s3868 + $0xa8] sm:$0xff]
    %v3891 = vld [vmem:[%s3868 + $0xb0] sm:$0xff]
    %v3892 = vld [vmem:[%s3868 + $0xb8] sm:$0xff]
    %v3893 = vld [vmem:[%s3868 + $0xc0] sm:$0xff]
    %v3894 = vld [vmem:[%s3868 + $0xc8] sm:$0xff]
    %v3895 = vld [vmem:[%s3868 + $0xd0] sm:$0xff]
    %v3896 = vld [vmem:[%s3868 + $0xd8] sm:$0xff]
    %v3897 = vld [vmem:[%s3868 + $0xe0] sm:$0xff]
    %v3898 = vld [vmem:[%s3868 + $0xe8] sm:$0xff]
    %v3899 = vld [vmem:[%s3868 + $0xf0] sm:$0xff]
    %v3900 = vld [vmem:[%s3868 + $0xf8] sm:$0xff]
    %v3901 = vld [vmem:[%s3868 + $0x100] sm:$0xff]
    %v3902 = vld [vmem:[%s3868 + $0x108] sm:$0xff]
    %v3903 = vld [vmem:[%s3868 + $0x110] sm:$0xff]
    %v3904 = vld [vmem:[%s3868 + $0x118] sm:$0xff]
    %v3905 = vld [vmem:[%s3868 + $0x120] sm:$0xff]
    %v3906 = vld [vmem:[%s3868 + $0x128] sm:$0xff]
    %v3907 = vld [vmem:[%s3868 + $0x130] sm:$0xff]
    %v3908 = vld [vmem:[%s3868 + $0x138] sm:$0xff]
    %v3909 = vld [vmem:[%s3868 + $0x140] sm:$0xff]
    %v3910 = vld [vmem:[%s3868 + $0x148] sm:$0xff]
    %v3911 = vld [vmem:[%s3868 + $0x150] sm:$0xff]
    %v3912 = vld [vmem:[%s3868 + $0x158] sm:$0xff]
    %v3913 = vld [vmem:[%s3868 + $0x160] sm:$0xff]
    %v3914 = vld [vmem:[%s3868 + $0x168] sm:$0xff]
    %v3916 = vsel %vm2281, %v2314, 0
    %3918 = vmatprep.subr.mxu0 0.0
    %3919 = vmatpush1.msra.mxu0 %v3869
    %3920 = vmatprep.subr.mxu0 0.0
    %3921 = vmatpush1.msra.mxu0 %v3870
    %3922 = vmatprep.subr.mxu0 0.0
    %3923 = vmatpush1.msra.mxu0 %v3871
    %3924 = vmatprep.subr.mxu0 0.0
    %3925 = vmatpush1.msra.mxu0 %v3872
    %3926 = vmatprep.subr.mxu0 0.0
    %3927 = vmatpush1.msra.mxu0 %v3873
    %3928 = vmatprep.subr.mxu0 0.0
    %3929 = vmatpush1.msra.mxu0 %v3874
    %3930 = vmatprep.subr.mxu0 0.0
    %3931 = vmatpush1.msra.mxu0 %v3875
    %3932 = vmatprep.subr.mxu0 0.0
    %3933 = vmatpush1.msra.mxu0 %v3876
    %3934 = vmatprep.subr.mxu0 0.0
    %3935 = vmatpush1.msra.mxu0 %v3877
    %3936 = vmatprep.subr.mxu0 0.0
    %3937 = vmatpush1.msra.mxu0 %v3878
    %3938 = vmatprep.subr.mxu0 0.0
    %3939 = vmatpush1.msra.mxu0 %v3879
    %3940 = vmatprep.subr.mxu0 0.0
    %3941 = vmatpush1.msra.mxu0 %v3880
    %3942 = vmatprep.subr.mxu0 0.0
    %3943 = vmatpush1.msra.mxu0 %v3881
    %3944 = vmatprep.subr.mxu0 0.0
    %3945 = vmatpush1.msra.mxu0 %v3882
    %3946 = vmatprep.subr.mxu0 0.0
    %3947 = vmatpush1.msra.mxu0 %v3883
    %3948 = vmatprep.subr.mxu0 0.0
    %3949 = vmatpush1.msra.mxu0 %v3884
    %3950 = vmatprep.subr.mxu0 0.0
    %3951 = vmatpush1.msra.mxu0 %v3885
    %3952 = vmatprep.subr.mxu0 0.0
    %3953 = vmatpush1.msra.mxu0 %v3886
    %3954 = vmatprep.subr.mxu0 0.0
    %3955 = vmatpush1.msra.mxu0 %v3887
    %3956 = vmatprep.subr.mxu0 0.0
    %3957 = vmatpush1.msra.mxu0 %v3888
    %3958 = vmatprep.subr.mxu0 0.0
    %3959 = vmatpush1.msra.mxu0 %v3889
    %3960 = vmatprep.subr.mxu0 0.0
    %3961 = vmatpush1.msra.mxu0 %v3890
    %3962 = vmatprep.subr.mxu0 0.0
    %3963 = vmatpush1.msra.mxu0 %v3891
    %3964 = vmatprep.subr.mxu0 0.0
    %3965 = vmatpush1.msra.mxu0 %v3892
    %3966 = vmatprep.subr.mxu0 0.0
    %3967 = vmatpush1.msra.mxu0 %v3893
    %3968 = vmatprep.subr.mxu0 0.0
    %3969 = vmatpush1.msra.mxu0 %v3894
    %3970 = vmatprep.subr.mxu0 0.0
    %3971 = vmatpush1.msra.mxu0 %v3895
    %3972 = vmatprep.subr.mxu0 0.0
    %3973 = vmatpush1.msra.mxu0 %v3896
    %3974 = vmatprep.subr.mxu0 0.0
    %3975 = vmatpush1.msra.mxu0 %v3897
    %3976 = vmatprep.subr.mxu0 0.0
    %3977 = vmatpush1.msra.mxu0 %v3898
    %3978 = vmatprep.subr.mxu0 0.0
    %3979 = vmatpush1.msra.mxu0 %v3899
    %3980 = vmatprep.subr.mxu0 0.0
    %3981 = vmatpush1.msra.mxu0 %v3900
    %3982 = vmatprep.mubr.f32.mxu0 %v2313
    %3983 = vmatmul.mubr.f32.gmra.mrb[0].mxu0 %v2312
    %v3984 = vpop.f32.mrb[0].mxu0
    %v3985 = vadd.f32 0.0, %v3984
    %v3986 = vpop.f32.mrb[0].mxu0
    %3987 = vdwg.mxu0
    %3988 = vmatprep.subr.mxu0 0.0
    %3989 = vmatpush1.msra.mxu0 %v3901
    %3990 = vmatprep.subr.mxu0 0.0
    %3991 = vmatpush1.msra.mxu0 %v3902
    %3992 = vmatprep.subr.mxu0 0.0
    %3993 = vmatpush1.msra.mxu0 %v3903
    %3994 = vmatprep.subr.mxu0 0.0
    %3995 = vmatpush1.msra.mxu0 %v3904
    %3996 = vmatprep.subr.mxu0 0.0
    %3997 = vmatpush1.msra.mxu0 %v3905
    %3998 = vmatprep.subr.mxu0 0.0
    %3999 = vmatpush1.msra.mxu0 %v3906
    %4000 = vmatprep.subr.mxu0 0.0
    %4001 = vmatpush1.msra.mxu0 %v3907
    %4002 = vmatprep.subr.mxu0 0.0
    %4003 = vmatpush1.msra.mxu0 %v3908
    %4004 = vmatprep.subr.mxu0 0.0
    %4005 = vmatpush1.msra.mxu0 %v3909
    %4006 = vmatprep.subr.mxu0 0.0
    %4007 = vmatpush1.msra.mxu0 %v3910
    %4008 = vmatprep.subr.mxu0 0.0
    %4009 = vmatpush1.msra.mxu0 %v3911
    %4010 = vmatprep.subr.mxu0 0.0
    %4011 = vmatpush1.msra.mxu0 %v3912
    %4012 = vmatprep.subr.mxu0 0.0
    %4013 = vmatpush1.msra.mxu0 %v3913
    %4014 = vmatprep.subr.mxu0 0.0
    %4015 = vmatpush1.msra.mxu0 %v3914
    %4016 = vmatprep.subr.mxu0 0.0
    %4017 = vmatpush1.msra.mxu0 0.0
    %4018 = vmatprep.subr.mxu0 0.0
    %4019 = vmatpush1.msra.mxu0 0.0
    %4020 = vmatprep.subr.mxu0 0.0
    %4021 = vmatpush1.msra.mxu0 0.0
    %4022 = vmatprep.subr.mxu0 0.0
    %4023 = vmatpush1.msra.mxu0 0.0
    %4024 = vmatprep.subr.mxu0 0.0
    %4025 = vmatpush1.msra.mxu0 0.0
    %4026 = vmatprep.subr.mxu0 0.0
    %4027 = vmatpush1.msra.mxu0 0.0
    %4028 = vmatprep.subr.mxu0 0.0
    %4029 = vmatpush1.msra.mxu0 0.0
    %4030 = vmatprep.subr.mxu0 0.0
    %4031 = vmatpush1.msra.mxu0 0.0
    %4032 = vmatprep.subr.mxu0 0.0
    %4033 = vmatpush1.msra.mxu0 0.0
    %4034 = vmatprep.subr.mxu0 0.0
    %4035 = vmatpush1.msra.mxu0 0.0
    %4036 = vmatprep.subr.mxu0 0.0
    %4037 = vmatpush1.msra.mxu0 0.0
    %4038 = vmatprep.subr.mxu0 0.0
    %4039 = vmatpush1.msra.mxu0 0.0
    %4040 = vmatprep.subr.mxu0 0.0
    %4041 = vmatpush1.msra.mxu0 0.0
    %4042 = vmatprep.subr.mxu0 0.0
    %4043 = vmatpush1.msra.mxu0 0.0
    %4044 = vmatprep.subr.mxu0 0.0
    %4045 = vmatpush1.msra.mxu0 0.0
    %4046 = vmatprep.subr.mxu0 0.0
    %4047 = vmatpush1.msra.mxu0 0.0
    %4048 = vmatprep.subr.mxu0 0.0
    %4049 = vmatpush1.msra.mxu0 0.0
    %4050 = vmatprep.subr.mxu0 0.0
    %4051 = vmatpush1.msra.mxu0 0.0
    %4052 = vmatprep.mubr.f32.mxu0 0.0
    %4053 = vmatmul.mubr.f32.gmra.mrb[0].mxu0 %v3916
    %v4054 = vpop.f32.mrb[0].mxu0
    %v4055 = vadd.f32 %v3985, %v4054
    %v4056 = vpop.f32.mrb[0].mxu0
    %4057 = vdwg.mxu0
    %v4058 = vadd.f32 %v3867, %v4055
    %s4059 = scalar_lea.vmem [#allocation7], 3312
    %v4060 = vld [vmem:[%s4059] sm:$0xff]
    %v4061 = vld [vmem:[%s4059 + $0x8] sm:$0xff]
    %v4062 = vld [vmem:[%s4059 + $0x10] sm:$0xff]
    %v4063 = vld [vmem:[%s4059 + $0x18] sm:$0xff]
    %v4064 = vld [vmem:[%s4059 + $0x20] sm:$0xff]
    %v4065 = vld [vmem:[%s4059 + $0x28] sm:$0xff]
    %v4066 = vld [vmem:[%s4059 + $0x30] sm:$0xff]
    %v4067 = vld [vmem:[%s4059 + $0x38] sm:$0xff]
    %v4068 = vld [vmem:[%s4059 + $0x40] sm:$0xff]
    %v4069 = vld [vmem:[%s4059 + $0x48] sm:$0xff]
    %v4070 = vld [vmem:[%s4059 + $0x50] sm:$0xff]
    %v4071 = vld [vmem:[%s4059 + $0x58] sm:$0xff]
    %v4072 = vld [vmem:[%s4059 + $0x60] sm:$0xff]
    %v4073 = vld [vmem:[%s4059 + $0x68] sm:$0xff]
    %v4074 = vld [vmem:[%s4059 + $0x70] sm:$0xff]
    %v4075 = vld [vmem:[%s4059 + $0x78] sm:$0xff]
    %v4076 = vld [vmem:[%s4059 + $0x80] sm:$0xff]
    %v4077 = vld [vmem:[%s4059 + $0x88] sm:$0xff]
    %v4078 = vld [vmem:[%s4059 + $0x90] sm:$0xff]
    %v4079 = vld [vmem:[%s4059 + $0x98] sm:$0xff]
    %v4080 = vld [vmem:[%s4059 + $0xa0] sm:$0xff]
    %v4081 = vld [vmem:[%s4059 + $0xa8] sm:$0xff]
    %v4082 = vld [vmem:[%s4059 + $0xb0] sm:$0xff]
    %v4083 = vld [vmem:[%s4059 + $0xb8] sm:$0xff]
    %v4084 = vld [vmem:[%s4059 + $0xc0] sm:$0xff]
    %v4085 = vld [vmem:[%s4059 + $0xc8] sm:$0xff]
    %v4086 = vld [vmem:[%s4059 + $0xd0] sm:$0xff]
    %v4087 = vld [vmem:[%s4059 + $0xd8] sm:$0xff]
    %v4088 = vld [vmem:[%s4059 + $0xe0] sm:$0xff]
    %v4089 = vld [vmem:[%s4059 + $0xe8] sm:$0xff]
    %v4090 = vld [vmem:[%s4059 + $0xf0] sm:$0xff]
    %v4091 = vld [vmem:[%s4059 + $0xf8] sm:$0xff]
    %v4092 = vld [vmem:[%s4059 + $0x100] sm:$0xff]
    %v4093 = vld [vmem:[%s4059 + $0x108] sm:$0xff]
    %v4094 = vld [vmem:[%s4059 + $0x110] sm:$0xff]
    %v4095 = vld [vmem:[%s4059 + $0x118] sm:$0xff]
    %v4096 = vld [vmem:[%s4059 + $0x120] sm:$0xff]
    %v4097 = vld [vmem:[%s4059 + $0x128] sm:$0xff]
    %v4098 = vld [vmem:[%s4059 + $0x130] sm:$0xff]
    %v4099 = vld [vmem:[%s4059 + $0x138] sm:$0xff]
    %v4100 = vld [vmem:[%s4059 + $0x140] sm:$0xff]
    %v4101 = vld [vmem:[%s4059 + $0x148] sm:$0xff]
    %v4102 = vld [vmem:[%s4059 + $0x150] sm:$0xff]
    %v4103 = vld [vmem:[%s4059 + $0x158] sm:$0xff]
    %v4104 = vld [vmem:[%s4059 + $0x160] sm:$0xff]
    %v4105 = vld [vmem:[%s4059 + $0x168] sm:$0xff]
    %v4108 = vrot.slane %v2312, 2
    %v4109 = vrot.slane %v2313, 2
    %v4110 = vrot.slane %v2314, 2
    %v4113 = vsel %vm2281, %v4110, 0
    %4115 = vmatprep.subr.mxu0 0.0
    %4116 = vmatpush1.msra.mxu0 %v4060
    %4117 = vmatprep.subr.mxu0 0.0
    %4118 = vmatpush1.msra.mxu0 %v4061
    %4119 = vmatprep.subr.mxu0 0.0
    %4120 = vmatpush1.msra.mxu0 %v4062
    %4121 = vmatprep.subr.mxu0 0.0
    %4122 = vmatpush1.msra.mxu0 %v4063
    %4123 = vmatprep.subr.mxu0 0.0
    %4124 = vmatpush1.msra.mxu0 %v4064
    %4125 = vmatprep.subr.mxu0 0.0
    %4126 = vmatpush1.msra.mxu0 %v4065
    %4127 = vmatprep.subr.mxu0 0.0
    %4128 = vmatpush1.msra.mxu0 %v4066
    %4129 = vmatprep.subr.mxu0 0.0
    %4130 = vmatpush1.msra.mxu0 %v4067
    %4131 = vmatprep.subr.mxu0 0.0
    %4132 = vmatpush1.msra.mxu0 %v4068
    %4133 = vmatprep.subr.mxu0 0.0
    %4134 = vmatpush1.msra.mxu0 %v4069
    %4135 = vmatprep.subr.mxu0 0.0
    %4136 = vmatpush1.msra.mxu0 %v4070
    %4137 = vmatprep.subr.mxu0 0.0
    %4138 = vmatpush1.msra.mxu0 %v4071
    %4139 = vmatprep.subr.mxu0 0.0
    %4140 = vmatpush1.msra.mxu0 %v4072
    %4141 = vmatprep.subr.mxu0 0.0
    %4142 = vmatpush1.msra.mxu0 %v4073
    %4143 = vmatprep.subr.mxu0 0.0
    %4144 = vmatpush1.msra.mxu0 %v4074
    %4145 = vmatprep.subr.mxu0 0.0
    %4146 = vmatpush1.msra.mxu0 %v4075
    %4147 = vmatprep.subr.mxu0 0.0
    %4148 = vmatpush1.msra.mxu0 %v4076
    %4149 = vmatprep.subr.mxu0 0.0
    %4150 = vmatpush1.msra.mxu0 %v4077
    %4151 = vmatprep.subr.mxu0 0.0
    %4152 = vmatpush1.msra.mxu0 %v4078
    %4153 = vmatprep.subr.mxu0 0.0
    %4154 = vmatpush1.msra.mxu0 %v4079
    %4155 = vmatprep.subr.mxu0 0.0
    %4156 = vmatpush1.msra.mxu0 %v4080
    %4157 = vmatprep.subr.mxu0 0.0
    %4158 = vmatpush1.msra.mxu0 %v4081
    %4159 = vmatprep.subr.mxu0 0.0
    %4160 = vmatpush1.msra.mxu0 %v4082
    %4161 = vmatprep.subr.mxu0 0.0
    %4162 = vmatpush1.msra.mxu0 %v4083
    %4163 = vmatprep.subr.mxu0 0.0
    %4164 = vmatpush1.msra.mxu0 %v4084
    %4165 = vmatprep.subr.mxu0 0.0
    %4166 = vmatpush1.msra.mxu0 %v4085
    %4167 = vmatprep.subr.mxu0 0.0
    %4168 = vmatpush1.msra.mxu0 %v4086
    %4169 = vmatprep.subr.mxu0 0.0
    %4170 = vmatpush1.msra.mxu0 %v4087
    %4171 = vmatprep.subr.mxu0 0.0
    %4172 = vmatpush1.msra.mxu0 %v4088
    %4173 = vmatprep.subr.mxu0 0.0
    %4174 = vmatpush1.msra.mxu0 %v4089
    %4175 = vmatprep.subr.mxu0 0.0
    %4176 = vmatpush1.msra.mxu0 %v4090
    %4177 = vmatprep.subr.mxu0 0.0
    %4178 = vmatpush1.msra.mxu0 %v4091
    %4179 = vmatprep.mubr.f32.mxu0 %v4109
    %4180 = vmatmul.mubr.f32.gmra.mrb[0].mxu0 %v4108
    %v4181 = vpop.f32.mrb[0].mxu0
    %v4182 = vadd.f32 0.0, %v4181
    %v4183 = vpop.f32.mrb[0].mxu0
    %4184 = vdwg.mxu0
    %4185 = vmatprep.subr.mxu0 0.0
    %4186 = vmatpush1.msra.mxu0 %v4092
    %4187 = vmatprep.subr.mxu0 0.0
    %4188 = vmatpush1.msra.mxu0 %v4093
    %4189 = vmatprep.subr.mxu0 0.0
    %4190 = vmatpush1.msra.mxu0 %v4094
    %4191 = vmatprep.subr.mxu0 0.0
    %4192 = vmatpush1.msra.mxu0 %v4095
    %4193 = vmatprep.subr.mxu0 0.0
    %4194 = vmatpush1.msra.mxu0 %v4096
    %4195 = vmatprep.subr.mxu0 0.0
    %4196 = vmatpush1.msra.mxu0 %v4097
    %4197 = vmatprep.subr.mxu0 0.0
    %4198 = vmatpush1.msra.mxu0 %v4098
    %4199 = vmatprep.subr.mxu0 0.0
    %4200 = vmatpush1.msra.mxu0 %v4099
    %4201 = vmatprep.subr.mxu0 0.0
    %4202 = vmatpush1.msra.mxu0 %v4100
    %4203 = vmatprep.subr.mxu0 0.0
    %4204 = vmatpush1.msra.mxu0 %v4101
    %4205 = vmatprep.subr.mxu0 0.0
    %4206 = vmatpush1.msra.mxu0 %v4102
    %4207 = vmatprep.subr.mxu0 0.0
    %4208 = vmatpush1.msra.mxu0 %v4103
    %4209 = vmatprep.subr.mxu0 0.0
    %4210 = vmatpush1.msra.mxu0 %v4104
    %4211 = vmatprep.subr.mxu0 0.0
    %4212 = vmatpush1.msra.mxu0 %v4105
    %4213 = vmatprep.subr.mxu0 0.0
    %4214 = vmatpush1.msra.mxu0 0.0
    %4215 = vmatprep.subr.mxu0 0.0
    %4216 = vmatpush1.msra.mxu0 0.0
    %4217 = vmatprep.subr.mxu0 0.0
    %4218 = vmatpush1.msra.mxu0 0.0
    %4219 = vmatprep.subr.mxu0 0.0
    %4220 = vmatpush1.msra.mxu0 0.0
    %4221 = vmatprep.subr.mxu0 0.0
    %4222 = vmatpush1.msra.mxu0 0.0
    %4223 = vmatprep.subr.mxu0 0.0
    %4224 = vmatpush1.msra.mxu0 0.0
    %4225 = vmatprep.subr.mxu0 0.0
    %4226 = vmatpush1.msra.mxu0 0.0
    %4227 = vmatprep.subr.mxu0 0.0
    %4228 = vmatpush1.msra.mxu0 0.0
    %4229 = vmatprep.subr.mxu0 0.0
    %4230 = vmatpush1.msra.mxu0 0.0
    %4231 = vmatprep.subr.mxu0 0.0
    %4232 = vmatpush1.msra.mxu0 0.0
    %4233 = vmatprep.subr.mxu0 0.0
    %4234 = vmatpush1.msra.mxu0 0.0
    %4235 = vmatprep.subr.mxu0 0.0
    %4236 = vmatpush1.msra.mxu0 0.0
    %4237 = vmatprep.subr.mxu0 0.0
    %4238 = vmatpush1.msra.mxu0 0.0
    %4239 = vmatprep.subr.mxu0 0.0
    %4240 = vmatpush1.msra.mxu0 0.0
    %4241 = vmatprep.subr.mxu0 0.0
    %4242 = vmatpush1.msra.mxu0 0.0
    %4243 = vmatprep.subr.mxu0 0.0
    %4244 = vmatpush1.msra.mxu0 0.0
    %4245 = vmatprep.subr.mxu0 0.0
    %4246 = vmatpush1.msra.mxu0 0.0
    %4247 = vmatprep.subr.mxu0 0.0
    %4248 = vmatpush1.msra.mxu0 0.0
    %4249 = vmatprep.mubr.f32.mxu0 0.0
    %4250 = vmatmul.mubr.f32.gmra.mrb[0].mxu0 %v4113
    %v4251 = vpop.f32.mrb[0].mxu0
    %v4252 = vadd.f32 %v4182, %v4251
    %v4253 = vpop.f32.mrb[0].mxu0
    %4254 = vdwg.mxu0
    %v4255 = vadd.f32 %v4058, %v4252
    %s4256 = scalar_lea.vmem [#allocation7], 3680
    %v4257 = vld [vmem:[%s4256] sm:$0xff]
    %v4258 = vld [vmem:[%s4256 + $0x8] sm:$0xff]
    %v4259 = vld [vmem:[%s4256 + $0x10] sm:$0xff]
    %v4260 = vld [vmem:[%s4256 + $0x18] sm:$0xff]
    %v4261 = vld [vmem:[%s4256 + $0x20] sm:$0xff]
    %v4262 = vld [vmem:[%s4256 + $0x28] sm:$0xff]
    %v4263 = vld [vmem:[%s4256 + $0x30] sm:$0xff]
    %v4264 = vld [vmem:[%s4256 + $0x38] sm:$0xff]
    %v4265 = vld [vmem:[%s4256 + $0x40] sm:$0xff]
    %v4266 = vld [vmem:[%s4256 + $0x48] sm:$0xff]
    %v4267 = vld [vmem:[%s4256 + $0x50] sm:$0xff]
    %v4268 = vld [vmem:[%s4256 + $0x58] sm:$0xff]
    %v4269 = vld [vmem:[%s4256 + $0x60] sm:$0xff]
    %v4270 = vld [vmem:[%s4256 + $0x68] sm:$0xff]
    %v4271 = vld [vmem:[%s4256 + $0x70] sm:$0xff]
    %v4272 = vld [vmem:[%s4256 + $0x78] sm:$0xff]
    %v4273 = vld [vmem:[%s4256 + $0x80] sm:$0xff]
    %v4274 = vld [vmem:[%s4256 + $0x88] sm:$0xff]
    %v4275 = vld [vmem:[%s4256 + $0x90] sm:$0xff]
    %v4276 = vld [vmem:[%s4256 + $0x98] sm:$0xff]
    %v4277 = vld [vmem:[%s4256 + $0xa0] sm:$0xff]
    %v4278 = vld [vmem:[%s4256 + $0xa8] sm:$0xff]
    %v4279 = vld [vmem:[%s4256 + $0xb0] sm:$0xff]
    %v4280 = vld [vmem:[%s4256 + $0xb8] sm:$0xff]
    %v4281 = vld [vmem:[%s4256 + $0xc0] sm:$0xff]
    %v4282 = vld [vmem:[%s4256 + $0xc8] sm:$0xff]
    %v4283 = vld [vmem:[%s4256 + $0xd0] sm:$0xff]
    %v4284 = vld [vmem:[%s4256 + $0xd8] sm:$0xff]
    %v4285 = vld [vmem:[%s4256 + $0xe0] sm:$0xff]
    %v4286 = vld [vmem:[%s4256 + $0xe8] sm:$0xff]
    %v4287 = vld [vmem:[%s4256 + $0xf0] sm:$0xff]
    %v4288 = vld [vmem:[%s4256 + $0xf8] sm:$0xff]
    %v4289 = vld [vmem:[%s4256 + $0x100] sm:$0xff]
    %v4290 = vld [vmem:[%s4256 + $0x108] sm:$0xff]
    %v4291 = vld [vmem:[%s4256 + $0x110] sm:$0xff]
    %v4292 = vld [vmem:[%s4256 + $0x118] sm:$0xff]
    %v4293 = vld [vmem:[%s4256 + $0x120] sm:$0xff]
    %v4294 = vld [vmem:[%s4256 + $0x128] sm:$0xff]
    %v4295 = vld [vmem:[%s4256 + $0x130] sm:$0xff]
    %v4296 = vld [vmem:[%s4256 + $0x138] sm:$0xff]
    %v4297 = vld [vmem:[%s4256 + $0x140] sm:$0xff]
    %v4298 = vld [vmem:[%s4256 + $0x148] sm:$0xff]
    %v4299 = vld [vmem:[%s4256 + $0x150] sm:$0xff]
    %v4300 = vld [vmem:[%s4256 + $0x158] sm:$0xff]
    %v4301 = vld [vmem:[%s4256 + $0x160] sm:$0xff]
    %v4302 = vld [vmem:[%s4256 + $0x168] sm:$0xff]
    %v4303 = vrot.slane %v2312, 4
    %v4304 = vrot.slane %v2313, 4
    %v4305 = vrot.slane %v2314, 4
    %v4308 = vsel %vm2281, %v4305, 0
    %4310 = vmatprep.subr.mxu0 0.0
    %4311 = vmatpush1.msra.mxu0 %v4257
    %4312 = vmatprep.subr.mxu0 0.0
    %4313 = vmatpush1.msra.mxu0 %v4258
    %4314 = vmatprep.subr.mxu0 0.0
    %4315 = vmatpush1.msra.mxu0 %v4259
    %4316 = vmatprep.subr.mxu0 0.0
    %4317 = vmatpush1.msra.mxu0 %v4260
    %4318 = vmatprep.subr.mxu0 0.0
    %4319 = vmatpush1.msra.mxu0 %v4261
    %4320 = vmatprep.subr.mxu0 0.0
    %4321 = vmatpush1.msra.mxu0 %v4262
    %4322 = vmatprep.subr.mxu0 0.0
    %4323 = vmatpush1.msra.mxu0 %v4263
    %4324 = vmatprep.subr.mxu0 0.0
    %4325 = vmatpush1.msra.mxu0 %v4264
    %4326 = vmatprep.subr.mxu0 0.0
    %4327 = vmatpush1.msra.mxu0 %v4265
    %4328 = vmatprep.subr.mxu0 0.0
    %4329 = vmatpush1.msra.mxu0 %v4266
    %4330 = vmatprep.subr.mxu0 0.0
    %4331 = vmatpush1.msra.mxu0 %v4267
    %4332 = vmatprep.subr.mxu0 0.0
    %4333 = vmatpush1.msra.mxu0 %v4268
    %4334 = vmatprep.subr.mxu0 0.0
    %4335 = vmatpush1.msra.mxu0 %v4269
    %4336 = vmatprep.subr.mxu0 0.0
    %4337 = vmatpush1.msra.mxu0 %v4270
    %4338 = vmatprep.subr.mxu0 0.0
    %4339 = vmatpush1.msra.mxu0 %v4271
    %4340 = vmatprep.subr.mxu0 0.0
    %4341 = vmatpush1.msra.mxu0 %v4272
    %4342 = vmatprep.subr.mxu0 0.0
    %4343 = vmatpush1.msra.mxu0 %v4273
    %4344 = vmatprep.subr.mxu0 0.0
    %4345 = vmatpush1.msra.mxu0 %v4274
    %4346 = vmatprep.subr.mxu0 0.0
    %4347 = vmatpush1.msra.mxu0 %v4275
    %4348 = vmatprep.subr.mxu0 0.0
    %4349 = vmatpush1.msra.mxu0 %v4276
    %4350 = vmatprep.subr.mxu0 0.0
    %4351 = vmatpush1.msra.mxu0 %v4277
    %4352 = vmatprep.subr.mxu0 0.0
    %4353 = vmatpush1.msra.mxu0 %v4278
    %4354 = vmatprep.subr.mxu0 0.0
    %4355 = vmatpush1.msra.mxu0 %v4279
    %4356 = vmatprep.subr.mxu0 0.0
    %4357 = vmatpush1.msra.mxu0 %v4280
    %4358 = vmatprep.subr.mxu0 0.0
    %4359 = vmatpush1.msra.mxu0 %v4281
    %4360 = vmatprep.subr.mxu0 0.0
    %4361 = vmatpush1.msra.mxu0 %v4282
    %4362 = vmatprep.subr.mxu0 0.0
    %4363 = vmatpush1.msra.mxu0 %v4283
    %4364 = vmatprep.subr.mxu0 0.0
    %4365 = vmatpush1.msra.mxu0 %v4284
    %4366 = vmatprep.subr.mxu0 0.0
    %4367 = vmatpush1.msra.mxu0 %v4285
    %4368 = vmatprep.subr.mxu0 0.0
    %4369 = vmatpush1.msra.mxu0 %v4286
    %4370 = vmatprep.subr.mxu0 0.0
    %4371 = vmatpush1.msra.mxu0 %v4287
    %4372 = vmatprep.subr.mxu0 0.0
    %4373 = vmatpush1.msra.mxu0 %v4288
    %4374 = vmatprep.mubr.f32.mxu0 %v4304
    %4375 = vmatmul.mubr.f32.gmra.mrb[0].mxu0 %v4303
    %v4376 = vpop.f32.mrb[0].mxu0
    %v4377 = vadd.f32 0.0, %v4376
    %v4378 = vpop.f32.mrb[0].mxu0
    %4379 = vdwg.mxu0
    %4380 = vmatprep.subr.mxu0 0.0
    %4381 = vmatpush1.msra.mxu0 %v4289
    %4382 = vmatprep.subr.mxu0 0.0
    %4383 = vmatpush1.msra.mxu0 %v4290
    %4384 = vmatprep.subr.mxu0 0.0
    %4385 = vmatpush1.msra.mxu0 %v4291
    %4386 = vmatprep.subr.mxu0 0.0
    %4387 = vmatpush1.msra.mxu0 %v4292
    %4388 = vmatprep.subr.mxu0 0.0
    %4389 = vmatpush1.msra.mxu0 %v4293
    %4390 = vmatprep.subr.mxu0 0.0
    %4391 = vmatpush1.msra.mxu0 %v4294
    %4392 = vmatprep.subr.mxu0 0.0
    %4393 = vmatpush1.msra.mxu0 %v4295
    %4394 = vmatprep.subr.mxu0 0.0
    %4395 = vmatpush1.msra.mxu0 %v4296
    %4396 = vmatprep.subr.mxu0 0.0
    %4397 = vmatpush1.msra.mxu0 %v4297
    %4398 = vmatprep.subr.mxu0 0.0
    %4399 = vmatpush1.msra.mxu0 %v4298
    %4400 = vmatprep.subr.mxu0 0.0
    %4401 = vmatpush1.msra.mxu0 %v4299
    %4402 = vmatprep.subr.mxu0 0.0
    %4403 = vmatpush1.msra.mxu0 %v4300
    %4404 = vmatprep.subr.mxu0 0.0
    %4405 = vmatpush1.msra.mxu0 %v4301
    %4406 = vmatprep.subr.mxu0 0.0
    %4407 = vmatpush1.msra.mxu0 %v4302
    %4408 = vmatprep.subr.mxu0 0.0
    %4409 = vmatpush1.msra.mxu0 0.0
    %4410 = vmatprep.subr.mxu0 0.0
    %4411 = vmatpush1.msra.mxu0 0.0
    %4412 = vmatprep.subr.mxu0 0.0
    %4413 = vmatpush1.msra.mxu0 0.0
    %4414 = vmatprep.subr.mxu0 0.0
    %4415 = vmatpush1.msra.mxu0 0.0
    %4416 = vmatprep.subr.mxu0 0.0
    %4417 = vmatpush1.msra.mxu0 0.0
    %4418 = vmatprep.subr.mxu0 0.0
    %4419 = vmatpush1.msra.mxu0 0.0
    %4420 = vmatprep.subr.mxu0 0.0
    %4421 = vmatpush1.msra.mxu0 0.0
    %4422 = vmatprep.subr.mxu0 0.0
    %4423 = vmatpush1.msra.mxu0 0.0
    %4424 = vmatprep.subr.mxu0 0.0
    %4425 = vmatpush1.msra.mxu0 0.0
    %4426 = vmatprep.subr.mxu0 0.0
    %4427 = vmatpush1.msra.mxu0 0.0
    %4428 = vmatprep.subr.mxu0 0.0
    %4429 = vmatpush1.msra.mxu0 0.0
    %4430 = vmatprep.subr.mxu0 0.0
    %4431 = vmatpush1.msra.mxu0 0.0
    %4432 = vmatprep.subr.mxu0 0.0
    %4433 = vmatpush1.msra.mxu0 0.0
    %4434 = vmatprep.subr.mxu0 0.0
    %4435 = vmatpush1.msra.mxu0 0.0
    %4436 = vmatprep.subr.mxu0 0.0
    %4437 = vmatpush1.msra.mxu0 0.0
    %4438 = vmatprep.subr.mxu0 0.0
    %4439 = vmatpush1.msra.mxu0 0.0
    %4440 = vmatprep.subr.mxu0 0.0
    %4441 = vmatpush1.msra.mxu0 0.0
    %4442 = vmatprep.subr.mxu0 0.0
    %4443 = vmatpush1.msra.mxu0 0.0
    %4444 = vmatprep.mubr.f32.mxu0 0.0
    %4445 = vmatmul.mubr.f32.gmra.mrb[0].mxu0 %v4308
    %v4446 = vpop.f32.mrb[0].mxu0
    %v4447 = vadd.f32 %v4377, %v4446
    %v4448 = vpop.f32.mrb[0].mxu0
    %4449 = vdwg.mxu0
    %v4450 = vadd.f32 %v4255, %v4447
    %s4451 = scalar_lea.vmem [#allocation7], 4048
    %v4452 = vld [vmem:[%s4451] sm:$0xff]
    %v4453 = vld [vmem:[%s4451 + $0x8] sm:$0xff]
    %v4454 = vld [vmem:[%s4451 + $0x10] sm:$0xff]
    %v4455 = vld [vmem:[%s4451 + $0x18] sm:$0xff]
    %v4456 = vld [vmem:[%s4451 + $0x20] sm:$0xff]
    %v4457 = vld [vmem:[%s4451 + $0x28] sm:$0xff]
    %v4458 = vld [vmem:[%s4451 + $0x30] sm:$0xff]
    %v4459 = vld [vmem:[%s4451 + $0x38] sm:$0xff]
    %v4460 = vld [vmem:[%s4451 + $0x40] sm:$0xff]
    %v4461 = vld [vmem:[%s4451 + $0x48] sm:$0xff]
    %v4462 = vld [vmem:[%s4451 + $0x50] sm:$0xff]
    %v4463 = vld [vmem:[%s4451 + $0x58] sm:$0xff]
    %v4464 = vld [vmem:[%s4451 + $0x60] sm:$0xff]
    %v4465 = vld [vmem:[%s4451 + $0x68] sm:$0xff]
    %v4466 = vld [vmem:[%s4451 + $0x70] sm:$0xff]
    %v4467 = vld [vmem:[%s4451 + $0x78] sm:$0xff]
    %v4468 = vld [vmem:[%s4451 + $0x80] sm:$0xff]
    %v4469 = vld [vmem:[%s4451 + $0x88] sm:$0xff]
    %v4470 = vld [vmem:[%s4451 + $0x90] sm:$0xff]
    %v4471 = vld [vmem:[%s4451 + $0x98] sm:$0xff]
    %v4472 = vld [vmem:[%s4451 + $0xa0] sm:$0xff]
    %v4473 = vld [vmem:[%s4451 + $0xa8] sm:$0xff]
    %v4474 = vld [vmem:[%s4451 + $0xb0] sm:$0xff]
    %v4475 = vld [vmem:[%s4451 + $0xb8] sm:$0xff]
    %v4476 = vld [vmem:[%s4451 + $0xc0] sm:$0xff]
    %v4477 = vld [vmem:[%s4451 + $0xc8] sm:$0xff]
    %v4478 = vld [vmem:[%s4451 + $0xd0] sm:$0xff]
    %v4479 = vld [vmem:[%s4451 + $0xd8] sm:$0xff]
    %v4480 = vld [vmem:[%s4451 + $0xe0] sm:$0xff]
    %v4481 = vld [vmem:[%s4451 + $0xe8] sm:$0xff]
    %v4482 = vld [vmem:[%s4451 + $0xf0] sm:$0xff]
    %v4483 = vld [vmem:[%s4451 + $0xf8] sm:$0xff]
    %v4484 = vld [vmem:[%s4451 + $0x100] sm:$0xff]
    %v4485 = vld [vmem:[%s4451 + $0x108] sm:$0xff]
    %v4486 = vld [vmem:[%s4451 + $0x110] sm:$0xff]
    %v4487 = vld [vmem:[%s4451 + $0x118] sm:$0xff]
    %v4488 = vld [vmem:[%s4451 + $0x120] sm:$0xff]
    %v4489 = vld [vmem:[%s4451 + $0x128] sm:$0xff]
    %v4490 = vld [vmem:[%s4451 + $0x130] sm:$0xff]
    %v4491 = vld [vmem:[%s4451 + $0x138] sm:$0xff]
    %v4492 = vld [vmem:[%s4451 + $0x140] sm:$0xff]
    %v4493 = vld [vmem:[%s4451 + $0x148] sm:$0xff]
    %v4494 = vld [vmem:[%s4451 + $0x150] sm:$0xff]
    %v4495 = vld [vmem:[%s4451 + $0x158] sm:$0xff]
    %v4496 = vld [vmem:[%s4451 + $0x160] sm:$0xff]
    %v4497 = vld [vmem:[%s4451 + $0x168] sm:$0xff]
    %v4498 = vrot.slane %v2312, 6
    %v4499 = vrot.slane %v2313, 6
    %v4500 = vrot.slane %v2314, 6
    %v4503 = vsel %vm2281, %v4500, 0
    %4505 = vmatprep.subr.mxu0 0.0
    %4506 = vmatpush1.msra.mxu0 %v4452
    %4507 = vmatprep.subr.mxu0 0.0
    %4508 = vmatpush1.msra.mxu0 %v4453
    %4509 = vmatprep.subr.mxu0 0.0
    %4510 = vmatpush1.msra.mxu0 %v4454
    %4511 = vmatprep.subr.mxu0 0.0
    %4512 = vmatpush1.msra.mxu0 %v4455
    %4513 = vmatprep.subr.mxu0 0.0
    %4514 = vmatpush1.msra.mxu0 %v4456
    %4515 = vmatprep.subr.mxu0 0.0
    %4516 = vmatpush1.msra.mxu0 %v4457
    %4517 = vmatprep.subr.mxu0 0.0
    %4518 = vmatpush1.msra.mxu0 %v4458
    %4519 = vmatprep.subr.mxu0 0.0
    %4520 = vmatpush1.msra.mxu0 %v4459
    %4521 = vmatprep.subr.mxu0 0.0
    %4522 = vmatpush1.msra.mxu0 %v4460
    %4523 = vmatprep.subr.mxu0 0.0
    %4524 = vmatpush1.msra.mxu0 %v4461
    %4525 = vmatprep.subr.mxu0 0.0
    %4526 = vmatpush1.msra.mxu0 %v4462
    %4527 = vmatprep.subr.mxu0 0.0
    %4528 = vmatpush1.msra.mxu0 %v4463
    %4529 = vmatprep.subr.mxu0 0.0
    %4530 = vmatpush1.msra.mxu0 %v4464
    %4531 = vmatprep.subr.mxu0 0.0
    %4532 = vmatpush1.msra.mxu0 %v4465
    %4533 = vmatprep.subr.mxu0 0.0
    %4534 = vmatpush1.msra.mxu0 %v4466
    %4535 = vmatprep.subr.mxu0 0.0
    %4536 = vmatpush1.msra.mxu0 %v4467
    %4537 = vmatprep.subr.mxu0 0.0
    %4538 = vmatpush1.msra.mxu0 %v4468
    %4539 = vmatprep.subr.mxu0 0.0
    %4540 = vmatpush1.msra.mxu0 %v4469
    %4541 = vmatprep.subr.mxu0 0.0
    %4542 = vmatpush1.msra.mxu0 %v4470
    %4543 = vmatprep.subr.mxu0 0.0
    %4544 = vmatpush1.msra.mxu0 %v4471
    %4545 = vmatprep.subr.mxu0 0.0
    %4546 = vmatpush1.msra.mxu0 %v4472
    %4547 = vmatprep.subr.mxu0 0.0
    %4548 = vmatpush1.msra.mxu0 %v4473
    %4549 = vmatprep.subr.mxu0 0.0
    %4550 = vmatpush1.msra.mxu0 %v4474
    %4551 = vmatprep.subr.mxu0 0.0
    %4552 = vmatpush1.msra.mxu0 %v4475
    %4553 = vmatprep.subr.mxu0 0.0
    %4554 = vmatpush1.msra.mxu0 %v4476
    %4555 = vmatprep.subr.mxu0 0.0
    %4556 = vmatpush1.msra.mxu0 %v4477
    %4557 = vmatprep.subr.mxu0 0.0
    %4558 = vmatpush1.msra.mxu0 %v4478
    %4559 = vmatprep.subr.mxu0 0.0
    %4560 = vmatpush1.msra.mxu0 %v4479
    %4561 = vmatprep.subr.mxu0 0.0
    %4562 = vmatpush1.msra.mxu0 %v4480
    %4563 = vmatprep.subr.mxu0 0.0
    %4564 = vmatpush1.msra.mxu0 %v4481
    %4565 = vmatprep.subr.mxu0 0.0
    %4566 = vmatpush1.msra.mxu0 %v4482
    %4567 = vmatprep.subr.mxu0 0.0
    %4568 = vmatpush1.msra.mxu0 %v4483
    %4569 = vmatprep.mubr.f32.mxu0 %v4499
    %4570 = vmatmul.mubr.f32.gmra.mrb[0].mxu0 %v4498
    %v4571 = vpop.f32.mrb[0].mxu0
    %v4572 = vadd.f32 0.0, %v4571
    %v4573 = vpop.f32.mrb[0].mxu0
    %4574 = vdwg.mxu0
    %4575 = vmatprep.subr.mxu0 0.0
    %4576 = vmatpush1.msra.mxu0 %v4484
    %4577 = vmatprep.subr.mxu0 0.0
    %4578 = vmatpush1.msra.mxu0 %v4485
    %4579 = vmatprep.subr.mxu0 0.0
    %4580 = vmatpush1.msra.mxu0 %v4486
    %4581 = vmatprep.subr.mxu0 0.0
    %4582 = vmatpush1.msra.mxu0 %v4487
    %4583 = vmatprep.subr.mxu0 0.0
    %4584 = vmatpush1.msra.mxu0 %v4488
    %4585 = vmatprep.subr.mxu0 0.0
    %4586 = vmatpush1.msra.mxu0 %v4489
    %4587 = vmatprep.subr.mxu0 0.0
    %4588 = vmatpush1.msra.mxu0 %v4490
    %4589 = vmatprep.subr.mxu0 0.0
    %4590 = vmatpush1.msra.mxu0 %v4491
    %4591 = vmatprep.subr.mxu0 0.0
    %4592 = vmatpush1.msra.mxu0 %v4492
    %4593 = vmatprep.subr.mxu0 0.0
    %4594 = vmatpush1.msra.mxu0 %v4493
    %4595 = vmatprep.subr.mxu0 0.0
    %4596 = vmatpush1.msra.mxu0 %v4494
    %4597 = vmatprep.subr.mxu0 0.0
    %4598 = vmatpush1.msra.mxu0 %v4495
    %4599 = vmatprep.subr.mxu0 0.0
    %4600 = vmatpush1.msra.mxu0 %v4496
    %4601 = vmatprep.subr.mxu0 0.0
    %4602 = vmatpush1.msra.mxu0 %v4497
    %4603 = vmatprep.subr.mxu0 0.0
    %4604 = vmatpush1.msra.mxu0 0.0
    %4605 = vmatprep.subr.mxu0 0.0
    %4606 = vmatpush1.msra.mxu0 0.0
    %4607 = vmatprep.subr.mxu0 0.0
    %4608 = vmatpush1.msra.mxu0 0.0
    %4609 = vmatprep.subr.mxu0 0.0
    %4610 = vmatpush1.msra.mxu0 0.0
    %4611 = vmatprep.subr.mxu0 0.0
    %4612 = vmatpush1.msra.mxu0 0.0
    %4613 = vmatprep.subr.mxu0 0.0
    %4614 = vmatpush1.msra.mxu0 0.0
    %4615 = vmatprep.subr.mxu0 0.0
    %4616 = vmatpush1.msra.mxu0 0.0
    %4617 = vmatprep.subr.mxu0 0.0
    %4618 = vmatpush1.msra.mxu0 0.0
    %4619 = vmatprep.subr.mxu0 0.0
    %4620 = vmatpush1.msra.mxu0 0.0
    %4621 = vmatprep.subr.mxu0 0.0
    %4622 = vmatpush1.msra.mxu0 0.0
    %4623 = vmatprep.subr.mxu0 0.0
    %4624 = vmatpush1.msra.mxu0 0.0
    %4625 = vmatprep.subr.mxu0 0.0
    %4626 = vmatpush1.msra.mxu0 0.0
    %4627 = vmatprep.subr.mxu0 0.0
    %4628 = vmatpush1.msra.mxu0 0.0
    %4629 = vmatprep.subr.mxu0 0.0
    %4630 = vmatpush1.msra.mxu0 0.0
    %4631 = vmatprep.subr.mxu0 0.0
    %4632 = vmatpush1.msra.mxu0 0.0
    %4633 = vmatprep.subr.mxu0 0.0
    %4634 = vmatpush1.msra.mxu0 0.0
    %4635 = vmatprep.subr.mxu0 0.0
    %4636 = vmatpush1.msra.mxu0 0.0
    %4637 = vmatprep.subr.mxu0 0.0
    %4638 = vmatpush1.msra.mxu0 0.0
    %4639 = vmatprep.mubr.f32.mxu0 0.0
    %4640 = vmatmul.mubr.f32.gmra.mrb[0].mxu0 %v4503
    %v4641 = vpop.f32.mrb[0].mxu0
    %v4642 = vadd.f32 %v4572, %v4641
    %v4643 = vpop.f32.mrb[0].mxu0
    %4644 = vdwg.mxu0
    %v4645 = vadd.f32 %v4450, %v4642
    %v4646 = vld [vmem:[#allocation8] sm:$0x1]
    %v4648 = vlaneseq
    %v4649 = vshrl.u32 %v4648, 7
    %v4650 = vsub.s32 0, %v4649
    %v4651 = vrot.slane %v4646, %v4650
    %v4653 = vadd.f32 %v4645, %v4651
    %v4654 = vld [vmem:[#allocation10] sm:$0xff]
    %v4655 = vld [vmem:[#allocation10 + $0x8] sm:$0xff]
    %v4656 = vld [vmem:[#allocation10 + $0x10] sm:$0xff]
    %v4657 = vld [vmem:[#allocation10 + $0x18] sm:$0xff]
    %v4658 = vld [vmem:[#allocation10 + $0x20] sm:$0xff]
    %v4659 = vld [vmem:[#allocation10 + $0x28] sm:$0xff]
    %v4660 = vld [vmem:[#allocation10 + $0x30] sm:$0xff]
    %v4661 = vld [vmem:[#allocation10 + $0x38] sm:$0xff]
    %v4662 = vld [vmem:[#allocation10 + $0x40] sm:$0xff]
    %v4663 = vld [vmem:[#allocation10 + $0x48] sm:$0xff]
    %v4664 = vld [vmem:[#allocation10 + $0x50] sm:$0xff]
    %v4665 = vld [vmem:[#allocation10 + $0x58] sm:$0xff]
    %v4666 = vld [vmem:[#allocation10 + $0x60] sm:$0xff]
    %v4667 = vld [vmem:[#allocation10 + $0x68] sm:$0xff]
    %v4668 = vld [vmem:[#allocation10 + $0x70] sm:$0xff]
    %v4669 = vld [vmem:[#allocation10 + $0x78] sm:$0xff]
    %v4670 = vld [vmem:[#allocation11] sm:$0x1]
    %v4672 = vlaneseq
    %v4673 = vshrl.u32 %v4672, 7
    %v4674 = vsub.s32 0, %v4673
    %v4675 = vrot.slane %v4670, %v4674
    %4677 = vmatprep.subr.mxu0 0.0
    %4678 = vmatpush1.msra.mxu0 %v4654
    %4679 = vmatprep.subr.mxu0 0.0
    %4680 = vmatpush1.msra.mxu0 %v4655
    %4681 = vmatprep.subr.mxu0 0.0
    %4682 = vmatpush1.msra.mxu0 %v4656
    %4683 = vmatprep.subr.mxu0 0.0
    %4684 = vmatpush1.msra.mxu0 %v4657
    %4685 = vmatprep.subr.mxu0 0.0
    %4686 = vmatpush1.msra.mxu0 %v4658
    %4687 = vmatprep.subr.mxu0 0.0
    %4688 = vmatpush1.msra.mxu0 %v4659
    %4689 = vmatprep.subr.mxu0 0.0
    %4690 = vmatpush1.msra.mxu0 %v4660
    %4691 = vmatprep.subr.mxu0 0.0
    %4692 = vmatpush1.msra.mxu0 %v4661
    %4693 = vmatprep.subr.mxu0 0.0
    %4694 = vmatpush1.msra.mxu0 %v4662
    %4695 = vmatprep.subr.mxu0 0.0
    %4696 = vmatpush1.msra.mxu0 %v4663
    %4697 = vmatprep.subr.mxu0 0.0
    %4698 = vmatpush1.msra.mxu0 %v4664
    %4699 = vmatprep.subr.mxu0 0.0
    %4700 = vmatpush1.msra.mxu0 %v4665
    %4701 = vmatprep.subr.mxu0 0.0
    %4702 = vmatpush1.msra.mxu0 %v4666
    %4703 = vmatprep.subr.mxu0 0.0
    %4704 = vmatpush1.msra.mxu0 %v4667
    %4705 = vmatprep.subr.mxu0 0.0
    %4706 = vmatpush1.msra.mxu0 %v4668
    %4707 = vmatprep.subr.mxu0 0.0
    %4708 = vmatpush1.msra.mxu0 %v4669
    %4709 = vmatprep.subr.mxu0 0.0
    %4710 = vmatpush1.msra.mxu0 0.0
    %4711 = vmatprep.subr.mxu0 0.0
    %4712 = vmatpush1.msra.mxu0 0.0
    %4713 = vmatprep.subr.mxu0 0.0
    %4714 = vmatpush1.msra.mxu0 0.0
    %4715 = vmatprep.subr.mxu0 0.0
    %4716 = vmatpush1.msra.mxu0 0.0
    %4717 = vmatprep.subr.mxu0 0.0
    %4718 = vmatpush1.msra.mxu0 0.0
    %4719 = vmatprep.subr.mxu0 0.0
    %4720 = vmatpush1.msra.mxu0 0.0
    %4721 = vmatprep.subr.mxu0 0.0
    %4722 = vmatpush1.msra.mxu0 0.0
    %4723 = vmatprep.subr.mxu0 0.0
    %4724 = vmatpush1.msra.mxu0 0.0
    %4725 = vmatprep.subr.mxu0 0.0
    %4726 = vmatpush1.msra.mxu0 0.0
    %4727 = vmatprep.subr.mxu0 0.0
    %4728 = vmatpush1.msra.mxu0 0.0
    %4729 = vmatprep.subr.mxu0 0.0
    %4730 = vmatpush1.msra.mxu0 0.0
    %4731 = vmatprep.subr.mxu0 0.0
    %4732 = vmatpush1.msra.mxu0 0.0
    %4733 = vmatprep.subr.mxu0 0.0
    %4734 = vmatpush1.msra.mxu0 0.0
    %4735 = vmatprep.subr.mxu0 0.0
    %4736 = vmatpush1.msra.mxu0 0.0
    %4737 = vmatprep.subr.mxu0 0.0
    %4738 = vmatpush1.msra.mxu0 0.0
    %4739 = vmatprep.subr.mxu0 0.0
    %4740 = vmatpush1.msra.mxu0 0.0
    %4741 = vmatprep.mubr.f32.mxu0 0.0
    %4742 = vmatmul.mubr.f32.gmra.mrb[0].mxu0 %v4653
    %v4743 = vpop.f32.mrb[0].mxu0
    %v4744 = vadd.f32 %v4675, %v4743
    %v4745 = vpop.f32.mrb[0].mxu0
    %4746 = vdwg.mxu0
    %4747 = vst [vmem:[#allocation13] sm:$0x3] %v4744
    // Predicated region
    $region58: #{cnn_small_forward.1} parent=1 // pred_check
      _
    $region59: #{cnn_small_forward.1} parent=1 // pred_check_branch
      %4749 = sbr.rel (0) target = $region61
    $region60: #{cnn_small_forward.1} parent=1 // pred_region
      %s4751 = ssub.s32 32, 32
      %4752 = vsyncadd [#allocation4], %s4751
      %s4754 = sshll.u32 [#allocation13], 4
      %s4755 = int_to_ptr.vmem [resolvable:$true] %s4754
      %4757 = dma.vmem_to_hbm [thread:$0]  %s4755, 32, %s8, [#allocation4]
    $region61: #{cnn_small_forward.1} parent=1 // pred_fallthru
      _
    // Predicated region
    $region62: #{cnn_small_forward.1} parent=1 // pred_check
      _
    $region63: #{cnn_small_forward.1} parent=1 // pred_check_branch
      %4759 = sbr.rel (0) target = $region65
    $region64: #{cnn_small_forward.1} parent=1 // pred_region
      %4760 = dma.done [#allocation4], 32
    $region65: #{cnn_small_forward.1} parent=1 // pred_fallthru
      _
    %4761 = vsyncpa [#allocation3], 1
    %4762 = vsyncpa [#allocation6], 1
    %4763 = vsyncpa [#allocation9], 1
    %4764 = vsyncpa [#allocation12], 1
    %4765 = vsyncpa [#allocation4], 1

</llo_original>
